<compile_context>
chip_gen: v6e
topology: v6e:2x2x1
jax: 0.10.0
libtpu: 0.0.40
codegen_flags: <defaults>
</compile_context>

<pallas_src>
import functools

import jax
import jax.numpy as jnp
from jax import lax
from jax.experimental import pallas as pl
from jax.experimental.pallas import tpu as pltpu

C = 3   # in/out channels (fixed by the module)
K = 3   # kernel size


@functools.lru_cache(maxsize=None)
def _make_kernel(img_w: int):
    """Kernel factory; img_w = per-image width (needed for per-image col masks)."""

    def kernel(x_ref, w1_ref, b1_ref, w2_ref, b2_ref, o_ref):
        # x_ref : (Nb, C, H+4, L+4) VMEM  packed input, zero-padded by 2/2 in H and
        #                                 (globally) in the packed-W axis.
        # w*_ref: (C*C*K*K,) SMEM flattened OIHW weights;  b*_ref: (C,) SMEM biases.
        # o_ref : (Nb, C, H, L) VMEM      packed output (L = G*img_w).
        Nb = o_ref.shape[0]
        H = o_ref.shape[2]
        L = o_ref.shape[3]
        He = H + 2          # extended conv1 grid (carries conv2's zero row-padding)
        Le = L + 2
        Hp4 = H + 4

        # ---- masks (independent of the group index; built once) ---------------
        # conv1 taps live on (Hp4, Le) column planes; output local column = (cc-1)%W.
        lc1 = (lax.broadcasted_iota(jnp.int32, (Hp4, Le), 1) - 1) % img_w
        keep1 = {0: lc1 >= 1,              # kx=0  (dx=-1): need local col >= 1
                 2: lc1 <= img_w - 2}      # kx=2  (dx=+1): need local col <= W-2
        # interior of the extended conv1 grid (rows 1..H, cols 1..L) -> zero border
        r_e = lax.broadcasted_iota(jnp.int32, (He, Le), 0)
        c_e = lax.broadcasted_iota(jnp.int32, (He, Le), 1)
        interior = (r_e >= 1) & (r_e <= H) & (c_e >= 1) & (c_e <= L)
        # conv2 taps live on (He, L) column slices of mid; output local col = p%W.
        lc2 = lax.broadcasted_iota(jnp.int32, (He, L), 1) % img_w
        keep2 = {0: lc2 >= 1, 2: lc2 <= img_w - 2}

        for nb in range(Nb):                       # groups packed into this block
            # ---------------- conv1 + ReLU on the extended (He, Le) grid --------
            acc1 = [jnp.full((He, Le), b1_ref[co], dtype=jnp.float32)
                    for co in range(C)]
            for ci in range(C):
                for kx in range(K):
                    # column-shifted plane, loaded ONCE per (ci, kx)
                    colp = x_ref[nb, ci, pl.ds(0, Hp4), pl.ds(kx, Le)]
                    if kx != 1:
                        colp = jnp.where(keep1[kx], colp, 0.0)
                    for ky in range(K):
                        tap = lax.slice(colp, (ky, 0), (ky + He, Le))
                        for co in range(C):        # reuse tap across output chans
                            w = w1_ref[((co * C + ci) * K + ky) * K + kx]
                            acc1[co] = acc1[co] + w * tap
            # ReLU, then zero the border: this IS conv2's zero padding.
            mid = [jnp.where(interior, jnp.maximum(a, 0.0), 0.0) for a in acc1]

            # ---------------- conv2 + ReLU + residual ---------------------------
            acc2 = [jnp.full((H, L), b2_ref[co], dtype=jnp.float32)
                    for co in range(C)]
            for ci in range(C):
                for kx in range(K):
                    mcol = lax.slice(mid[ci], (0, kx), (He, kx + L))
                    if kx != 1:
                        mcol = jnp.where(keep2[kx], mcol, 0.0)
                    for ky in range(K):
                        tap = lax.slice(mcol, (ky, 0), (ky + H, L))
                        for co in range(C):
                            w = w2_ref[((co * C + ci) * K + ky) * K + kx]
                            acc2[co] = acc2[co] + w * tap
            for co in range(C):
                xres = x_ref[nb, co, pl.ds(2, H), pl.ds(2, L)]   # residual branch
                o_ref[nb, co, :, :] = jnp.maximum(acc2[co], 0.0) + xres

    return kernel


def _pick_groups_per_step(n_groups: int) -> int:
    """Largest divisor of n_groups (<=8) that keeps >=2 grid steps when possible."""
    best = 1
    for nb in range(1, min(8, n_groups) + 1):
        if n_groups % nb == 0 and n_groups // nb >= min(2, n_groups):
            best = nb
    return best


@jax.jit
def residual_block(x, w1, b1, w2, b2):
    """x: (N, 3, H, W) f32; w1/w2: (3,3,3,3) OIHW; b1/b2: (3,)."""
    N, Cc, H, W = x.shape
    assert Cc == C
    x = x.astype(jnp.float32)

    # Pack G images side-by-side along W so compute planes are lane-dense while
    # the globally padded width (G*W + 4) still fits a single 128-lane tile.
    G = max(1, (128 - 4) // W) if (W + 4) <= 128 else 1
    Ngroups = pl.cdiv(N, G)
    Npad = Ngroups * G
    if Npad != N:
        x = jnp.concatenate(
            [x, jnp.zeros((Npad - N, C, H, W), jnp.float32)], axis=0)
    L = G * W
    # (Ngroups, G, C, H, W) -> (Ngroups, C, H, G, W) -> (Ngroups, C, H, L)
    xg = (x.reshape(Ngroups, G, C, H, W)
          .transpose(0, 2, 3, 1, 4)
          .reshape(Ngroups, C, H, L))
    # Zero-pad rows and (global) packed columns by 2: every conv tap becomes a
    # plain in-bounds ref slice; per-image column padding is done by masks.
    xgp = jnp.pad(xg, ((0, 0), (0, 0), (2, 2), (2, 2)))

    Nb = _pick_groups_per_step(Ngroups)       # groups per grid step
    grid = (Ngroups // Nb,)

    w1f = w1.reshape(-1).astype(jnp.float32)
    w2f = w2.reshape(-1).astype(jnp.float32)
    b1 = b1.astype(jnp.float32)
    b2 = b2.astype(jnp.float32)

    out_packed = pl.pallas_call(
        _make_kernel(W),
        out_shape=jax.ShapeDtypeStruct((Ngroups, C, H, L), jnp.float32),
        grid=grid,
        in_specs=[
            pl.BlockSpec((Nb, C, H + 4, L + 4), lambda i: (i, 0, 0, 0)),
            pl.BlockSpec(memory_space=pltpu.MemorySpace.SMEM),
            pl.BlockSpec(memory_space=pltpu.MemorySpace.SMEM),
            pl.BlockSpec(memory_space=pltpu.MemorySpace.SMEM),
            pl.BlockSpec(memory_space=pltpu.MemorySpace.SMEM),
        ],
        out_specs=pl.BlockSpec((Nb, C, H, L), lambda i: (i, 0, 0, 0)),
        compiler_params=pltpu.CompilerParams(
            dimension_semantics=("parallel",),
            vmem_limit_bytes=32 * 1024 * 1024,
        ),
    )(xgp, w1f, b1, w2f, b2)

    # Unpack: (Ngroups, C, H, L) -> (Npad, C, H, W) -> (N, C, H, W)
    out = (out_packed.reshape(Ngroups, C, H, G, W)
           .transpose(0, 3, 1, 2, 4)
           .reshape(Npad, C, H, W))[:N]
    return out


def ref_forward(x, w1, b1, w2, b2):
    """Pure-JAX reference matching the PyTorch module."""
    def conv(y, w, b):
        z = lax.conv_general_dilated(
            y, w, window_strides=(1, 1), padding=((1, 1), (1, 1)),
            dimension_numbers=("NCHW", "OIHW", "NCHW"))
        return z + b[None, :, None, None]
    out = jnp.maximum(conv(x, w1, b1), 0.0)
    out = jnp.maximum(conv(out, w2, b2), 0.0) + x
    return out


if __name__ == "__main__":
    key = jax.random.PRNGKey(0)
    k_x, k_w1, k_b1, k_w2, k_b2 = jax.random.split(key, 5)

    # Deterministic synthetic parameters (shapes from nn.Conv2d(3, 3, 3, 1, 1)).
    w1 = jax.random.normal(k_w1, (C, C, K, K), dtype=jnp.float32) * 0.2
    b1 = jax.random.normal(k_b1, (C,), dtype=jnp.float32) * 0.1
    w2 = jax.random.normal(k_w2, (C, C, K, K), dtype=jnp.float32) * 0.2
    b2 = jax.random.normal(k_b2, (C,), dtype=jnp.float32) * 0.1

    # Batch = 2 packed groups of 7 images (grid of 2 parallel steps).
    N, H, W = 14, 16, 16
    x = jax.random.normal(k_x, (N, C, H, W), dtype=jnp.float32)
    out = jax.block_until_ready(residual_block(x, w1, b1, w2, b2))
    expected = ref_forward(x, w1, b1, w2, b2)
    assert out.shape == (N, C, H, W)
    assert jnp.allclose(out, expected, atol=1e-4, rtol=1e-4), "mismatch vs reference"

    # Also exercise the batch-padding path (N not a multiple of the pack factor).
    x2 = jax.random.normal(k_x, (3, C, H, W), dtype=jnp.float32)
    out2 = jax.block_until_ready(residual_block(x2, w1, b1, w2, b2))
    expected2 = ref_forward(x2, w1, b1, w2, b2)
    assert out2.shape == (3, C, H, W)
    assert jnp.allclose(out2, expected2, atol=1e-4, rtol=1e-4), "mismatch (padded batch)"

    print("KERNEL_OK")
</pallas_src>

<mosaic_0001>
module attributes {stable_mosaic.version = 11 : i64} {
  func.func @kernel(%arg0: i32, %arg1: memref<1x3x20x116xf32, #tpu.memory_space<vmem>>, %arg2: memref<81xf32, #tpu.memory_space<smem>>, %arg3: memref<3xf32, #tpu.memory_space<smem>>, %arg4: memref<81xf32, #tpu.memory_space<smem>>, %arg5: memref<3xf32, #tpu.memory_space<smem>>, %arg6: memref<1x3x16x112xf32, #tpu.memory_space<vmem>>) attributes {dimension_semantics = [#tpu.dimension_semantics<parallel>], iteration_bounds = array<i64: 2>, scalar_prefetch = 0 : i64, scratch_operands = 0 : i64, tpu.core_type = #tpu.core_type<tc>, window_params = [{transform_indices = @transform_0, window_bounds = array<i64: 1, 3, 20, 116>}, {transform_indices = @transform_1, window_bounds = array<i64: 81>}, {transform_indices = @transform_2, window_bounds = array<i64: 3>}, {transform_indices = @transform_3, window_bounds = array<i64: 81>}, {transform_indices = @transform_4, window_bounds = array<i64: 3>}, {transform_indices = @transform_5, window_bounds = array<i64: 1, 3, 16, 112>}]} {
    %0 = tpu.iota {dimensions = array<i32: 1>} : vector<20x114xi32>
    %c1_i32 = arith.constant 1 : i32
    %1 = vector.broadcast %c1_i32 : i32 to vector<20x114xi32>
    %2 = arith.subi %0, %1 : vector<20x114xi32>
    %c16_i32 = arith.constant 16 : i32
    %c0_i32 = arith.constant 0 : i32
    %3 = arith.cmpi eq, %c16_i32, %c0_i32 : i32
    %c1_i32_0 = arith.constant 1 : i32
    %4 = arith.select %3, %c1_i32_0, %c16_i32 : i32
    %5 = vector.broadcast %4 : i32 to vector<20x114xi32>
    %6 = arith.remsi %2, %5 : vector<20x114xi32>
    %c0_i32_1 = arith.constant 0 : i32
    %7 = vector.broadcast %c0_i32_1 : i32 to vector<20x114xi32>
    %8 = arith.cmpi ne, %6, %7 : vector<20x114xi32>
    %c0_i32_2 = arith.constant 0 : i32
    %9 = vector.broadcast %c0_i32_2 : i32 to vector<20x114xi32>
    %10 = arith.cmpi slt, %6, %9 : vector<20x114xi32>
    %c0_i32_3 = arith.constant 0 : i32
    %11 = arith.cmpi slt, %4, %c0_i32_3 : i32
    %12 = vector.broadcast %11 : i1 to vector<20x114xi1>
    %13 = vector.broadcast %12 : vector<20x114xi1> to vector<20x114xi1>
    %14 = arith.xori %10, %13 : vector<20x114xi1>
    %15 = arith.andi %14, %8 : vector<20x114xi1>
    %16 = vector.broadcast %4 : i32 to vector<20x114xi32>
    %17 = arith.addi %6, %16 : vector<20x114xi32>
    %18 = arith.select %15, %17, %6 : vector<20x114xi1>, vector<20x114xi32>
    %c1_i32_4 = arith.constant 1 : i32
    %19 = vector.broadcast %c1_i32_4 : i32 to vector<20x114xi32>
    %20 = arith.cmpi sge, %18, %19 : vector<20x114xi32>
    %c14_i32 = arith.constant 14 : i32
    %21 = vector.broadcast %c14_i32 : i32 to vector<20x114xi32>
    %22 = arith.cmpi sle, %18, %21 : vector<20x114xi32>
    %23 = tpu.iota {dimensions = array<i32: 0>} : vector<18x114xi32>
    %24 = tpu.iota {dimensions = array<i32: 1>} : vector<18x114xi32>
    %c1_i32_5 = arith.constant 1 : i32
    %25 = vector.broadcast %c1_i32_5 : i32 to vector<18x114xi32>
    %26 = arith.cmpi sge, %23, %25 : vector<18x114xi32>
    %c16_i32_6 = arith.constant 16 : i32
    %27 = vector.broadcast %c16_i32_6 : i32 to vector<18x114xi32>
    %28 = arith.cmpi sle, %23, %27 : vector<18x114xi32>
    %29 = arith.andi %26, %28 : vector<18x114xi1>
    %c1_i32_7 = arith.constant 1 : i32
    %30 = vector.broadcast %c1_i32_7 : i32 to vector<18x114xi32>
    %31 = arith.cmpi sge, %24, %30 : vector<18x114xi32>
    %32 = arith.andi %29, %31 : vector<18x114xi1>
    %c112_i32 = arith.constant 112 : i32
    %33 = vector.broadcast %c112_i32 : i32 to vector<18x114xi32>
    %34 = arith.cmpi sle, %24, %33 : vector<18x114xi32>
    %35 = arith.andi %32, %34 : vector<18x114xi1>
    %36 = tpu.iota {dimensions = array<i32: 1>} : vector<18x112xi32>
    %c16_i32_8 = arith.constant 16 : i32
    %c0_i32_9 = arith.constant 0 : i32
    %37 = arith.cmpi eq, %c16_i32_8, %c0_i32_9 : i32
    %c1_i32_10 = arith.constant 1 : i32
    %38 = arith.select %37, %c1_i32_10, %c16_i32_8 : i32
    %39 = vector.broadcast %38 : i32 to vector<18x112xi32>
    %40 = arith.remsi %36, %39 : vector<18x112xi32>
    %c0_i32_11 = arith.constant 0 : i32
    %41 = vector.broadcast %c0_i32_11 : i32 to vector<18x112xi32>
    %42 = arith.cmpi ne, %40, %41 : vector<18x112xi32>
    %c0_i32_12 = arith.constant 0 : i32
    %43 = vector.broadcast %c0_i32_12 : i32 to vector<18x112xi32>
    %44 = arith.cmpi slt, %40, %43 : vector<18x112xi32>
    %c0_i32_13 = arith.constant 0 : i32
    %45 = arith.cmpi slt, %38, %c0_i32_13 : i32
    %46 = vector.broadcast %45 : i1 to vector<18x112xi1>
    %47 = vector.broadcast %46 : vector<18x112xi1> to vector<18x112xi1>
    %48 = arith.xori %44, %47 : vector<18x112xi1>
    %49 = arith.andi %48, %42 : vector<18x112xi1>
    %50 = vector.broadcast %38 : i32 to vector<18x112xi32>
    %51 = arith.addi %40, %50 : vector<18x112xi32>
    %52 = arith.select %49, %51, %40 : vector<18x112xi1>, vector<18x112xi32>
    %c1_i32_14 = arith.constant 1 : i32
    %53 = vector.broadcast %c1_i32_14 : i32 to vector<18x112xi32>
    %54 = arith.cmpi sge, %52, %53 : vector<18x112xi32>
    %c14_i32_15 = arith.constant 14 : i32
    %55 = vector.broadcast %c14_i32_15 : i32 to vector<18x112xi32>
    %56 = arith.cmpi sle, %52, %55 : vector<18x112xi32>
    %c0 = arith.constant 0 : index
    %57 = memref.load %arg3[%c0] : memref<3xf32, #tpu.memory_space<smem>>
    %58 = vector.broadcast %57 : f32 to vector<18x114xf32>
    %c1 = arith.constant 1 : index
    %59 = memref.load %arg3[%c1] : memref<3xf32, #tpu.memory_space<smem>>
    %60 = vector.broadcast %59 : f32 to vector<18x114xf32>
    %c2 = arith.constant 2 : index
    %61 = memref.load %arg3[%c2] : memref<3xf32, #tpu.memory_space<smem>>
    %62 = vector.broadcast %61 : f32 to vector<18x114xf32>
    %c0_16 = arith.constant 0 : index
    %c0_17 = arith.constant 0 : index
    %c0_18 = arith.constant 0 : index
    %c0_19 = arith.constant 0 : index
    %63 = vector.load %arg1[%c0_16, %c0_17, %c0_18, %c0_19] : memref<1x3x20x116xf32, #tpu.memory_space<vmem>>, vector<1x1x20x114xf32>
    %64 = vector.shape_cast %63 : vector<1x1x20x114xf32> to vector<20x114xf32>
    %cst = arith.constant 0.000000e+00 : f32
    %65 = vector.broadcast %cst : f32 to vector<20x114xf32>
    %66 = arith.select %20, %64, %65 : vector<20x114xi1>, vector<20x114xf32>
    %67 = vector.extract_strided_slice %66 {offsets = [0, 0], sizes = [18, 114], strides = [1, 1]} : vector<20x114xf32> to vector<18x114xf32>
    %c0_20 = arith.constant 0 : index
    %68 = memref.load %arg2[%c0_20] : memref<81xf32, #tpu.memory_space<smem>>
    %69 = vector.broadcast %68 : f32 to vector<18x114xf32>
    %70 = arith.mulf %69, %67 : vector<18x114xf32>
    %71 = arith.addf %58, %70 : vector<18x114xf32>
    %c27 = arith.constant 27 : index
    %72 = memref.load %arg2[%c27] : memref<81xf32, #tpu.memory_space<smem>>
    %73 = vector.broadcast %72 : f32 to vector<18x114xf32>
    %74 = arith.mulf %73, %67 : vector<18x114xf32>
    %75 = arith.addf %60, %74 : vector<18x114xf32>
    %c54 = arith.constant 54 : index
    %76 = memref.load %arg2[%c54] : memref<81xf32, #tpu.memory_space<smem>>
    %77 = vector.broadcast %76 : f32 to vector<18x114xf32>
    %78 = arith.mulf %77, %67 : vector<18x114xf32>
    %79 = arith.addf %62, %78 : vector<18x114xf32>
    %80 = vector.extract_strided_slice %66 {offsets = [1, 0], sizes = [18, 114], strides = [1, 1]} : vector<20x114xf32> to vector<18x114xf32>
    %c3 = arith.constant 3 : index
    %81 = memref.load %arg2[%c3] : memref<81xf32, #tpu.memory_space<smem>>
    %82 = vector.broadcast %81 : f32 to vector<18x114xf32>
    %83 = arith.mulf %82, %80 : vector<18x114xf32>
    %84 = arith.addf %71, %83 : vector<18x114xf32>
    %c30 = arith.constant 30 : index
    %85 = memref.load %arg2[%c30] : memref<81xf32, #tpu.memory_space<smem>>
    %86 = vector.broadcast %85 : f32 to vector<18x114xf32>
    %87 = arith.mulf %86, %80 : vector<18x114xf32>
    %88 = arith.addf %75, %87 : vector<18x114xf32>
    %c57 = arith.constant 57 : index
    %89 = memref.load %arg2[%c57] : memref<81xf32, #tpu.memory_space<smem>>
    %90 = vector.broadcast %89 : f32 to vector<18x114xf32>
    %91 = arith.mulf %90, %80 : vector<18x114xf32>
    %92 = arith.addf %79, %91 : vector<18x114xf32>
    %93 = vector.extract_strided_slice %66 {offsets = [2, 0], sizes = [18, 114], strides = [1, 1]} : vector<20x114xf32> to vector<18x114xf32>
    %c6 = arith.constant 6 : index
    %94 = memref.load %arg2[%c6] : memref<81xf32, #tpu.memory_space<smem>>
    %95 = vector.broadcast %94 : f32 to vector<18x114xf32>
    %96 = arith.mulf %95, %93 : vector<18x114xf32>
    %97 = arith.addf %84, %96 : vector<18x114xf32>
    %c33 = arith.constant 33 : index
    %98 = memref.load %arg2[%c33] : memref<81xf32, #tpu.memory_space<smem>>
    %99 = vector.broadcast %98 : f32 to vector<18x114xf32>
    %100 = arith.mulf %99, %93 : vector<18x114xf32>
    %101 = arith.addf %88, %100 : vector<18x114xf32>
    %c60 = arith.constant 60 : index
    %102 = memref.load %arg2[%c60] : memref<81xf32, #tpu.memory_space<smem>>
    %103 = vector.broadcast %102 : f32 to vector<18x114xf32>
    %104 = arith.mulf %103, %93 : vector<18x114xf32>
    %105 = arith.addf %92, %104 : vector<18x114xf32>
    %c0_21 = arith.constant 0 : index
    %c0_22 = arith.constant 0 : index
    %c0_23 = arith.constant 0 : index
    %c1_24 = arith.constant 1 : index
    %106 = vector.load %arg1[%c0_21, %c0_22, %c0_23, %c1_24] : memref<1x3x20x116xf32, #tpu.memory_space<vmem>>, vector<1x1x20x114xf32>
    %107 = vector.shape_cast %106 : vector<1x1x20x114xf32> to vector<20x114xf32>
    %108 = vector.extract_strided_slice %107 {offsets = [0, 0], sizes = [18, 114], strides = [1, 1]} : vector<20x114xf32> to vector<18x114xf32>
    %c1_25 = arith.constant 1 : index
    %109 = memref.load %arg2[%c1_25] : memref<81xf32, #tpu.memory_space<smem>>
    %110 = vector.broadcast %109 : f32 to vector<18x114xf32>
    %111 = arith.mulf %110, %108 : vector<18x114xf32>
    %112 = arith.addf %97, %111 : vector<18x114xf32>
    %c28 = arith.constant 28 : index
    %113 = memref.load %arg2[%c28] : memref<81xf32, #tpu.memory_space<smem>>
    %114 = vector.broadcast %113 : f32 to vector<18x114xf32>
    %115 = arith.mulf %114, %108 : vector<18x114xf32>
    %116 = arith.addf %101, %115 : vector<18x114xf32>
    %c55 = arith.constant 55 : index
    %117 = memref.load %arg2[%c55] : memref<81xf32, #tpu.memory_space<smem>>
    %118 = vector.broadcast %117 : f32 to vector<18x114xf32>
    %119 = arith.mulf %118, %108 : vector<18x114xf32>
    %120 = arith.addf %105, %119 : vector<18x114xf32>
    %121 = vector.extract_strided_slice %107 {offsets = [1, 0], sizes = [18, 114], strides = [1, 1]} : vector<20x114xf32> to vector<18x114xf32>
    %c4 = arith.constant 4 : index
    %122 = memref.load %arg2[%c4] : memref<81xf32, #tpu.memory_space<smem>>
    %123 = vector.broadcast %122 : f32 to vector<18x114xf32>
    %124 = arith.mulf %123, %121 : vector<18x114xf32>
    %125 = arith.addf %112, %124 : vector<18x114xf32>
    %c31 = arith.constant 31 : index
    %126 = memref.load %arg2[%c31] : memref<81xf32, #tpu.memory_space<smem>>
    %127 = vector.broadcast %126 : f32 to vector<18x114xf32>
    %128 = arith.mulf %127, %121 : vector<18x114xf32>
    %129 = arith.addf %116, %128 : vector<18x114xf32>
    %c58 = arith.constant 58 : index
    %130 = memref.load %arg2[%c58] : memref<81xf32, #tpu.memory_space<smem>>
    %131 = vector.broadcast %130 : f32 to vector<18x114xf32>
    %132 = arith.mulf %131, %121 : vector<18x114xf32>
    %133 = arith.addf %120, %132 : vector<18x114xf32>
    %134 = vector.extract_strided_slice %107 {offsets = [2, 0], sizes = [18, 114], strides = [1, 1]} : vector<20x114xf32> to vector<18x114xf32>
    %c7 = arith.constant 7 : index
    %135 = memref.load %arg2[%c7] : memref<81xf32, #tpu.memory_space<smem>>
    %136 = vector.broadcast %135 : f32 to vector<18x114xf32>
    %137 = arith.mulf %136, %134 : vector<18x114xf32>
    %138 = arith.addf %125, %137 : vector<18x114xf32>
    %c34 = arith.constant 34 : index
    %139 = memref.load %arg2[%c34] : memref<81xf32, #tpu.memory_space<smem>>
    %140 = vector.broadcast %139 : f32 to vector<18x114xf32>
    %141 = arith.mulf %140, %134 : vector<18x114xf32>
    %142 = arith.addf %129, %141 : vector<18x114xf32>
    %c61 = arith.constant 61 : index
    %143 = memref.load %arg2[%c61] : memref<81xf32, #tpu.memory_space<smem>>
    %144 = vector.broadcast %143 : f32 to vector<18x114xf32>
    %145 = arith.mulf %144, %134 : vector<18x114xf32>
    %146 = arith.addf %133, %145 : vector<18x114xf32>
    %c0_26 = arith.constant 0 : index
    %c0_27 = arith.constant 0 : index
    %c0_28 = arith.constant 0 : index
    %c2_29 = arith.constant 2 : index
    %147 = vector.load %arg1[%c0_26, %c0_27, %c0_28, %c2_29] : memref<1x3x20x116xf32, #tpu.memory_space<vmem>>, vector<1x1x20x114xf32>
    %148 = vector.shape_cast %147 : vector<1x1x20x114xf32> to vector<20x114xf32>
    %cst_30 = arith.constant 0.000000e+00 : f32
    %149 = vector.broadcast %cst_30 : f32 to vector<20x114xf32>
    %150 = arith.select %22, %148, %149 : vector<20x114xi1>, vector<20x114xf32>
    %151 = vector.extract_strided_slice %150 {offsets = [0, 0], sizes = [18, 114], strides = [1, 1]} : vector<20x114xf32> to vector<18x114xf32>
    %c2_31 = arith.constant 2 : index
    %152 = memref.load %arg2[%c2_31] : memref<81xf32, #tpu.memory_space<smem>>
    %153 = vector.broadcast %152 : f32 to vector<18x114xf32>
    %154 = arith.mulf %153, %151 : vector<18x114xf32>
    %155 = arith.addf %138, %154 : vector<18x114xf32>
    %c29 = arith.constant 29 : index
    %156 = memref.load %arg2[%c29] : memref<81xf32, #tpu.memory_space<smem>>
    %157 = vector.broadcast %156 : f32 to vector<18x114xf32>
    %158 = arith.mulf %157, %151 : vector<18x114xf32>
    %159 = arith.addf %142, %158 : vector<18x114xf32>
    %c56 = arith.constant 56 : index
    %160 = memref.load %arg2[%c56] : memref<81xf32, #tpu.memory_space<smem>>
    %161 = vector.broadcast %160 : f32 to vector<18x114xf32>
    %162 = arith.mulf %161, %151 : vector<18x114xf32>
    %163 = arith.addf %146, %162 : vector<18x114xf32>
    %164 = vector.extract_strided_slice %150 {offsets = [1, 0], sizes = [18, 114], strides = [1, 1]} : vector<20x114xf32> to vector<18x114xf32>
    %c5 = arith.constant 5 : index
    %165 = memref.load %arg2[%c5] : memref<81xf32, #tpu.memory_space<smem>>
    %166 = vector.broadcast %165 : f32 to vector<18x114xf32>
    %167 = arith.mulf %166, %164 : vector<18x114xf32>
    %168 = arith.addf %155, %167 : vector<18x114xf32>
    %c32 = arith.constant 32 : index
    %169 = memref.load %arg2[%c32] : memref<81xf32, #tpu.memory_space<smem>>
    %170 = vector.broadcast %169 : f32 to vector<18x114xf32>
    %171 = arith.mulf %170, %164 : vector<18x114xf32>
    %172 = arith.addf %159, %171 : vector<18x114xf32>
    %c59 = arith.constant 59 : index
    %173 = memref.load %arg2[%c59] : memref<81xf32, #tpu.memory_space<smem>>
    %174 = vector.broadcast %173 : f32 to vector<18x114xf32>
    %175 = arith.mulf %174, %164 : vector<18x114xf32>
    %176 = arith.addf %163, %175 : vector<18x114xf32>
    %177 = vector.extract_strided_slice %150 {offsets = [2, 0], sizes = [18, 114], strides = [1, 1]} : vector<20x114xf32> to vector<18x114xf32>
    %c8 = arith.constant 8 : index
    %178 = memref.load %arg2[%c8] : memref<81xf32, #tpu.memory_space<smem>>
    %179 = vector.broadcast %178 : f32 to vector<18x114xf32>
    %180 = arith.mulf %179, %177 : vector<18x114xf32>
    %181 = arith.addf %168, %180 : vector<18x114xf32>
    %c35 = arith.constant 35 : index
    %182 = memref.load %arg2[%c35] : memref<81xf32, #tpu.memory_space<smem>>
    %183 = vector.broadcast %182 : f32 to vector<18x114xf32>
    %184 = arith.mulf %183, %177 : vector<18x114xf32>
    %185 = arith.addf %172, %184 : vector<18x114xf32>
    %c62 = arith.constant 62 : index
    %186 = memref.load %arg2[%c62] : memref<81xf32, #tpu.memory_space<smem>>
    %187 = vector.broadcast %186 : f32 to vector<18x114xf32>
    %188 = arith.mulf %187, %177 : vector<18x114xf32>
    %189 = arith.addf %176, %188 : vector<18x114xf32>
    %c0_32 = arith.constant 0 : index
    %c1_33 = arith.constant 1 : index
    %c0_34 = arith.constant 0 : index
    %c0_35 = arith.constant 0 : index
    %190 = vector.load %arg1[%c0_32, %c1_33, %c0_34, %c0_35] : memref<1x3x20x116xf32, #tpu.memory_space<vmem>>, vector<1x1x20x114xf32>
    %191 = vector.shape_cast %190 : vector<1x1x20x114xf32> to vector<20x114xf32>
    %cst_36 = arith.constant 0.000000e+00 : f32
    %192 = vector.broadcast %cst_36 : f32 to vector<20x114xf32>
    %193 = arith.select %20, %191, %192 : vector<20x114xi1>, vector<20x114xf32>
    %194 = vector.extract_strided_slice %193 {offsets = [0, 0], sizes = [18, 114], strides = [1, 1]} : vector<20x114xf32> to vector<18x114xf32>
    %c9 = arith.constant 9 : index
    %195 = memref.load %arg2[%c9] : memref<81xf32, #tpu.memory_space<smem>>
    %196 = vector.broadcast %195 : f32 to vector<18x114xf32>
    %197 = arith.mulf %196, %194 : vector<18x114xf32>
    %198 = arith.addf %181, %197 : vector<18x114xf32>
    %c36 = arith.constant 36 : index
    %199 = memref.load %arg2[%c36] : memref<81xf32, #tpu.memory_space<smem>>
    %200 = vector.broadcast %199 : f32 to vector<18x114xf32>
    %201 = arith.mulf %200, %194 : vector<18x114xf32>
    %202 = arith.addf %185, %201 : vector<18x114xf32>
    %c63 = arith.constant 63 : index
    %203 = memref.load %arg2[%c63] : memref<81xf32, #tpu.memory_space<smem>>
    %204 = vector.broadcast %203 : f32 to vector<18x114xf32>
    %205 = arith.mulf %204, %194 : vector<18x114xf32>
    %206 = arith.addf %189, %205 : vector<18x114xf32>
    %207 = vector.extract_strided_slice %193 {offsets = [1, 0], sizes = [18, 114], strides = [1, 1]} : vector<20x114xf32> to vector<18x114xf32>
    %c12 = arith.constant 12 : index
    %208 = memref.load %arg2[%c12] : memref<81xf32, #tpu.memory_space<smem>>
    %209 = vector.broadcast %208 : f32 to vector<18x114xf32>
    %210 = arith.mulf %209, %207 : vector<18x114xf32>
    %211 = arith.addf %198, %210 : vector<18x114xf32>
    %c39 = arith.constant 39 : index
    %212 = memref.load %arg2[%c39] : memref<81xf32, #tpu.memory_space<smem>>
    %213 = vector.broadcast %212 : f32 to vector<18x114xf32>
    %214 = arith.mulf %213, %207 : vector<18x114xf32>
    %215 = arith.addf %202, %214 : vector<18x114xf32>
    %c66 = arith.constant 66 : index
    %216 = memref.load %arg2[%c66] : memref<81xf32, #tpu.memory_space<smem>>
    %217 = vector.broadcast %216 : f32 to vector<18x114xf32>
    %218 = arith.mulf %217, %207 : vector<18x114xf32>
    %219 = arith.addf %206, %218 : vector<18x114xf32>
    %220 = vector.extract_strided_slice %193 {offsets = [2, 0], sizes = [18, 114], strides = [1, 1]} : vector<20x114xf32> to vector<18x114xf32>
    %c15 = arith.constant 15 : index
    %221 = memref.load %arg2[%c15] : memref<81xf32, #tpu.memory_space<smem>>
    %222 = vector.broadcast %221 : f32 to vector<18x114xf32>
    %223 = arith.mulf %222, %220 : vector<18x114xf32>
    %224 = arith.addf %211, %223 : vector<18x114xf32>
    %c42 = arith.constant 42 : index
    %225 = memref.load %arg2[%c42] : memref<81xf32, #tpu.memory_space<smem>>
    %226 = vector.broadcast %225 : f32 to vector<18x114xf32>
    %227 = arith.mulf %226, %220 : vector<18x114xf32>
    %228 = arith.addf %215, %227 : vector<18x114xf32>
    %c69 = arith.constant 69 : index
    %229 = memref.load %arg2[%c69] : memref<81xf32, #tpu.memory_space<smem>>
    %230 = vector.broadcast %229 : f32 to vector<18x114xf32>
    %231 = arith.mulf %230, %220 : vector<18x114xf32>
    %232 = arith.addf %219, %231 : vector<18x114xf32>
    %c0_37 = arith.constant 0 : index
    %c1_38 = arith.constant 1 : index
    %c0_39 = arith.constant 0 : index
    %c1_40 = arith.constant 1 : index
    %233 = vector.load %arg1[%c0_37, %c1_38, %c0_39, %c1_40] : memref<1x3x20x116xf32, #tpu.memory_space<vmem>>, vector<1x1x20x114xf32>
    %234 = vector.shape_cast %233 : vector<1x1x20x114xf32> to vector<20x114xf32>
    %235 = vector.extract_strided_slice %234 {offsets = [0, 0], sizes = [18, 114], strides = [1, 1]} : vector<20x114xf32> to vector<18x114xf32>
    %c10 = arith.constant 10 : index
    %236 = memref.load %arg2[%c10] : memref<81xf32, #tpu.memory_space<smem>>
    %237 = vector.broadcast %236 : f32 to vector<18x114xf32>
    %238 = arith.mulf %237, %235 : vector<18x114xf32>
    %239 = arith.addf %224, %238 : vector<18x114xf32>
    %c37 = arith.constant 37 : index
    %240 = memref.load %arg2[%c37] : memref<81xf32, #tpu.memory_space<smem>>
    %241 = vector.broadcast %240 : f32 to vector<18x114xf32>
    %242 = arith.mulf %241, %235 : vector<18x114xf32>
    %243 = arith.addf %228, %242 : vector<18x114xf32>
    %c64 = arith.constant 64 : index
    %244 = memref.load %arg2[%c64] : memref<81xf32, #tpu.memory_space<smem>>
    %245 = vector.broadcast %244 : f32 to vector<18x114xf32>
    %246 = arith.mulf %245, %235 : vector<18x114xf32>
    %247 = arith.addf %232, %246 : vector<18x114xf32>
    %248 = vector.extract_strided_slice %234 {offsets = [1, 0], sizes = [18, 114], strides = [1, 1]} : vector<20x114xf32> to vector<18x114xf32>
    %c13 = arith.constant 13 : index
    %249 = memref.load %arg2[%c13] : memref<81xf32, #tpu.memory_space<smem>>
    %250 = vector.broadcast %249 : f32 to vector<18x114xf32>
    %251 = arith.mulf %250, %248 : vector<18x114xf32>
    %252 = arith.addf %239, %251 : vector<18x114xf32>
    %c40 = arith.constant 40 : index
    %253 = memref.load %arg2[%c40] : memref<81xf32, #tpu.memory_space<smem>>
    %254 = vector.broadcast %253 : f32 to vector<18x114xf32>
    %255 = arith.mulf %254, %248 : vector<18x114xf32>
    %256 = arith.addf %243, %255 : vector<18x114xf32>
    %c67 = arith.constant 67 : index
    %257 = memref.load %arg2[%c67] : memref<81xf32, #tpu.memory_space<smem>>
    %258 = vector.broadcast %257 : f32 to vector<18x114xf32>
    %259 = arith.mulf %258, %248 : vector<18x114xf32>
    %260 = arith.addf %247, %259 : vector<18x114xf32>
    %261 = vector.extract_strided_slice %234 {offsets = [2, 0], sizes = [18, 114], strides = [1, 1]} : vector<20x114xf32> to vector<18x114xf32>
    %c16 = arith.constant 16 : index
    %262 = memref.load %arg2[%c16] : memref<81xf32, #tpu.memory_space<smem>>
    %263 = vector.broadcast %262 : f32 to vector<18x114xf32>
    %264 = arith.mulf %263, %261 : vector<18x114xf32>
    %265 = arith.addf %252, %264 : vector<18x114xf32>
    %c43 = arith.constant 43 : index
    %266 = memref.load %arg2[%c43] : memref<81xf32, #tpu.memory_space<smem>>
    %267 = vector.broadcast %266 : f32 to vector<18x114xf32>
    %268 = arith.mulf %267, %261 : vector<18x114xf32>
    %269 = arith.addf %256, %268 : vector<18x114xf32>
    %c70 = arith.constant 70 : index
    %270 = memref.load %arg2[%c70] : memref<81xf32, #tpu.memory_space<smem>>
    %271 = vector.broadcast %270 : f32 to vector<18x114xf32>
    %272 = arith.mulf %271, %261 : vector<18x114xf32>
    %273 = arith.addf %260, %272 : vector<18x114xf32>
    %c0_41 = arith.constant 0 : index
    %c1_42 = arith.constant 1 : index
    %c0_43 = arith.constant 0 : index
    %c2_44 = arith.constant 2 : index
    %274 = vector.load %arg1[%c0_41, %c1_42, %c0_43, %c2_44] : memref<1x3x20x116xf32, #tpu.memory_space<vmem>>, vector<1x1x20x114xf32>
    %275 = vector.shape_cast %274 : vector<1x1x20x114xf32> to vector<20x114xf32>
    %cst_45 = arith.constant 0.000000e+00 : f32
    %276 = vector.broadcast %cst_45 : f32 to vector<20x114xf32>
    %277 = arith.select %22, %275, %276 : vector<20x114xi1>, vector<20x114xf32>
    %278 = vector.extract_strided_slice %277 {offsets = [0, 0], sizes = [18, 114], strides = [1, 1]} : vector<20x114xf32> to vector<18x114xf32>
    %c11 = arith.constant 11 : index
    %279 = memref.load %arg2[%c11] : memref<81xf32, #tpu.memory_space<smem>>
    %280 = vector.broadcast %279 : f32 to vector<18x114xf32>
    %281 = arith.mulf %280, %278 : vector<18x114xf32>
    %282 = arith.addf %265, %281 : vector<18x114xf32>
    %c38 = arith.constant 38 : index
    %283 = memref.load %arg2[%c38] : memref<81xf32, #tpu.memory_space<smem>>
    %284 = vector.broadcast %283 : f32 to vector<18x114xf32>
    %285 = arith.mulf %284, %278 : vector<18x114xf32>
    %286 = arith.addf %269, %285 : vector<18x114xf32>
    %c65 = arith.constant 65 : index
    %287 = memref.load %arg2[%c65] : memref<81xf32, #tpu.memory_space<smem>>
    %288 = vector.broadcast %287 : f32 to vector<18x114xf32>
    %289 = arith.mulf %288, %278 : vector<18x114xf32>
    %290 = arith.addf %273, %289 : vector<18x114xf32>
    %291 = vector.extract_strided_slice %277 {offsets = [1, 0], sizes = [18, 114], strides = [1, 1]} : vector<20x114xf32> to vector<18x114xf32>
    %c14 = arith.constant 14 : index
    %292 = memref.load %arg2[%c14] : memref<81xf32, #tpu.memory_space<smem>>
    %293 = vector.broadcast %292 : f32 to vector<18x114xf32>
    %294 = arith.mulf %293, %291 : vector<18x114xf32>
    %295 = arith.addf %282, %294 : vector<18x114xf32>
    %c41 = arith.constant 41 : index
    %296 = memref.load %arg2[%c41] : memref<81xf32, #tpu.memory_space<smem>>
    %297 = vector.broadcast %296 : f32 to vector<18x114xf32>
    %298 = arith.mulf %297, %291 : vector<18x114xf32>
    %299 = arith.addf %286, %298 : vector<18x114xf32>
    %c68 = arith.constant 68 : index
    %300 = memref.load %arg2[%c68] : memref<81xf32, #tpu.memory_space<smem>>
    %301 = vector.broadcast %300 : f32 to vector<18x114xf32>
    %302 = arith.mulf %301, %291 : vector<18x114xf32>
    %303 = arith.addf %290, %302 : vector<18x114xf32>
    %304 = vector.extract_strided_slice %277 {offsets = [2, 0], sizes = [18, 114], strides = [1, 1]} : vector<20x114xf32> to vector<18x114xf32>
    %c17 = arith.constant 17 : index
    %305 = memref.load %arg2[%c17] : memref<81xf32, #tpu.memory_space<smem>>
    %306 = vector.broadcast %305 : f32 to vector<18x114xf32>
    %307 = arith.mulf %306, %304 : vector<18x114xf32>
    %308 = arith.addf %295, %307 : vector<18x114xf32>
    %c44 = arith.constant 44 : index
    %309 = memref.load %arg2[%c44] : memref<81xf32, #tpu.memory_space<smem>>
    %310 = vector.broadcast %309 : f32 to vector<18x114xf32>
    %311 = arith.mulf %310, %304 : vector<18x114xf32>
    %312 = arith.addf %299, %311 : vector<18x114xf32>
    %c71 = arith.constant 71 : index
    %313 = memref.load %arg2[%c71] : memref<81xf32, #tpu.memory_space<smem>>
    %314 = vector.broadcast %313 : f32 to vector<18x114xf32>
    %315 = arith.mulf %314, %304 : vector<18x114xf32>
    %316 = arith.addf %303, %315 : vector<18x114xf32>
    %c0_46 = arith.constant 0 : index
    %c2_47 = arith.constant 2 : index
    %c0_48 = arith.constant 0 : index
    %c0_49 = arith.constant 0 : index
    %317 = vector.load %arg1[%c0_46, %c2_47, %c0_48, %c0_49] : memref<1x3x20x116xf32, #tpu.memory_space<vmem>>, vector<1x1x20x114xf32>
    %318 = vector.shape_cast %317 : vector<1x1x20x114xf32> to vector<20x114xf32>
    %cst_50 = arith.constant 0.000000e+00 : f32
    %319 = vector.broadcast %cst_50 : f32 to vector<20x114xf32>
    %320 = arith.select %20, %318, %319 : vector<20x114xi1>, vector<20x114xf32>
    %321 = vector.extract_strided_slice %320 {offsets = [0, 0], sizes = [18, 114], strides = [1, 1]} : vector<20x114xf32> to vector<18x114xf32>
    %c18 = arith.constant 18 : index
    %322 = memref.load %arg2[%c18] : memref<81xf32, #tpu.memory_space<smem>>
    %323 = vector.broadcast %322 : f32 to vector<18x114xf32>
    %324 = arith.mulf %323, %321 : vector<18x114xf32>
    %325 = arith.addf %308, %324 : vector<18x114xf32>
    %c45 = arith.constant 45 : index
    %326 = memref.load %arg2[%c45] : memref<81xf32, #tpu.memory_space<smem>>
    %327 = vector.broadcast %326 : f32 to vector<18x114xf32>
    %328 = arith.mulf %327, %321 : vector<18x114xf32>
    %329 = arith.addf %312, %328 : vector<18x114xf32>
    %c72 = arith.constant 72 : index
    %330 = memref.load %arg2[%c72] : memref<81xf32, #tpu.memory_space<smem>>
    %331 = vector.broadcast %330 : f32 to vector<18x114xf32>
    %332 = arith.mulf %331, %321 : vector<18x114xf32>
    %333 = arith.addf %316, %332 : vector<18x114xf32>
    %334 = vector.extract_strided_slice %320 {offsets = [1, 0], sizes = [18, 114], strides = [1, 1]} : vector<20x114xf32> to vector<18x114xf32>
    %c21 = arith.constant 21 : index
    %335 = memref.load %arg2[%c21] : memref<81xf32, #tpu.memory_space<smem>>
    %336 = vector.broadcast %335 : f32 to vector<18x114xf32>
    %337 = arith.mulf %336, %334 : vector<18x114xf32>
    %338 = arith.addf %325, %337 : vector<18x114xf32>
    %c48 = arith.constant 48 : index
    %339 = memref.load %arg2[%c48] : memref<81xf32, #tpu.memory_space<smem>>
    %340 = vector.broadcast %339 : f32 to vector<18x114xf32>
    %341 = arith.mulf %340, %334 : vector<18x114xf32>
    %342 = arith.addf %329, %341 : vector<18x114xf32>
    %c75 = arith.constant 75 : index
    %343 = memref.load %arg2[%c75] : memref<81xf32, #tpu.memory_space<smem>>
    %344 = vector.broadcast %343 : f32 to vector<18x114xf32>
    %345 = arith.mulf %344, %334 : vector<18x114xf32>
    %346 = arith.addf %333, %345 : vector<18x114xf32>
    %347 = vector.extract_strided_slice %320 {offsets = [2, 0], sizes = [18, 114], strides = [1, 1]} : vector<20x114xf32> to vector<18x114xf32>
    %c24 = arith.constant 24 : index
    %348 = memref.load %arg2[%c24] : memref<81xf32, #tpu.memory_space<smem>>
    %349 = vector.broadcast %348 : f32 to vector<18x114xf32>
    %350 = arith.mulf %349, %347 : vector<18x114xf32>
    %351 = arith.addf %338, %350 : vector<18x114xf32>
    %c51 = arith.constant 51 : index
    %352 = memref.load %arg2[%c51] : memref<81xf32, #tpu.memory_space<smem>>
    %353 = vector.broadcast %352 : f32 to vector<18x114xf32>
    %354 = arith.mulf %353, %347 : vector<18x114xf32>
    %355 = arith.addf %342, %354 : vector<18x114xf32>
    %c78 = arith.constant 78 : index
    %356 = memref.load %arg2[%c78] : memref<81xf32, #tpu.memory_space<smem>>
    %357 = vector.broadcast %356 : f32 to vector<18x114xf32>
    %358 = arith.mulf %357, %347 : vector<18x114xf32>
    %359 = arith.addf %346, %358 : vector<18x114xf32>
    %c0_51 = arith.constant 0 : index
    %c2_52 = arith.constant 2 : index
    %c0_53 = arith.constant 0 : index
    %c1_54 = arith.constant 1 : index
    %360 = vector.load %arg1[%c0_51, %c2_52, %c0_53, %c1_54] : memref<1x3x20x116xf32, #tpu.memory_space<vmem>>, vector<1x1x20x114xf32>
    %361 = vector.shape_cast %360 : vector<1x1x20x114xf32> to vector<20x114xf32>
    %362 = vector.extract_strided_slice %361 {offsets = [0, 0], sizes = [18, 114], strides = [1, 1]} : vector<20x114xf32> to vector<18x114xf32>
    %c19 = arith.constant 19 : index
    %363 = memref.load %arg2[%c19] : memref<81xf32, #tpu.memory_space<smem>>
    %364 = vector.broadcast %363 : f32 to vector<18x114xf32>
    %365 = arith.mulf %364, %362 : vector<18x114xf32>
    %366 = arith.addf %351, %365 : vector<18x114xf32>
    %c46 = arith.constant 46 : index
    %367 = memref.load %arg2[%c46] : memref<81xf32, #tpu.memory_space<smem>>
    %368 = vector.broadcast %367 : f32 to vector<18x114xf32>
    %369 = arith.mulf %368, %362 : vector<18x114xf32>
    %370 = arith.addf %355, %369 : vector<18x114xf32>
    %c73 = arith.constant 73 : index
    %371 = memref.load %arg2[%c73] : memref<81xf32, #tpu.memory_space<smem>>
    %372 = vector.broadcast %371 : f32 to vector<18x114xf32>
    %373 = arith.mulf %372, %362 : vector<18x114xf32>
    %374 = arith.addf %359, %373 : vector<18x114xf32>
    %375 = vector.extract_strided_slice %361 {offsets = [1, 0], sizes = [18, 114], strides = [1, 1]} : vector<20x114xf32> to vector<18x114xf32>
    %c22 = arith.constant 22 : index
    %376 = memref.load %arg2[%c22] : memref<81xf32, #tpu.memory_space<smem>>
    %377 = vector.broadcast %376 : f32 to vector<18x114xf32>
    %378 = arith.mulf %377, %375 : vector<18x114xf32>
    %379 = arith.addf %366, %378 : vector<18x114xf32>
    %c49 = arith.constant 49 : index
    %380 = memref.load %arg2[%c49] : memref<81xf32, #tpu.memory_space<smem>>
    %381 = vector.broadcast %380 : f32 to vector<18x114xf32>
    %382 = arith.mulf %381, %375 : vector<18x114xf32>
    %383 = arith.addf %370, %382 : vector<18x114xf32>
    %c76 = arith.constant 76 : index
    %384 = memref.load %arg2[%c76] : memref<81xf32, #tpu.memory_space<smem>>
    %385 = vector.broadcast %384 : f32 to vector<18x114xf32>
    %386 = arith.mulf %385, %375 : vector<18x114xf32>
    %387 = arith.addf %374, %386 : vector<18x114xf32>
    %388 = vector.extract_strided_slice %361 {offsets = [2, 0], sizes = [18, 114], strides = [1, 1]} : vector<20x114xf32> to vector<18x114xf32>
    %c25 = arith.constant 25 : index
    %389 = memref.load %arg2[%c25] : memref<81xf32, #tpu.memory_space<smem>>
    %390 = vector.broadcast %389 : f32 to vector<18x114xf32>
    %391 = arith.mulf %390, %388 : vector<18x114xf32>
    %392 = arith.addf %379, %391 : vector<18x114xf32>
    %c52 = arith.constant 52 : index
    %393 = memref.load %arg2[%c52] : memref<81xf32, #tpu.memory_space<smem>>
    %394 = vector.broadcast %393 : f32 to vector<18x114xf32>
    %395 = arith.mulf %394, %388 : vector<18x114xf32>
    %396 = arith.addf %383, %395 : vector<18x114xf32>
    %c79 = arith.constant 79 : index
    %397 = memref.load %arg2[%c79] : memref<81xf32, #tpu.memory_space<smem>>
    %398 = vector.broadcast %397 : f32 to vector<18x114xf32>
    %399 = arith.mulf %398, %388 : vector<18x114xf32>
    %400 = arith.addf %387, %399 : vector<18x114xf32>
    %c0_55 = arith.constant 0 : index
    %c2_56 = arith.constant 2 : index
    %c0_57 = arith.constant 0 : index
    %c2_58 = arith.constant 2 : index
    %401 = vector.load %arg1[%c0_55, %c2_56, %c0_57, %c2_58] : memref<1x3x20x116xf32, #tpu.memory_space<vmem>>, vector<1x1x20x114xf32>
    %402 = vector.shape_cast %401 : vector<1x1x20x114xf32> to vector<20x114xf32>
    %cst_59 = arith.constant 0.000000e+00 : f32
    %403 = vector.broadcast %cst_59 : f32 to vector<20x114xf32>
    %404 = arith.select %22, %402, %403 : vector<20x114xi1>, vector<20x114xf32>
    %405 = vector.extract_strided_slice %404 {offsets = [0, 0], sizes = [18, 114], strides = [1, 1]} : vector<20x114xf32> to vector<18x114xf32>
    %c20 = arith.constant 20 : index
    %406 = memref.load %arg2[%c20] : memref<81xf32, #tpu.memory_space<smem>>
    %407 = vector.broadcast %406 : f32 to vector<18x114xf32>
    %408 = arith.mulf %407, %405 : vector<18x114xf32>
    %409 = arith.addf %392, %408 : vector<18x114xf32>
    %c47 = arith.constant 47 : index
    %410 = memref.load %arg2[%c47] : memref<81xf32, #tpu.memory_space<smem>>
    %411 = vector.broadcast %410 : f32 to vector<18x114xf32>
    %412 = arith.mulf %411, %405 : vector<18x114xf32>
    %413 = arith.addf %396, %412 : vector<18x114xf32>
    %c74 = arith.constant 74 : index
    %414 = memref.load %arg2[%c74] : memref<81xf32, #tpu.memory_space<smem>>
    %415 = vector.broadcast %414 : f32 to vector<18x114xf32>
    %416 = arith.mulf %415, %405 : vector<18x114xf32>
    %417 = arith.addf %400, %416 : vector<18x114xf32>
    %418 = vector.extract_strided_slice %404 {offsets = [1, 0], sizes = [18, 114], strides = [1, 1]} : vector<20x114xf32> to vector<18x114xf32>
    %c23 = arith.constant 23 : index
    %419 = memref.load %arg2[%c23] : memref<81xf32, #tpu.memory_space<smem>>
    %420 = vector.broadcast %419 : f32 to vector<18x114xf32>
    %421 = arith.mulf %420, %418 : vector<18x114xf32>
    %422 = arith.addf %409, %421 : vector<18x114xf32>
    %c50 = arith.constant 50 : index
    %423 = memref.load %arg2[%c50] : memref<81xf32, #tpu.memory_space<smem>>
    %424 = vector.broadcast %423 : f32 to vector<18x114xf32>
    %425 = arith.mulf %424, %418 : vector<18x114xf32>
    %426 = arith.addf %413, %425 : vector<18x114xf32>
    %c77 = arith.constant 77 : index
    %427 = memref.load %arg2[%c77] : memref<81xf32, #tpu.memory_space<smem>>
    %428 = vector.broadcast %427 : f32 to vector<18x114xf32>
    %429 = arith.mulf %428, %418 : vector<18x114xf32>
    %430 = arith.addf %417, %429 : vector<18x114xf32>
    %431 = vector.extract_strided_slice %404 {offsets = [2, 0], sizes = [18, 114], strides = [1, 1]} : vector<20x114xf32> to vector<18x114xf32>
    %c26 = arith.constant 26 : index
    %432 = memref.load %arg2[%c26] : memref<81xf32, #tpu.memory_space<smem>>
    %433 = vector.broadcast %432 : f32 to vector<18x114xf32>
    %434 = arith.mulf %433, %431 : vector<18x114xf32>
    %435 = arith.addf %422, %434 : vector<18x114xf32>
    %c53 = arith.constant 53 : index
    %436 = memref.load %arg2[%c53] : memref<81xf32, #tpu.memory_space<smem>>
    %437 = vector.broadcast %436 : f32 to vector<18x114xf32>
    %438 = arith.mulf %437, %431 : vector<18x114xf32>
    %439 = arith.addf %426, %438 : vector<18x114xf32>
    %c80 = arith.constant 80 : index
    %440 = memref.load %arg2[%c80] : memref<81xf32, #tpu.memory_space<smem>>
    %441 = vector.broadcast %440 : f32 to vector<18x114xf32>
    %442 = arith.mulf %441, %431 : vector<18x114xf32>
    %443 = arith.addf %430, %442 : vector<18x114xf32>
    %cst_60 = arith.constant 0.000000e+00 : f32
    %444 = vector.broadcast %cst_60 : f32 to vector<18x114xf32>
    %445 = arith.maximumf %435, %444 : vector<18x114xf32>
    %cst_61 = arith.constant 0.000000e+00 : f32
    %446 = vector.broadcast %cst_61 : f32 to vector<18x114xf32>
    %447 = arith.select %35, %445, %446 : vector<18x114xi1>, vector<18x114xf32>
    %cst_62 = arith.constant 0.000000e+00 : f32
    %448 = vector.broadcast %cst_62 : f32 to vector<18x114xf32>
    %449 = arith.maximumf %439, %448 : vector<18x114xf32>
    %cst_63 = arith.constant 0.000000e+00 : f32
    %450 = vector.broadcast %cst_63 : f32 to vector<18x114xf32>
    %451 = arith.select %35, %449, %450 : vector<18x114xi1>, vector<18x114xf32>
    %cst_64 = arith.constant 0.000000e+00 : f32
    %452 = vector.broadcast %cst_64 : f32 to vector<18x114xf32>
    %453 = arith.maximumf %443, %452 : vector<18x114xf32>
    %cst_65 = arith.constant 0.000000e+00 : f32
    %454 = vector.broadcast %cst_65 : f32 to vector<18x114xf32>
    %455 = arith.select %35, %453, %454 : vector<18x114xi1>, vector<18x114xf32>
    %c0_66 = arith.constant 0 : index
    %456 = memref.load %arg5[%c0_66] : memref<3xf32, #tpu.memory_space<smem>>
    %457 = vector.broadcast %456 : f32 to vector<16x112xf32>
    %c1_67 = arith.constant 1 : index
    %458 = memref.load %arg5[%c1_67] : memref<3xf32, #tpu.memory_space<smem>>
    %459 = vector.broadcast %458 : f32 to vector<16x112xf32>
    %c2_68 = arith.constant 2 : index
    %460 = memref.load %arg5[%c2_68] : memref<3xf32, #tpu.memory_space<smem>>
    %461 = vector.broadcast %460 : f32 to vector<16x112xf32>
    %462 = vector.extract_strided_slice %447 {offsets = [0, 0], sizes = [18, 112], strides = [1, 1]} : vector<18x114xf32> to vector<18x112xf32>
    %cst_69 = arith.constant 0.000000e+00 : f32
    %463 = vector.broadcast %cst_69 : f32 to vector<18x112xf32>
    %464 = arith.select %54, %462, %463 : vector<18x112xi1>, vector<18x112xf32>
    %465 = vector.extract_strided_slice %464 {offsets = [0, 0], sizes = [16, 112], strides = [1, 1]} : vector<18x112xf32> to vector<16x112xf32>
    %c0_70 = arith.constant 0 : index
    %466 = memref.load %arg4[%c0_70] : memref<81xf32, #tpu.memory_space<smem>>
    %467 = vector.broadcast %466 : f32 to vector<16x112xf32>
    %468 = arith.mulf %467, %465 : vector<16x112xf32>
    %469 = arith.addf %457, %468 : vector<16x112xf32>
    %c27_71 = arith.constant 27 : index
    %470 = memref.load %arg4[%c27_71] : memref<81xf32, #tpu.memory_space<smem>>
    %471 = vector.broadcast %470 : f32 to vector<16x112xf32>
    %472 = arith.mulf %471, %465 : vector<16x112xf32>
    %473 = arith.addf %459, %472 : vector<16x112xf32>
    %c54_72 = arith.constant 54 : index
    %474 = memref.load %arg4[%c54_72] : memref<81xf32, #tpu.memory_space<smem>>
    %475 = vector.broadcast %474 : f32 to vector<16x112xf32>
    %476 = arith.mulf %475, %465 : vector<16x112xf32>
    %477 = arith.addf %461, %476 : vector<16x112xf32>
    %478 = vector.extract_strided_slice %464 {offsets = [1, 0], sizes = [16, 112], strides = [1, 1]} : vector<18x112xf32> to vector<16x112xf32>
    %c3_73 = arith.constant 3 : index
    %479 = memref.load %arg4[%c3_73] : memref<81xf32, #tpu.memory_space<smem>>
    %480 = vector.broadcast %479 : f32 to vector<16x112xf32>
    %481 = arith.mulf %480, %478 : vector<16x112xf32>
    %482 = arith.addf %469, %481 : vector<16x112xf32>
    %c30_74 = arith.constant 30 : index
    %483 = memref.load %arg4[%c30_74] : memref<81xf32, #tpu.memory_space<smem>>
    %484 = vector.broadcast %483 : f32 to vector<16x112xf32>
    %485 = arith.mulf %484, %478 : vector<16x112xf32>
    %486 = arith.addf %473, %485 : vector<16x112xf32>
    %c57_75 = arith.constant 57 : index
    %487 = memref.load %arg4[%c57_75] : memref<81xf32, #tpu.memory_space<smem>>
    %488 = vector.broadcast %487 : f32 to vector<16x112xf32>
    %489 = arith.mulf %488, %478 : vector<16x112xf32>
    %490 = arith.addf %477, %489 : vector<16x112xf32>
    %491 = vector.extract_strided_slice %464 {offsets = [2, 0], sizes = [16, 112], strides = [1, 1]} : vector<18x112xf32> to vector<16x112xf32>
    %c6_76 = arith.constant 6 : index
    %492 = memref.load %arg4[%c6_76] : memref<81xf32, #tpu.memory_space<smem>>
    %493 = vector.broadcast %492 : f32 to vector<16x112xf32>
    %494 = arith.mulf %493, %491 : vector<16x112xf32>
    %495 = arith.addf %482, %494 : vector<16x112xf32>
    %c33_77 = arith.constant 33 : index
    %496 = memref.load %arg4[%c33_77] : memref<81xf32, #tpu.memory_space<smem>>
    %497 = vector.broadcast %496 : f32 to vector<16x112xf32>
    %498 = arith.mulf %497, %491 : vector<16x112xf32>
    %499 = arith.addf %486, %498 : vector<16x112xf32>
    %c60_78 = arith.constant 60 : index
    %500 = memref.load %arg4[%c60_78] : memref<81xf32, #tpu.memory_space<smem>>
    %501 = vector.broadcast %500 : f32 to vector<16x112xf32>
    %502 = arith.mulf %501, %491 : vector<16x112xf32>
    %503 = arith.addf %490, %502 : vector<16x112xf32>
    %504 = vector.extract_strided_slice %447 {offsets = [0, 1], sizes = [18, 112], strides = [1, 1]} : vector<18x114xf32> to vector<18x112xf32>
    %505 = vector.extract_strided_slice %504 {offsets = [0, 0], sizes = [16, 112], strides = [1, 1]} : vector<18x112xf32> to vector<16x112xf32>
    %c1_79 = arith.constant 1 : index
    %506 = memref.load %arg4[%c1_79] : memref<81xf32, #tpu.memory_space<smem>>
    %507 = vector.broadcast %506 : f32 to vector<16x112xf32>
    %508 = arith.mulf %507, %505 : vector<16x112xf32>
    %509 = arith.addf %495, %508 : vector<16x112xf32>
    %c28_80 = arith.constant 28 : index
    %510 = memref.load %arg4[%c28_80] : memref<81xf32, #tpu.memory_space<smem>>
    %511 = vector.broadcast %510 : f32 to vector<16x112xf32>
    %512 = arith.mulf %511, %505 : vector<16x112xf32>
    %513 = arith.addf %499, %512 : vector<16x112xf32>
    %c55_81 = arith.constant 55 : index
    %514 = memref.load %arg4[%c55_81] : memref<81xf32, #tpu.memory_space<smem>>
    %515 = vector.broadcast %514 : f32 to vector<16x112xf32>
    %516 = arith.mulf %515, %505 : vector<16x112xf32>
    %517 = arith.addf %503, %516 : vector<16x112xf32>
    %518 = vector.extract_strided_slice %504 {offsets = [1, 0], sizes = [16, 112], strides = [1, 1]} : vector<18x112xf32> to vector<16x112xf32>
    %c4_82 = arith.constant 4 : index
    %519 = memref.load %arg4[%c4_82] : memref<81xf32, #tpu.memory_space<smem>>
    %520 = vector.broadcast %519 : f32 to vector<16x112xf32>
    %521 = arith.mulf %520, %518 : vector<16x112xf32>
    %522 = arith.addf %509, %521 : vector<16x112xf32>
    %c31_83 = arith.constant 31 : index
    %523 = memref.load %arg4[%c31_83] : memref<81xf32, #tpu.memory_space<smem>>
    %524 = vector.broadcast %523 : f32 to vector<16x112xf32>
    %525 = arith.mulf %524, %518 : vector<16x112xf32>
    %526 = arith.addf %513, %525 : vector<16x112xf32>
    %c58_84 = arith.constant 58 : index
    %527 = memref.load %arg4[%c58_84] : memref<81xf32, #tpu.memory_space<smem>>
    %528 = vector.broadcast %527 : f32 to vector<16x112xf32>
    %529 = arith.mulf %528, %518 : vector<16x112xf32>
    %530 = arith.addf %517, %529 : vector<16x112xf32>
    %531 = vector.extract_strided_slice %504 {offsets = [2, 0], sizes = [16, 112], strides = [1, 1]} : vector<18x112xf32> to vector<16x112xf32>
    %c7_85 = arith.constant 7 : index
    %532 = memref.load %arg4[%c7_85] : memref<81xf32, #tpu.memory_space<smem>>
    %533 = vector.broadcast %532 : f32 to vector<16x112xf32>
    %534 = arith.mulf %533, %531 : vector<16x112xf32>
    %535 = arith.addf %522, %534 : vector<16x112xf32>
    %c34_86 = arith.constant 34 : index
    %536 = memref.load %arg4[%c34_86] : memref<81xf32, #tpu.memory_space<smem>>
    %537 = vector.broadcast %536 : f32 to vector<16x112xf32>
    %538 = arith.mulf %537, %531 : vector<16x112xf32>
    %539 = arith.addf %526, %538 : vector<16x112xf32>
    %c61_87 = arith.constant 61 : index
    %540 = memref.load %arg4[%c61_87] : memref<81xf32, #tpu.memory_space<smem>>
    %541 = vector.broadcast %540 : f32 to vector<16x112xf32>
    %542 = arith.mulf %541, %531 : vector<16x112xf32>
    %543 = arith.addf %530, %542 : vector<16x112xf32>
    %544 = vector.extract_strided_slice %447 {offsets = [0, 2], sizes = [18, 112], strides = [1, 1]} : vector<18x114xf32> to vector<18x112xf32>
    %cst_88 = arith.constant 0.000000e+00 : f32
    %545 = vector.broadcast %cst_88 : f32 to vector<18x112xf32>
    %546 = arith.select %56, %544, %545 : vector<18x112xi1>, vector<18x112xf32>
    %547 = vector.extract_strided_slice %546 {offsets = [0, 0], sizes = [16, 112], strides = [1, 1]} : vector<18x112xf32> to vector<16x112xf32>
    %c2_89 = arith.constant 2 : index
    %548 = memref.load %arg4[%c2_89] : memref<81xf32, #tpu.memory_space<smem>>
    %549 = vector.broadcast %548 : f32 to vector<16x112xf32>
    %550 = arith.mulf %549, %547 : vector<16x112xf32>
    %551 = arith.addf %535, %550 : vector<16x112xf32>
    %c29_90 = arith.constant 29 : index
    %552 = memref.load %arg4[%c29_90] : memref<81xf32, #tpu.memory_space<smem>>
    %553 = vector.broadcast %552 : f32 to vector<16x112xf32>
    %554 = arith.mulf %553, %547 : vector<16x112xf32>
    %555 = arith.addf %539, %554 : vector<16x112xf32>
    %c56_91 = arith.constant 56 : index
    %556 = memref.load %arg4[%c56_91] : memref<81xf32, #tpu.memory_space<smem>>
    %557 = vector.broadcast %556 : f32 to vector<16x112xf32>
    %558 = arith.mulf %557, %547 : vector<16x112xf32>
    %559 = arith.addf %543, %558 : vector<16x112xf32>
    %560 = vector.extract_strided_slice %546 {offsets = [1, 0], sizes = [16, 112], strides = [1, 1]} : vector<18x112xf32> to vector<16x112xf32>
    %c5_92 = arith.constant 5 : index
    %561 = memref.load %arg4[%c5_92] : memref<81xf32, #tpu.memory_space<smem>>
    %562 = vector.broadcast %561 : f32 to vector<16x112xf32>
    %563 = arith.mulf %562, %560 : vector<16x112xf32>
    %564 = arith.addf %551, %563 : vector<16x112xf32>
    %c32_93 = arith.constant 32 : index
    %565 = memref.load %arg4[%c32_93] : memref<81xf32, #tpu.memory_space<smem>>
    %566 = vector.broadcast %565 : f32 to vector<16x112xf32>
    %567 = arith.mulf %566, %560 : vector<16x112xf32>
    %568 = arith.addf %555, %567 : vector<16x112xf32>
    %c59_94 = arith.constant 59 : index
    %569 = memref.load %arg4[%c59_94] : memref<81xf32, #tpu.memory_space<smem>>
    %570 = vector.broadcast %569 : f32 to vector<16x112xf32>
    %571 = arith.mulf %570, %560 : vector<16x112xf32>
    %572 = arith.addf %559, %571 : vector<16x112xf32>
    %573 = vector.extract_strided_slice %546 {offsets = [2, 0], sizes = [16, 112], strides = [1, 1]} : vector<18x112xf32> to vector<16x112xf32>
    %c8_95 = arith.constant 8 : index
    %574 = memref.load %arg4[%c8_95] : memref<81xf32, #tpu.memory_space<smem>>
    %575 = vector.broadcast %574 : f32 to vector<16x112xf32>
    %576 = arith.mulf %575, %573 : vector<16x112xf32>
    %577 = arith.addf %564, %576 : vector<16x112xf32>
    %c35_96 = arith.constant 35 : index
    %578 = memref.load %arg4[%c35_96] : memref<81xf32, #tpu.memory_space<smem>>
    %579 = vector.broadcast %578 : f32 to vector<16x112xf32>
    %580 = arith.mulf %579, %573 : vector<16x112xf32>
    %581 = arith.addf %568, %580 : vector<16x112xf32>
    %c62_97 = arith.constant 62 : index
    %582 = memref.load %arg4[%c62_97] : memref<81xf32, #tpu.memory_space<smem>>
    %583 = vector.broadcast %582 : f32 to vector<16x112xf32>
    %584 = arith.mulf %583, %573 : vector<16x112xf32>
    %585 = arith.addf %572, %584 : vector<16x112xf32>
    %586 = vector.extract_strided_slice %451 {offsets = [0, 0], sizes = [18, 112], strides = [1, 1]} : vector<18x114xf32> to vector<18x112xf32>
    %cst_98 = arith.constant 0.000000e+00 : f32
    %587 = vector.broadcast %cst_98 : f32 to vector<18x112xf32>
    %588 = arith.select %54, %586, %587 : vector<18x112xi1>, vector<18x112xf32>
    %589 = vector.extract_strided_slice %588 {offsets = [0, 0], sizes = [16, 112], strides = [1, 1]} : vector<18x112xf32> to vector<16x112xf32>
    %c9_99 = arith.constant 9 : index
    %590 = memref.load %arg4[%c9_99] : memref<81xf32, #tpu.memory_space<smem>>
    %591 = vector.broadcast %590 : f32 to vector<16x112xf32>
    %592 = arith.mulf %591, %589 : vector<16x112xf32>
    %593 = arith.addf %577, %592 : vector<16x112xf32>
    %c36_100 = arith.constant 36 : index
    %594 = memref.load %arg4[%c36_100] : memref<81xf32, #tpu.memory_space<smem>>
    %595 = vector.broadcast %594 : f32 to vector<16x112xf32>
    %596 = arith.mulf %595, %589 : vector<16x112xf32>
    %597 = arith.addf %581, %596 : vector<16x112xf32>
    %c63_101 = arith.constant 63 : index
    %598 = memref.load %arg4[%c63_101] : memref<81xf32, #tpu.memory_space<smem>>
    %599 = vector.broadcast %598 : f32 to vector<16x112xf32>
    %600 = arith.mulf %599, %589 : vector<16x112xf32>
    %601 = arith.addf %585, %600 : vector<16x112xf32>
    %602 = vector.extract_strided_slice %588 {offsets = [1, 0], sizes = [16, 112], strides = [1, 1]} : vector<18x112xf32> to vector<16x112xf32>
    %c12_102 = arith.constant 12 : index
    %603 = memref.load %arg4[%c12_102] : memref<81xf32, #tpu.memory_space<smem>>
    %604 = vector.broadcast %603 : f32 to vector<16x112xf32>
    %605 = arith.mulf %604, %602 : vector<16x112xf32>
    %606 = arith.addf %593, %605 : vector<16x112xf32>
    %c39_103 = arith.constant 39 : index
    %607 = memref.load %arg4[%c39_103] : memref<81xf32, #tpu.memory_space<smem>>
    %608 = vector.broadcast %607 : f32 to vector<16x112xf32>
    %609 = arith.mulf %608, %602 : vector<16x112xf32>
    %610 = arith.addf %597, %609 : vector<16x112xf32>
    %c66_104 = arith.constant 66 : index
    %611 = memref.load %arg4[%c66_104] : memref<81xf32, #tpu.memory_space<smem>>
    %612 = vector.broadcast %611 : f32 to vector<16x112xf32>
    %613 = arith.mulf %612, %602 : vector<16x112xf32>
    %614 = arith.addf %601, %613 : vector<16x112xf32>
    %615 = vector.extract_strided_slice %588 {offsets = [2, 0], sizes = [16, 112], strides = [1, 1]} : vector<18x112xf32> to vector<16x112xf32>
    %c15_105 = arith.constant 15 : index
    %616 = memref.load %arg4[%c15_105] : memref<81xf32, #tpu.memory_space<smem>>
    %617 = vector.broadcast %616 : f32 to vector<16x112xf32>
    %618 = arith.mulf %617, %615 : vector<16x112xf32>
    %619 = arith.addf %606, %618 : vector<16x112xf32>
    %c42_106 = arith.constant 42 : index
    %620 = memref.load %arg4[%c42_106] : memref<81xf32, #tpu.memory_space<smem>>
    %621 = vector.broadcast %620 : f32 to vector<16x112xf32>
    %622 = arith.mulf %621, %615 : vector<16x112xf32>
    %623 = arith.addf %610, %622 : vector<16x112xf32>
    %c69_107 = arith.constant 69 : index
    %624 = memref.load %arg4[%c69_107] : memref<81xf32, #tpu.memory_space<smem>>
    %625 = vector.broadcast %624 : f32 to vector<16x112xf32>
    %626 = arith.mulf %625, %615 : vector<16x112xf32>
    %627 = arith.addf %614, %626 : vector<16x112xf32>
    %628 = vector.extract_strided_slice %451 {offsets = [0, 1], sizes = [18, 112], strides = [1, 1]} : vector<18x114xf32> to vector<18x112xf32>
    %629 = vector.extract_strided_slice %628 {offsets = [0, 0], sizes = [16, 112], strides = [1, 1]} : vector<18x112xf32> to vector<16x112xf32>
    %c10_108 = arith.constant 10 : index
    %630 = memref.load %arg4[%c10_108] : memref<81xf32, #tpu.memory_space<smem>>
    %631 = vector.broadcast %630 : f32 to vector<16x112xf32>
    %632 = arith.mulf %631, %629 : vector<16x112xf32>
    %633 = arith.addf %619, %632 : vector<16x112xf32>
    %c37_109 = arith.constant 37 : index
    %634 = memref.load %arg4[%c37_109] : memref<81xf32, #tpu.memory_space<smem>>
    %635 = vector.broadcast %634 : f32 to vector<16x112xf32>
    %636 = arith.mulf %635, %629 : vector<16x112xf32>
    %637 = arith.addf %623, %636 : vector<16x112xf32>
    %c64_110 = arith.constant 64 : index
    %638 = memref.load %arg4[%c64_110] : memref<81xf32, #tpu.memory_space<smem>>
    %639 = vector.broadcast %638 : f32 to vector<16x112xf32>
    %640 = arith.mulf %639, %629 : vector<16x112xf32>
    %641 = arith.addf %627, %640 : vector<16x112xf32>
    %642 = vector.extract_strided_slice %628 {offsets = [1, 0], sizes = [16, 112], strides = [1, 1]} : vector<18x112xf32> to vector<16x112xf32>
    %c13_111 = arith.constant 13 : index
    %643 = memref.load %arg4[%c13_111] : memref<81xf32, #tpu.memory_space<smem>>
    %644 = vector.broadcast %643 : f32 to vector<16x112xf32>
    %645 = arith.mulf %644, %642 : vector<16x112xf32>
    %646 = arith.addf %633, %645 : vector<16x112xf32>
    %c40_112 = arith.constant 40 : index
    %647 = memref.load %arg4[%c40_112] : memref<81xf32, #tpu.memory_space<smem>>
    %648 = vector.broadcast %647 : f32 to vector<16x112xf32>
    %649 = arith.mulf %648, %642 : vector<16x112xf32>
    %650 = arith.addf %637, %649 : vector<16x112xf32>
    %c67_113 = arith.constant 67 : index
    %651 = memref.load %arg4[%c67_113] : memref<81xf32, #tpu.memory_space<smem>>
    %652 = vector.broadcast %651 : f32 to vector<16x112xf32>
    %653 = arith.mulf %652, %642 : vector<16x112xf32>
    %654 = arith.addf %641, %653 : vector<16x112xf32>
    %655 = vector.extract_strided_slice %628 {offsets = [2, 0], sizes = [16, 112], strides = [1, 1]} : vector<18x112xf32> to vector<16x112xf32>
    %c16_114 = arith.constant 16 : index
    %656 = memref.load %arg4[%c16_114] : memref<81xf32, #tpu.memory_space<smem>>
    %657 = vector.broadcast %656 : f32 to vector<16x112xf32>
    %658 = arith.mulf %657, %655 : vector<16x112xf32>
    %659 = arith.addf %646, %658 : vector<16x112xf32>
    %c43_115 = arith.constant 43 : index
    %660 = memref.load %arg4[%c43_115] : memref<81xf32, #tpu.memory_space<smem>>
    %661 = vector.broadcast %660 : f32 to vector<16x112xf32>
    %662 = arith.mulf %661, %655 : vector<16x112xf32>
    %663 = arith.addf %650, %662 : vector<16x112xf32>
    %c70_116 = arith.constant 70 : index
    %664 = memref.load %arg4[%c70_116] : memref<81xf32, #tpu.memory_space<smem>>
    %665 = vector.broadcast %664 : f32 to vector<16x112xf32>
    %666 = arith.mulf %665, %655 : vector<16x112xf32>
    %667 = arith.addf %654, %666 : vector<16x112xf32>
    %668 = vector.extract_strided_slice %451 {offsets = [0, 2], sizes = [18, 112], strides = [1, 1]} : vector<18x114xf32> to vector<18x112xf32>
    %cst_117 = arith.constant 0.000000e+00 : f32
    %669 = vector.broadcast %cst_117 : f32 to vector<18x112xf32>
    %670 = arith.select %56, %668, %669 : vector<18x112xi1>, vector<18x112xf32>
    %671 = vector.extract_strided_slice %670 {offsets = [0, 0], sizes = [16, 112], strides = [1, 1]} : vector<18x112xf32> to vector<16x112xf32>
    %c11_118 = arith.constant 11 : index
    %672 = memref.load %arg4[%c11_118] : memref<81xf32, #tpu.memory_space<smem>>
    %673 = vector.broadcast %672 : f32 to vector<16x112xf32>
    %674 = arith.mulf %673, %671 : vector<16x112xf32>
    %675 = arith.addf %659, %674 : vector<16x112xf32>
    %c38_119 = arith.constant 38 : index
    %676 = memref.load %arg4[%c38_119] : memref<81xf32, #tpu.memory_space<smem>>
    %677 = vector.broadcast %676 : f32 to vector<16x112xf32>
    %678 = arith.mulf %677, %671 : vector<16x112xf32>
    %679 = arith.addf %663, %678 : vector<16x112xf32>
    %c65_120 = arith.constant 65 : index
    %680 = memref.load %arg4[%c65_120] : memref<81xf32, #tpu.memory_space<smem>>
    %681 = vector.broadcast %680 : f32 to vector<16x112xf32>
    %682 = arith.mulf %681, %671 : vector<16x112xf32>
    %683 = arith.addf %667, %682 : vector<16x112xf32>
    %684 = vector.extract_strided_slice %670 {offsets = [1, 0], sizes = [16, 112], strides = [1, 1]} : vector<18x112xf32> to vector<16x112xf32>
    %c14_121 = arith.constant 14 : index
    %685 = memref.load %arg4[%c14_121] : memref<81xf32, #tpu.memory_space<smem>>
    %686 = vector.broadcast %685 : f32 to vector<16x112xf32>
    %687 = arith.mulf %686, %684 : vector<16x112xf32>
    %688 = arith.addf %675, %687 : vector<16x112xf32>
    %c41_122 = arith.constant 41 : index
    %689 = memref.load %arg4[%c41_122] : memref<81xf32, #tpu.memory_space<smem>>
    %690 = vector.broadcast %689 : f32 to vector<16x112xf32>
    %691 = arith.mulf %690, %684 : vector<16x112xf32>
    %692 = arith.addf %679, %691 : vector<16x112xf32>
    %c68_123 = arith.constant 68 : index
    %693 = memref.load %arg4[%c68_123] : memref<81xf32, #tpu.memory_space<smem>>
    %694 = vector.broadcast %693 : f32 to vector<16x112xf32>
    %695 = arith.mulf %694, %684 : vector<16x112xf32>
    %696 = arith.addf %683, %695 : vector<16x112xf32>
    %697 = vector.extract_strided_slice %670 {offsets = [2, 0], sizes = [16, 112], strides = [1, 1]} : vector<18x112xf32> to vector<16x112xf32>
    %c17_124 = arith.constant 17 : index
    %698 = memref.load %arg4[%c17_124] : memref<81xf32, #tpu.memory_space<smem>>
    %699 = vector.broadcast %698 : f32 to vector<16x112xf32>
    %700 = arith.mulf %699, %697 : vector<16x112xf32>
    %701 = arith.addf %688, %700 : vector<16x112xf32>
    %c44_125 = arith.constant 44 : index
    %702 = memref.load %arg4[%c44_125] : memref<81xf32, #tpu.memory_space<smem>>
    %703 = vector.broadcast %702 : f32 to vector<16x112xf32>
    %704 = arith.mulf %703, %697 : vector<16x112xf32>
    %705 = arith.addf %692, %704 : vector<16x112xf32>
    %c71_126 = arith.constant 71 : index
    %706 = memref.load %arg4[%c71_126] : memref<81xf32, #tpu.memory_space<smem>>
    %707 = vector.broadcast %706 : f32 to vector<16x112xf32>
    %708 = arith.mulf %707, %697 : vector<16x112xf32>
    %709 = arith.addf %696, %708 : vector<16x112xf32>
    %710 = vector.extract_strided_slice %455 {offsets = [0, 0], sizes = [18, 112], strides = [1, 1]} : vector<18x114xf32> to vector<18x112xf32>
    %cst_127 = arith.constant 0.000000e+00 : f32
    %711 = vector.broadcast %cst_127 : f32 to vector<18x112xf32>
    %712 = arith.select %54, %710, %711 : vector<18x112xi1>, vector<18x112xf32>
    %713 = vector.extract_strided_slice %712 {offsets = [0, 0], sizes = [16, 112], strides = [1, 1]} : vector<18x112xf32> to vector<16x112xf32>
    %c18_128 = arith.constant 18 : index
    %714 = memref.load %arg4[%c18_128] : memref<81xf32, #tpu.memory_space<smem>>
    %715 = vector.broadcast %714 : f32 to vector<16x112xf32>
    %716 = arith.mulf %715, %713 : vector<16x112xf32>
    %717 = arith.addf %701, %716 : vector<16x112xf32>
    %c45_129 = arith.constant 45 : index
    %718 = memref.load %arg4[%c45_129] : memref<81xf32, #tpu.memory_space<smem>>
    %719 = vector.broadcast %718 : f32 to vector<16x112xf32>
    %720 = arith.mulf %719, %713 : vector<16x112xf32>
    %721 = arith.addf %705, %720 : vector<16x112xf32>
    %c72_130 = arith.constant 72 : index
    %722 = memref.load %arg4[%c72_130] : memref<81xf32, #tpu.memory_space<smem>>
    %723 = vector.broadcast %722 : f32 to vector<16x112xf32>
    %724 = arith.mulf %723, %713 : vector<16x112xf32>
    %725 = arith.addf %709, %724 : vector<16x112xf32>
    %726 = vector.extract_strided_slice %712 {offsets = [1, 0], sizes = [16, 112], strides = [1, 1]} : vector<18x112xf32> to vector<16x112xf32>
    %c21_131 = arith.constant 21 : index
    %727 = memref.load %arg4[%c21_131] : memref<81xf32, #tpu.memory_space<smem>>
    %728 = vector.broadcast %727 : f32 to vector<16x112xf32>
    %729 = arith.mulf %728, %726 : vector<16x112xf32>
    %730 = arith.addf %717, %729 : vector<16x112xf32>
    %c48_132 = arith.constant 48 : index
    %731 = memref.load %arg4[%c48_132] : memref<81xf32, #tpu.memory_space<smem>>
    %732 = vector.broadcast %731 : f32 to vector<16x112xf32>
    %733 = arith.mulf %732, %726 : vector<16x112xf32>
    %734 = arith.addf %721, %733 : vector<16x112xf32>
    %c75_133 = arith.constant 75 : index
    %735 = memref.load %arg4[%c75_133] : memref<81xf32, #tpu.memory_space<smem>>
    %736 = vector.broadcast %735 : f32 to vector<16x112xf32>
    %737 = arith.mulf %736, %726 : vector<16x112xf32>
    %738 = arith.addf %725, %737 : vector<16x112xf32>
    %739 = vector.extract_strided_slice %712 {offsets = [2, 0], sizes = [16, 112], strides = [1, 1]} : vector<18x112xf32> to vector<16x112xf32>
    %c24_134 = arith.constant 24 : index
    %740 = memref.load %arg4[%c24_134] : memref<81xf32, #tpu.memory_space<smem>>
    %741 = vector.broadcast %740 : f32 to vector<16x112xf32>
    %742 = arith.mulf %741, %739 : vector<16x112xf32>
    %743 = arith.addf %730, %742 : vector<16x112xf32>
    %c51_135 = arith.constant 51 : index
    %744 = memref.load %arg4[%c51_135] : memref<81xf32, #tpu.memory_space<smem>>
    %745 = vector.broadcast %744 : f32 to vector<16x112xf32>
    %746 = arith.mulf %745, %739 : vector<16x112xf32>
    %747 = arith.addf %734, %746 : vector<16x112xf32>
    %c78_136 = arith.constant 78 : index
    %748 = memref.load %arg4[%c78_136] : memref<81xf32, #tpu.memory_space<smem>>
    %749 = vector.broadcast %748 : f32 to vector<16x112xf32>
    %750 = arith.mulf %749, %739 : vector<16x112xf32>
    %751 = arith.addf %738, %750 : vector<16x112xf32>
    %752 = vector.extract_strided_slice %455 {offsets = [0, 1], sizes = [18, 112], strides = [1, 1]} : vector<18x114xf32> to vector<18x112xf32>
    %753 = vector.extract_strided_slice %752 {offsets = [0, 0], sizes = [16, 112], strides = [1, 1]} : vector<18x112xf32> to vector<16x112xf32>
    %c19_137 = arith.constant 19 : index
    %754 = memref.load %arg4[%c19_137] : memref<81xf32, #tpu.memory_space<smem>>
    %755 = vector.broadcast %754 : f32 to vector<16x112xf32>
    %756 = arith.mulf %755, %753 : vector<16x112xf32>
    %757 = arith.addf %743, %756 : vector<16x112xf32>
    %c46_138 = arith.constant 46 : index
    %758 = memref.load %arg4[%c46_138] : memref<81xf32, #tpu.memory_space<smem>>
    %759 = vector.broadcast %758 : f32 to vector<16x112xf32>
    %760 = arith.mulf %759, %753 : vector<16x112xf32>
    %761 = arith.addf %747, %760 : vector<16x112xf32>
    %c73_139 = arith.constant 73 : index
    %762 = memref.load %arg4[%c73_139] : memref<81xf32, #tpu.memory_space<smem>>
    %763 = vector.broadcast %762 : f32 to vector<16x112xf32>
    %764 = arith.mulf %763, %753 : vector<16x112xf32>
    %765 = arith.addf %751, %764 : vector<16x112xf32>
    %766 = vector.extract_strided_slice %752 {offsets = [1, 0], sizes = [16, 112], strides = [1, 1]} : vector<18x112xf32> to vector<16x112xf32>
    %c22_140 = arith.constant 22 : index
    %767 = memref.load %arg4[%c22_140] : memref<81xf32, #tpu.memory_space<smem>>
    %768 = vector.broadcast %767 : f32 to vector<16x112xf32>
    %769 = arith.mulf %768, %766 : vector<16x112xf32>
    %770 = arith.addf %757, %769 : vector<16x112xf32>
    %c49_141 = arith.constant 49 : index
    %771 = memref.load %arg4[%c49_141] : memref<81xf32, #tpu.memory_space<smem>>
    %772 = vector.broadcast %771 : f32 to vector<16x112xf32>
    %773 = arith.mulf %772, %766 : vector<16x112xf32>
    %774 = arith.addf %761, %773 : vector<16x112xf32>
    %c76_142 = arith.constant 76 : index
    %775 = memref.load %arg4[%c76_142] : memref<81xf32, #tpu.memory_space<smem>>
    %776 = vector.broadcast %775 : f32 to vector<16x112xf32>
    %777 = arith.mulf %776, %766 : vector<16x112xf32>
    %778 = arith.addf %765, %777 : vector<16x112xf32>
    %779 = vector.extract_strided_slice %752 {offsets = [2, 0], sizes = [16, 112], strides = [1, 1]} : vector<18x112xf32> to vector<16x112xf32>
    %c25_143 = arith.constant 25 : index
    %780 = memref.load %arg4[%c25_143] : memref<81xf32, #tpu.memory_space<smem>>
    %781 = vector.broadcast %780 : f32 to vector<16x112xf32>
    %782 = arith.mulf %781, %779 : vector<16x112xf32>
    %783 = arith.addf %770, %782 : vector<16x112xf32>
    %c52_144 = arith.constant 52 : index
    %784 = memref.load %arg4[%c52_144] : memref<81xf32, #tpu.memory_space<smem>>
    %785 = vector.broadcast %784 : f32 to vector<16x112xf32>
    %786 = arith.mulf %785, %779 : vector<16x112xf32>
    %787 = arith.addf %774, %786 : vector<16x112xf32>
    %c79_145 = arith.constant 79 : index
    %788 = memref.load %arg4[%c79_145] : memref<81xf32, #tpu.memory_space<smem>>
    %789 = vector.broadcast %788 : f32 to vector<16x112xf32>
    %790 = arith.mulf %789, %779 : vector<16x112xf32>
    %791 = arith.addf %778, %790 : vector<16x112xf32>
    %792 = vector.extract_strided_slice %455 {offsets = [0, 2], sizes = [18, 112], strides = [1, 1]} : vector<18x114xf32> to vector<18x112xf32>
    %cst_146 = arith.constant 0.000000e+00 : f32
    %793 = vector.broadcast %cst_146 : f32 to vector<18x112xf32>
    %794 = arith.select %56, %792, %793 : vector<18x112xi1>, vector<18x112xf32>
    %795 = vector.extract_strided_slice %794 {offsets = [0, 0], sizes = [16, 112], strides = [1, 1]} : vector<18x112xf32> to vector<16x112xf32>
    %c20_147 = arith.constant 20 : index
    %796 = memref.load %arg4[%c20_147] : memref<81xf32, #tpu.memory_space<smem>>
    %797 = vector.broadcast %796 : f32 to vector<16x112xf32>
    %798 = arith.mulf %797, %795 : vector<16x112xf32>
    %799 = arith.addf %783, %798 : vector<16x112xf32>
    %c47_148 = arith.constant 47 : index
    %800 = memref.load %arg4[%c47_148] : memref<81xf32, #tpu.memory_space<smem>>
    %801 = vector.broadcast %800 : f32 to vector<16x112xf32>
    %802 = arith.mulf %801, %795 : vector<16x112xf32>
    %803 = arith.addf %787, %802 : vector<16x112xf32>
    %c74_149 = arith.constant 74 : index
    %804 = memref.load %arg4[%c74_149] : memref<81xf32, #tpu.memory_space<smem>>
    %805 = vector.broadcast %804 : f32 to vector<16x112xf32>
    %806 = arith.mulf %805, %795 : vector<16x112xf32>
    %807 = arith.addf %791, %806 : vector<16x112xf32>
    %808 = vector.extract_strided_slice %794 {offsets = [1, 0], sizes = [16, 112], strides = [1, 1]} : vector<18x112xf32> to vector<16x112xf32>
    %c23_150 = arith.constant 23 : index
    %809 = memref.load %arg4[%c23_150] : memref<81xf32, #tpu.memory_space<smem>>
    %810 = vector.broadcast %809 : f32 to vector<16x112xf32>
    %811 = arith.mulf %810, %808 : vector<16x112xf32>
    %812 = arith.addf %799, %811 : vector<16x112xf32>
    %c50_151 = arith.constant 50 : index
    %813 = memref.load %arg4[%c50_151] : memref<81xf32, #tpu.memory_space<smem>>
    %814 = vector.broadcast %813 : f32 to vector<16x112xf32>
    %815 = arith.mulf %814, %808 : vector<16x112xf32>
    %816 = arith.addf %803, %815 : vector<16x112xf32>
    %c77_152 = arith.constant 77 : index
    %817 = memref.load %arg4[%c77_152] : memref<81xf32, #tpu.memory_space<smem>>
    %818 = vector.broadcast %817 : f32 to vector<16x112xf32>
    %819 = arith.mulf %818, %808 : vector<16x112xf32>
    %820 = arith.addf %807, %819 : vector<16x112xf32>
    %821 = vector.extract_strided_slice %794 {offsets = [2, 0], sizes = [16, 112], strides = [1, 1]} : vector<18x112xf32> to vector<16x112xf32>
    %c26_153 = arith.constant 26 : index
    %822 = memref.load %arg4[%c26_153] : memref<81xf32, #tpu.memory_space<smem>>
    %823 = vector.broadcast %822 : f32 to vector<16x112xf32>
    %824 = arith.mulf %823, %821 : vector<16x112xf32>
    %825 = arith.addf %812, %824 : vector<16x112xf32>
    %c53_154 = arith.constant 53 : index
    %826 = memref.load %arg4[%c53_154] : memref<81xf32, #tpu.memory_space<smem>>
    %827 = vector.broadcast %826 : f32 to vector<16x112xf32>
    %828 = arith.mulf %827, %821 : vector<16x112xf32>
    %829 = arith.addf %816, %828 : vector<16x112xf32>
    %c80_155 = arith.constant 80 : index
    %830 = memref.load %arg4[%c80_155] : memref<81xf32, #tpu.memory_space<smem>>
    %831 = vector.broadcast %830 : f32 to vector<16x112xf32>
    %832 = arith.mulf %831, %821 : vector<16x112xf32>
    %833 = arith.addf %820, %832 : vector<16x112xf32>
    %c0_156 = arith.constant 0 : index
    %c0_157 = arith.constant 0 : index
    %c2_158 = arith.constant 2 : index
    %c2_159 = arith.constant 2 : index
    %834 = vector.load %arg1[%c0_156, %c0_157, %c2_158, %c2_159] : memref<1x3x20x116xf32, #tpu.memory_space<vmem>>, vector<1x1x16x112xf32>
    %835 = vector.shape_cast %834 : vector<1x1x16x112xf32> to vector<16x112xf32>
    %cst_160 = arith.constant 0.000000e+00 : f32
    %836 = vector.broadcast %cst_160 : f32 to vector<16x112xf32>
    %837 = arith.maximumf %825, %836 : vector<16x112xf32>
    %838 = arith.addf %837, %835 : vector<16x112xf32>
    %c0_161 = arith.constant 0 : index
    %c0_162 = arith.constant 0 : index
    %c0_163 = arith.constant 0 : index
    %c0_164 = arith.constant 0 : index
    %839 = vector.load %arg6[%c0_161, %c0_162, %c0_163, %c0_164] : memref<1x3x16x112xf32, #tpu.memory_space<vmem>>, vector<1x1x16x112xf32>
    %840 = vector.shape_cast %839 : vector<1x1x16x112xf32> to vector<16x112xf32>
    %841 = vector.shape_cast %838 : vector<16x112xf32> to vector<1x1x16x112xf32>
    tpu.vector_store %arg6[%c0_161, %c0_162, %c0_163, %c0_164], %841 {strides = array<i32>} : memref<1x3x16x112xf32, #tpu.memory_space<vmem>>, vector<1x1x16x112xf32>,
    %c0_165 = arith.constant 0 : index
    %c1_166 = arith.constant 1 : index
    %c2_167 = arith.constant 2 : index
    %c2_168 = arith.constant 2 : index
    %842 = vector.load %arg1[%c0_165, %c1_166, %c2_167, %c2_168] : memref<1x3x20x116xf32, #tpu.memory_space<vmem>>, vector<1x1x16x112xf32>
    %843 = vector.shape_cast %842 : vector<1x1x16x112xf32> to vector<16x112xf32>
    %cst_169 = arith.constant 0.000000e+00 : f32
    %844 = vector.broadcast %cst_169 : f32 to vector<16x112xf32>
    %845 = arith.maximumf %829, %844 : vector<16x112xf32>
    %846 = arith.addf %845, %843 : vector<16x112xf32>
    %c0_170 = arith.constant 0 : index
    %c1_171 = arith.constant 1 : index
    %c0_172 = arith.constant 0 : index
    %c0_173 = arith.constant 0 : index
    %847 = vector.load %arg6[%c0_170, %c1_171, %c0_172, %c0_173] : memref<1x3x16x112xf32, #tpu.memory_space<vmem>>, vector<1x1x16x112xf32>
    %848 = vector.shape_cast %847 : vector<1x1x16x112xf32> to vector<16x112xf32>
    %849 = vector.shape_cast %846 : vector<16x112xf32> to vector<1x1x16x112xf32>
    tpu.vector_store %arg6[%c0_170, %c1_171, %c0_172, %c0_173], %849 {strides = array<i32>} : memref<1x3x16x112xf32, #tpu.memory_space<vmem>>, vector<1x1x16x112xf32>,
    %c0_174 = arith.constant 0 : index
    %c2_175 = arith.constant 2 : index
    %c2_176 = arith.constant 2 : index
    %c2_177 = arith.constant 2 : index
    %850 = vector.load %arg1[%c0_174, %c2_175, %c2_176, %c2_177] : memref<1x3x20x116xf32, #tpu.memory_space<vmem>>, vector<1x1x16x112xf32>
    %851 = vector.shape_cast %850 : vector<1x1x16x112xf32> to vector<16x112xf32>
    %cst_178 = arith.constant 0.000000e+00 : f32
    %852 = vector.broadcast %cst_178 : f32 to vector<16x112xf32>
    %853 = arith.maximumf %833, %852 : vector<16x112xf32>
    %854 = arith.addf %853, %851 : vector<16x112xf32>
    %c0_179 = arith.constant 0 : index
    %c2_180 = arith.constant 2 : index
    %c0_181 = arith.constant 0 : index
    %c0_182 = arith.constant 0 : index
    %855 = vector.load %arg6[%c0_179, %c2_180, %c0_181, %c0_182] : memref<1x3x16x112xf32, #tpu.memory_space<vmem>>, vector<1x1x16x112xf32>
    %856 = vector.shape_cast %855 : vector<1x1x16x112xf32> to vector<16x112xf32>
    %857 = vector.shape_cast %854 : vector<16x112xf32> to vector<1x1x16x112xf32>
    tpu.vector_store %arg6[%c0_179, %c2_180, %c0_181, %c0_182], %857 {strides = array<i32>} : memref<1x3x16x112xf32, #tpu.memory_space<vmem>>, vector<1x1x16x112xf32>,
    return
  }
  func.func @transform_0(%arg0: i32) -> (i32, i32, i32, i32) {
    %c0_i32 = arith.constant 0 : i32
    %c0_i32_0 = arith.constant 0 : i32
    %c0_i32_1 = arith.constant 0 : i32
    %c0_i32_2 = arith.constant 0 : i32
    return %arg0, %c0_i32, %c0_i32_0, %c0_i32_1 : i32, i32, i32, i32
  }
  func.func @transform_1(%arg0: i32) -> i32 {
    %c0_i32 = arith.constant 0 : i32
    %c0_i32_0 = arith.constant 0 : i32
    return %c0_i32 : i32
  }
  func.func @transform_2(%arg0: i32) -> i32 {
    %c0_i32 = arith.constant 0 : i32
    %c0_i32_0 = arith.constant 0 : i32
    return %c0_i32 : i32
  }
  func.func @transform_3(%arg0: i32) -> i32 {
    %c0_i32 = arith.constant 0 : i32
    %c0_i32_0 = arith.constant 0 : i32
    return %c0_i32 : i32
  }
  func.func @transform_4(%arg0: i32) -> i32 {
    %c0_i32 = arith.constant 0 : i32
    %c0_i32_0 = arith.constant 0 : i32
    return %c0_i32 : i32
  }
  func.func @transform_5(%arg0: i32) -> (i32, i32, i32, i32) {
    %c0_i32 = arith.constant 0 : i32
    %c0_i32_0 = arith.constant 0 : i32
    %c0_i32_1 = arith.constant 0 : i32
    %c0_i32_2 = arith.constant 0 : i32
    return %arg0, %c0_i32, %c0_i32_0, %c0_i32_1 : i32, i32, i32, i32
  }
}

</mosaic_0001>

<llo_original>
// kernel: residual_block.1
$region0: #{residual_block.1}
  #allocation0 [shape = 'u32[]', space=smem, size = 0x4, offset = 0x4, fixed_abs, tag = 'smem constant byte address 0x4 - core index']
  #allocation1 [shape = 'u32[144,128]{1,0:T(1,128)}', space=vmem, size = 0x12000, scoped, tag = 'internal scratch']
  %s0 = inlined_call_operand.vmem [shape: f32[2,3,20,116], index: 0, kind: input, shape index: {}]
  %s1 = inlined_call_operand.vmem [shape: f32[81], index: 1, kind: input, shape index: {}]
  %s2 = inlined_call_operand.vmem [shape: f32[3], index: 2, kind: input, shape index: {}]
  %s3 = inlined_call_operand.vmem [shape: f32[81], index: 3, kind: input, shape index: {}]
  %s4 = inlined_call_operand.vmem [shape: f32[3], index: 4, kind: input, shape index: {}]
  %s5 = inlined_call_operand.vmem [shape: f32[2,3,16,112], index: 5, kind: output, shape index: {}]
  %s6 = sld [smem:[#allocation0]]
  $region69: #{residual_block.1} parent=0
    _
  %s8 = ssub.s32 1, %s6
  %s9 = scalar_select 0, %s8, %s6
  $region1: #{residual_block.1} parent=0
    #allocation2 [shape = 'u8[512]{0}', space=smem, size = 0x200, scoped, tag = 'input window, operand 1, single buffered']
    #allocation3 [shape = 's32[2]{0}', space=sflag, size = 0x8, scoped, tag = 'scoped memory for residual_block.1']
    #allocation4 [shape = 'u8[512]{0}', space=smem, size = 0x200, scoped, tag = 'input window, operand 2, single buffered']
    #allocation5 [shape = 's32[1]{0}', space=sflag, size = 0x4, scoped, tag = 'scoped memory for residual_block.1']
    #allocation6 [shape = 'u8[512]{0}', space=smem, size = 0x200, scoped, tag = 'input window, operand 3, single buffered']
    #allocation7 [shape = 'u8[512]{0}', space=smem, size = 0x200, scoped, tag = 'input window, operand 4, single buffered']
    #allocation8 [shape = 's32[1]{0}', space=sflag, size = 0x4, scoped, tag = 'scoped memory for residual_block.1']
    %10 = vsyncpa [#allocation3], 0
    %11 = vsyncpa [#allocation5], 0
    %12 = vsyncpa [#allocation8], 0
    loop: start=0, step=1, limit=4
    $region2: #{residual_block.1} parent=1 // loop_pre_header
      _
    $region3: #{residual_block.1} parent=1 // loop_header
      %s14 = sphi 0, %s18
      %p15 = scmp.ge.s32.totalorder %s14, 4
      %s24 = sphi 0, %s26
      %s27 = sphi 0, %s24
      %s28 = sphi 0, %s27
      %s44 = sphi 0, %s28
      %s48 = sphi 0, %s48
      %s50 = sphi 0, %s48
      %s51 = sphi 0, %s50
      %s65 = sphi 0, %s51
      %s69 = sphi 0, %s69
      %s71 = sphi 0, %s69
      %s72 = sphi 0, %s71
      %s86 = sphi 0, %s72
      %s90 = sphi 0, %s90
      %s92 = sphi 0, %s90
      %s93 = sphi 0, %s92
      %s107 = sphi 0, %s93
      %s111 = sphi 0, %s111
      %s113 = sphi 0, %s111
      %s114 = sphi 0, %s113
      %s128 = sphi 0, %s114
      %s134 = sphi 0, %s136
      %s137 = sphi 0, %s134
      %s138 = sphi 0, %s137
      %s154 = sphi 0, %s138
    $region4: #{residual_block.1} parent=1 // loop_header_branch
      %17 = sbr.rel (%p15) target = $region8
    $region5: #{residual_block.1} parent=1 // loop_body
      %s19 = ssub.s32 %s14, 1
      %s20 = ssub.s32 %s14, 2
      %s21 = sadd.s32 %s14, 1
      %s22 = ssub.s32 %s14, %s21
      %p23 = scmp.eq.s32.totalorder %s22, 0
      %s25 = sadd.s32 %s24, 1
      %s26 = scalar_select %p23, %s24, %s25
      %p29 = pneg %p23
      %p30 = scmp.eq.s32.totalorder %s14, 1
      %p31 = por %p29, %p30
      %p32 = scmp.ne.s32.totalorder %s24, %s27
      %p33 = scmp.eq.s32.totalorder %s14, 0
      %p34 = por %p32, %p33
      %p35 = scmp.ne.s32.totalorder %s24, %s27
      %p36 = scmp.eq.s32.totalorder %s19, 1
      %p37 = por %p35, %p36
      %p38 = scmp.ne.s32.totalorder %s27, %s28
      %p39 = scmp.eq.s32.totalorder %s19, 0
      %p40 = por %p38, %p39
      %p41 = scmp.ne.s32.totalorder %s27, %s28
      %p42 = scmp.eq.s32.totalorder %s20, 1
      %p43 = por %p41, %p42
      %p45 = scmp.ne.s32.totalorder %s28, %s44
      %p46 = scmp.eq.s32.totalorder %s20, 0
      %p47 = por %p45, %p46
      %s49 = sadd.s32 %s48, 1
      %p52 = scmp.eq.s32.totalorder %s14, 1
      %p53 = scmp.ne.s32.totalorder %s48, %s50
      %p54 = scmp.eq.s32.totalorder %s14, 0
      %p55 = por %p53, %p54
      %p56 = scmp.ne.s32.totalorder %s48, %s50
      %p57 = scmp.eq.s32.totalorder %s19, 1
      %p58 = por %p56, %p57
      %p59 = scmp.ne.s32.totalorder %s50, %s51
      %p60 = scmp.eq.s32.totalorder %s19, 0
      %p61 = por %p59, %p60
      %p62 = scmp.ne.s32.totalorder %s50, %s51
      %p63 = scmp.eq.s32.totalorder %s20, 1
      %p64 = por %p62, %p63
      %p66 = scmp.ne.s32.totalorder %s51, %s65
      %p67 = scmp.eq.s32.totalorder %s20, 0
      %p68 = por %p66, %p67
      %s70 = sadd.s32 %s69, 1
      %p73 = scmp.eq.s32.totalorder %s14, 1
      %p74 = scmp.ne.s32.totalorder %s69, %s71
      %p75 = scmp.eq.s32.totalorder %s14, 0
      %p76 = por %p74, %p75
      %p77 = scmp.ne.s32.totalorder %s69, %s71
      %p78 = scmp.eq.s32.totalorder %s19, 1
      %p79 = por %p77, %p78
      %p80 = scmp.ne.s32.totalorder %s71, %s72
      %p81 = scmp.eq.s32.totalorder %s19, 0
      %p82 = por %p80, %p81
      %p83 = scmp.ne.s32.totalorder %s71, %s72
      %p84 = scmp.eq.s32.totalorder %s20, 1
      %p85 = por %p83, %p84
      %p87 = scmp.ne.s32.totalorder %s72, %s86
      %p88 = scmp.eq.s32.totalorder %s20, 0
      %p89 = por %p87, %p88
      %s91 = sadd.s32 %s90, 1
      %p94 = scmp.eq.s32.totalorder %s14, 1
      %p95 = scmp.ne.s32.totalorder %s90, %s92
      %p96 = scmp.eq.s32.totalorder %s14, 0
      %p97 = por %p95, %p96
      %p98 = scmp.ne.s32.totalorder %s90, %s92
      %p99 = scmp.eq.s32.totalorder %s19, 1
      %p100 = por %p98, %p99
      %p101 = scmp.ne.s32.totalorder %s92, %s93
      %p102 = scmp.eq.s32.totalorder %s19, 0
      %p103 = por %p101, %p102
      %p104 = scmp.ne.s32.totalorder %s92, %s93
      %p105 = scmp.eq.s32.totalorder %s20, 1
      %p106 = por %p104, %p105
      %p108 = scmp.ne.s32.totalorder %s93, %s107
      %p109 = scmp.eq.s32.totalorder %s20, 0
      %p110 = por %p108, %p109
      %s112 = sadd.s32 %s111, 1
      %p115 = scmp.eq.s32.totalorder %s14, 1
      %p116 = scmp.ne.s32.totalorder %s111, %s113
      %p117 = scmp.eq.s32.totalorder %s14, 0
      %p118 = por %p116, %p117
      %p119 = scmp.ne.s32.totalorder %s111, %s113
      %p120 = scmp.eq.s32.totalorder %s19, 1
      %p121 = por %p119, %p120
      %p122 = scmp.ne.s32.totalorder %s113, %s114
      %p123 = scmp.eq.s32.totalorder %s19, 0
      %p124 = por %p122, %p123
      %p125 = scmp.ne.s32.totalorder %s113, %s114
      %p126 = scmp.eq.s32.totalorder %s20, 1
      %p127 = por %p125, %p126
      %p129 = scmp.ne.s32.totalorder %s114, %s128
      %p130 = scmp.eq.s32.totalorder %s20, 0
      %p131 = por %p129, %p130
      %s132 = ssub.s32 %s14, %s21
      %p133 = scmp.eq.s32.totalorder %s132, 0
      %s135 = sadd.s32 %s134, 1
      %s136 = scalar_select %p133, %s134, %s135
      %p139 = pneg %p133
      %p140 = scmp.eq.s32.totalorder %s14, 1
      %p141 = por %p139, %p140
      %p142 = scmp.ne.s32.totalorder %s134, %s137
      %p143 = scmp.eq.s32.totalorder %s14, 0
      %p144 = por %p142, %p143
      %p145 = scmp.ne.s32.totalorder %s134, %s137
      %p146 = scmp.eq.s32.totalorder %s19, 1
      %p147 = por %p145, %p146
      %p148 = scmp.ne.s32.totalorder %s137, %s138
      %p149 = scmp.eq.s32.totalorder %s19, 0
      %p150 = por %p148, %p149
      %p151 = scmp.ne.s32.totalorder %s137, %s138
      %p152 = scmp.eq.s32.totalorder %s20, 1
      %p153 = por %p151, %p152
      %p155 = scmp.ne.s32.totalorder %s138, %s154
      %p156 = scmp.eq.s32.totalorder %s20, 0
      %p157 = por %p155, %p156
      %p158 = scmp.le.s32.totalorder 1, %s14
      %p159 = scmp.lt.s32.totalorder %s14, 3
      %p160 = pnand %p158, %p159
      %p161 = pneg %p160
      // Predicated region
      $region9: #{residual_block.1} parent=5 // pred_check
        _
      $region10: #{residual_block.1} parent=5 // pred_check_branch
        %163 = sbr.rel (%p160) target = $region12
      $region11: #{residual_block.1} parent=5 // pred_region
        %s164 = ssub.s32 %s14, 1
        // Predicated region
        $region13: #{residual_block.1} parent=11 // pred_check
          %p165 = pneg %p61
        $region14: #{residual_block.1} parent=11 // pred_check_branch
          %167 = sbr.rel (%p165) target = $region16
        $region15: #{residual_block.1} parent=11 // pred_region
          %s169 = ssub.s32 16, 16
          %170 = vsyncadd [#allocation3], %s169
          %s172 = sshll.u32 %s1, 4
          %s173 = int_to_ptr.vmem [resolvable:$true] %s172
          %175 = dma.vmem_to_smem %s173, 16, [#allocation2], [#allocation3]
        $region16: #{residual_block.1} parent=11 // pred_fallthru
          _
        // Predicated region
        $region17: #{residual_block.1} parent=11 // pred_check
          %p176 = pneg %p82
        $region18: #{residual_block.1} parent=11 // pred_check_branch
          %178 = sbr.rel (%p176) target = $region20
        $region19: #{residual_block.1} parent=11 // pred_region
          %s180 = ssub.s32 16, 16
          %181 = vsyncadd [#allocation5], %s180
          %s183 = sshll.u32 %s2, 4
          %s184 = int_to_ptr.vmem [resolvable:$true] %s183
          %186 = dma.vmem_to_smem %s184, 16, [#allocation4], [#allocation5]
        $region20: #{residual_block.1} parent=11 // pred_fallthru
          _
        // Predicated region
        $region21: #{residual_block.1} parent=11 // pred_check
          %p187 = pneg %p103
        $region22: #{residual_block.1} parent=11 // pred_check_branch
          %189 = sbr.rel (%p187) target = $region24
        $region23: #{residual_block.1} parent=11 // pred_region
          %s191 = ssub.s32 16, 16
          %192 = vsyncadd [#allocation5], %s191
          %s194 = sshll.u32 %s3, 4
          %s195 = int_to_ptr.vmem [resolvable:$true] %s194
          %197 = dma.vmem_to_smem %s195, 16, [#allocation6], [#allocation5]
        $region24: #{residual_block.1} parent=11 // pred_fallthru
          _
        // Predicated region
        $region25: #{residual_block.1} parent=11 // pred_check
          %p198 = pneg %p124
        $region26: #{residual_block.1} parent=11 // pred_check_branch
          %200 = sbr.rel (%p198) target = $region28
        $region27: #{residual_block.1} parent=11 // pred_region
          %s202 = ssub.s32 16, 16
          %203 = vsyncadd [#allocation8], %s202
          %s205 = sshll.u32 %s4, 4
          %s206 = int_to_ptr.vmem [resolvable:$true] %s205
          %208 = dma.vmem_to_smem %s206, 16, [#allocation7], [#allocation8]
        $region28: #{residual_block.1} parent=11 // pred_fallthru
          _
      $region12: #{residual_block.1} parent=5 // pred_fallthru
        _
      %p209 = scmp.lt.s32.totalorder %s14, 2
      // Predicated region
      $region29: #{residual_block.1} parent=5 // pred_check
        %p210 = pneg %p209
      $region30: #{residual_block.1} parent=5 // pred_check_branch
        %212 = sbr.rel (%p210) target = $region32
      $region31: #{residual_block.1} parent=5 // pred_region
        // Predicated region
        $region33: #{residual_block.1} parent=31 // pred_check
          %p213 = pneg %p34
        $region34: #{residual_block.1} parent=31 // pred_check_branch
          %215 = sbr.rel (%p213) target = $region36
        $region35: #{residual_block.1} parent=31 // pred_region
          %p216 = scmp.lt.s32.totalorder %s14, 1
          %s217 = scalar_select %p216, %s14, 1
          %s218 = smul.addr %s217, 9
          %s219 = smul.addr %s218, 8
          %s220 = scalar_lea.vmem %s0, %s219
        $region36: #{residual_block.1} parent=31 // pred_fallthru
          _
      $region32: #{residual_block.1} parent=5 // pred_fallthru
        _
      %p221 = scmp.le.s32.totalorder 1, %s14
      %p222 = scmp.lt.s32.totalorder %s14, 3
      %p223 = pnand %p221, %p222
      %p224 = pneg %p223
      // Predicated region
      $region37: #{residual_block.1} parent=5 // pred_check
        _
      $region38: #{residual_block.1} parent=5 // pred_check_branch
        %226 = sbr.rel (%p223) target = $region40
      $region39: #{residual_block.1} parent=5 // pred_region
        %s227 = ssub.s32 %s14, 1
        // Predicated region
        $region41: #{residual_block.1} parent=39 // pred_check
          %p228 = pneg %p61
        $region42: #{residual_block.1} parent=39 // pred_check_branch
          %230 = sbr.rel (%p228) target = $region44
        $region43: #{residual_block.1} parent=39 // pred_region
          %231 = dma.done [#allocation3], 16
        $region44: #{residual_block.1} parent=39 // pred_fallthru
          _
        // Predicated region
        $region45: #{residual_block.1} parent=39 // pred_check
          %p232 = pneg %p82
        $region46: #{residual_block.1} parent=39 // pred_check_branch
          %234 = sbr.rel (%p232) target = $region48
        $region47: #{residual_block.1} parent=39 // pred_region
          %235 = dma.done [#allocation5], 16
        $region48: #{residual_block.1} parent=39 // pred_fallthru
          _
        // Predicated region
        $region49: #{residual_block.1} parent=39 // pred_check
          %p236 = pneg %p103
        $region50: #{residual_block.1} parent=39 // pred_check_branch
          %238 = sbr.rel (%p236) target = $region52
        $region51: #{residual_block.1} parent=39 // pred_region
          %239 = dma.done [#allocation5], 16
        $region52: #{residual_block.1} parent=39 // pred_fallthru
          _
        // Predicated region
        $region53: #{residual_block.1} parent=39 // pred_check
          %p240 = pneg %p124
        $region54: #{residual_block.1} parent=39 // pred_check_branch
          %242 = sbr.rel (%p240) target = $region56
        $region55: #{residual_block.1} parent=39 // pred_region
          %243 = dma.done [#allocation8], 16
        $region56: #{residual_block.1} parent=39 // pred_fallthru
          _
        %244 = sfence
        %p245 = scmp.lt.s32.totalorder %s19, 1
        %s246 = scalar_select %p245, %s19, 1
        %s247 = smul.addr %s246, 9
        %s248 = smul.addr %s247, 8
        %s249 = scalar_lea.vmem %s0, %s248
        %p250 = pneg %p40
        %p251 = pneg %p37
        %p252 = pneg %p61
        %p253 = pneg %p58
        %p254 = pneg %p82
        %p255 = pneg %p79
        %p256 = pneg %p103
        %p257 = pneg %p100
        %p258 = pneg %p124
        %p259 = pneg %p121
        %p260 = pneg %p150
        %p261 = pneg %p147
        %p262 = scmp.lt.s32.totalorder %s19, 1
        %s263 = scalar_select %p262, %s19, 1
        %s264 = smul.addr %s263, 6
        %s265 = smul.addr %s264, 8
        %s266 = scalar_lea.vmem %s5, %s265
        %p267 = scmp.lt.s32.totalorder %s19, 1
        %s268 = scalar_select %p267, %s19, 1
        %s269 = smul.addr %s268, 9
        %s270 = smul.addr %s269, 8
        %s271 = scalar_lea.vmem %s0, %s270
        %p272 = scmp.lt.s32.totalorder %s19, 1
        %s273 = scalar_select %p272, %s19, 1
        %s274 = smul.addr %s273, 6
        %s275 = smul.addr %s274, 8
        %s276 = scalar_lea.vmem %s5, %s275
        %v277 = vlaneseq
        %v278 = vand.u32 %v277, 127
        %v279 = vsub.s32 %v278, 1
        %vm280 = vcmp.lt.s32.totalorder %v279, 0
        %v281 = vsub.s32 0, %v279
        %v282 = vsel %vm280, %v281, %v279
        %v283 = vshrl.u32 %v282, 4
        %v284 = vand.u32 %v282, 15
        %v285 = vsub.s32 0, %v284
        %v286 = vsel %vm280, %v285, %v284
        %vm287 = vcmp.ne.s32.totalorder %v286, 0
        %vm288 = vcmp.lt.s32.totalorder %v286, 0
        %vm289 = vmand %vm288, %vm287
        %v290 = vadd.s32 %v286, 16
        %v291 = vsel %vm289, %v290, %v286
        %vm292 = vcmp.ge.s32.totalorder %v291, 1
        %vm293 = vcmp.le.s32.totalorder %v291, 14
        %v294 = vlaneseq
        %v295 = vshrl.u32 %v294, 7
        %v296 = vadd.s32 %v295, 8
        %v297 = vadd.s32 %v295, 16
        %vm298 = vcmp.ge.s32.totalorder %v295, 1
        %vm299 = vcmp.ge.s32.totalorder %v296, 1
        %vm300 = vcmp.ge.s32.totalorder %v297, 1
        %vm301 = vcmp.le.s32.totalorder %v295, 16
        %vm302 = vcmp.le.s32.totalorder %v296, 16
        %vm303 = vcmp.le.s32.totalorder %v297, 16
        %vm304 = vmand %vm298, %vm301
        %vm305 = vmand %vm299, %vm302
        %vm306 = vmand %vm300, %vm303
        %vm307 = vcmp.ge.s32.totalorder %v278, 1
        %vm308 = vmand %vm304, %vm307
        %vm309 = vmand %vm305, %vm307
        %vm310 = vmand %vm306, %vm307
        %vm311 = vcmp.le.s32.totalorder %v278, 112
        %vm312 = vmand %vm308, %vm311
        %vm313 = vmand %vm309, %vm311
        %vm314 = vmand %vm310, %vm311
        %vm315 = vcmp.lt.s32.totalorder %v278, 0
        %v316 = vsub.s32 0, %v278
        %v317 = vsel %vm315, %v316, %v278
        %v318 = vshrl.u32 %v317, 4
        %v319 = vand.u32 %v317, 15
        %v320 = vsub.s32 0, %v319
        %v321 = vsel %vm315, %v320, %v319
        %vm322 = vcmp.ne.s32.totalorder %v321, 0
        %vm323 = vcmp.lt.s32.totalorder %v321, 0
        %vm324 = vmand %vm323, %vm322
        %v325 = vadd.s32 %v321, 16
        %v326 = vsel %vm324, %v325, %v321
        %vm327 = vcmp.ge.s32.totalorder %v326, 1
        %vm328 = vcmp.le.s32.totalorder %v326, 14
        %s329 = sld [smem:[#allocation4]]
        %v330 = vstv %s329
        %s331 = sld [smem:[#allocation4 + $0x1]]
        %v332 = vstv %s331
        %s333 = sld [smem:[#allocation4 + $0x2]]
        %v334 = vstv %s333
        %v335 = vld [vmem:[%s271] sm:$0xff]
        %v336 = vld [vmem:[%s271 + $0x8] sm:$0xff]
        %v337 = vld [vmem:[%s271 + $0x10] sm:$0xf]
        %v338 = vsel %vm292, %v335, 0.0
        %v339 = vsel %vm292, %v336, 0.0
        %v340 = vsel %vm292, %v337, 0.0
        %s341 = sld [smem:[#allocation2]]
        %v342 = vstv %s341
        %v343 = vmul.f32 %v342, %v338
        %v344 = vmul.f32 %v342, %v339
        %v345 = vmul.f32 %v342, %v340
        %v346 = vadd.f32 %v330, %v343
        %v347 = vadd.f32 %v330, %v344
        %v348 = vadd.f32 %v330, %v345
        %s349 = sld [smem:[#allocation2 + $0x1b]]
        %v350 = vstv %s349
        %v351 = vmul.f32 %v350, %v338
        %v352 = vmul.f32 %v350, %v339
        %v353 = vmul.f32 %v350, %v340
        %v354 = vadd.f32 %v332, %v351
        %v355 = vadd.f32 %v332, %v352
        %v356 = vadd.f32 %v332, %v353
        %s357 = sld [smem:[#allocation2 + $0x36]]
        %v358 = vstv %s357
        %v359 = vmul.f32 %v358, %v338
        %v360 = vmul.f32 %v358, %v339
        %v361 = vmul.f32 %v358, %v340
        %v362 = vadd.f32 %v334, %v359
        %v363 = vadd.f32 %v334, %v360
        %v364 = vadd.f32 %v334, %v361
        %s365 = sld [smem:[#allocation2 + $0x3]]
        %v366 = vstv %s365
        %v367 = vmul.f32 %v366, %v338
        %v368 = vmul.f32 %v366, %v339
        %v369 = vmul.f32 %v366, %v340
        %vm373 = vcmask 1046528
        %v374 = vrot.slane %v367, 1
        %v375 = vrot.slane %v368, 1
        %v376 = vsel %vm373, %v374, %v375
        %v377 = vrot.slane %v369, 1
        %v378 = vsel %vm373, %v375, %v377
        %v382 = vadd.f32 %v346, %v376
        %v383 = vadd.f32 %v347, %v378
        %v384 = vadd.f32 %v348, %v377
        %s385 = sld [smem:[#allocation2 + $0x1e]]
        %v386 = vstv %s385
        %v387 = vmul.f32 %v386, %v338
        %v388 = vmul.f32 %v386, %v339
        %v389 = vmul.f32 %v386, %v340
        %v393 = vrot.slane %v387, 1
        %v394 = vrot.slane %v388, 1
        %v395 = vsel %vm373, %v393, %v394
        %v396 = vrot.slane %v389, 1
        %v397 = vsel %vm373, %v394, %v396
        %v401 = vadd.f32 %v354, %v395
        %v402 = vadd.f32 %v355, %v397
        %v403 = vadd.f32 %v356, %v396
        %s404 = sld [smem:[#allocation2 + $0x39]]
        %v405 = vstv %s404
        %v406 = vmul.f32 %v405, %v338
        %v407 = vmul.f32 %v405, %v339
        %v408 = vmul.f32 %v405, %v340
        %v412 = vrot.slane %v406, 1
        %v413 = vrot.slane %v407, 1
        %v414 = vsel %vm373, %v412, %v413
        %v415 = vrot.slane %v408, 1
        %v416 = vsel %vm373, %v413, %v415
        %v420 = vadd.f32 %v362, %v414
        %v421 = vadd.f32 %v363, %v416
        %v422 = vadd.f32 %v364, %v415
        %s423 = sld [smem:[#allocation2 + $0x6]]
        %v424 = vstv %s423
        %v425 = vmul.f32 %v424, %v338
        %v426 = vmul.f32 %v424, %v339
        %v427 = vmul.f32 %v424, %v340
        %vm431 = vcmask 1045504
        %v432 = vrot.slane %v425, 2
        %v433 = vrot.slane %v426, 2
        %v434 = vsel %vm431, %v432, %v433
        %v435 = vrot.slane %v427, 2
        %v436 = vsel %vm431, %v433, %v435
        %v440 = vadd.f32 %v382, %v434
        %v441 = vadd.f32 %v383, %v436
        %v442 = vadd.f32 %v384, %v435
        %s443 = sld [smem:[#allocation2 + $0x21]]
        %v444 = vstv %s443
        %v445 = vmul.f32 %v444, %v338
        %v446 = vmul.f32 %v444, %v339
        %v447 = vmul.f32 %v444, %v340
        %v451 = vrot.slane %v445, 2
        %v452 = vrot.slane %v446, 2
        %v453 = vsel %vm431, %v451, %v452
        %v454 = vrot.slane %v447, 2
        %v455 = vsel %vm431, %v452, %v454
        %v459 = vadd.f32 %v401, %v453
        %v460 = vadd.f32 %v402, %v455
        %v461 = vadd.f32 %v403, %v454
        %s462 = sld [smem:[#allocation2 + $0x3c]]
        %v463 = vstv %s462
        %v464 = vmul.f32 %v463, %v338
        %v465 = vmul.f32 %v463, %v339
        %v466 = vmul.f32 %v463, %v340
        %v470 = vrot.slane %v464, 2
        %v471 = vrot.slane %v465, 2
        %v472 = vsel %vm431, %v470, %v471
        %v473 = vrot.slane %v466, 2
        %v474 = vsel %vm431, %v471, %v473
        %v478 = vadd.f32 %v420, %v472
        %v479 = vadd.f32 %v421, %v474
        %v480 = vadd.f32 %v422, %v473
        %s481 = sld [smem:[#allocation2 + $0x1]]
        %v482 = vstv %s481
        %v483 = vmul.f32 %v482, %v335
        %v484 = vmul.f32 %v482, %v336
        %v485 = vmul.f32 %v482, %v337
        %489 = vrot.lane.b32.xlu0 %v483, 127
        %v490 = vpop.permute.xlu0 %489
        %491 = vrot.lane.b32.xlu0 %v484, 127
        %v492 = vpop.permute.xlu0 %491
        %493 = vrot.lane.b32.xlu0 %v485, 127
        %v494 = vpop.permute.xlu0 %493
        %v498 = vadd.f32 %v440, %v490
        %v499 = vadd.f32 %v441, %v492
        %v500 = vadd.f32 %v442, %v494
        %s501 = sld [smem:[#allocation2 + $0x1c]]
        %v502 = vstv %s501
        %v503 = vmul.f32 %v502, %v335
        %v504 = vmul.f32 %v502, %v336
        %v505 = vmul.f32 %v502, %v337
        %509 = vrot.lane.b32.xlu0 %v503, 127
        %v510 = vpop.permute.xlu0 %509
        %511 = vrot.lane.b32.xlu0 %v504, 127
        %v512 = vpop.permute.xlu0 %511
        %513 = vrot.lane.b32.xlu0 %v505, 127
        %v514 = vpop.permute.xlu0 %513
        %v518 = vadd.f32 %v459, %v510
        %v519 = vadd.f32 %v460, %v512
        %v520 = vadd.f32 %v461, %v514
        %s521 = sld [smem:[#allocation2 + $0x37]]
        %v522 = vstv %s521
        %v523 = vmul.f32 %v522, %v335
        %v524 = vmul.f32 %v522, %v336
        %v525 = vmul.f32 %v522, %v337
        %529 = vrot.lane.b32.xlu0 %v523, 127
        %v530 = vpop.permute.xlu0 %529
        %531 = vrot.lane.b32.xlu0 %v524, 127
        %v532 = vpop.permute.xlu0 %531
        %533 = vrot.lane.b32.xlu0 %v525, 127
        %v534 = vpop.permute.xlu0 %533
        %v538 = vadd.f32 %v478, %v530
        %v539 = vadd.f32 %v479, %v532
        %v540 = vadd.f32 %v480, %v534
        %s541 = sld [smem:[#allocation2 + $0x4]]
        %v542 = vstv %s541
        %v543 = vmul.f32 %v542, %v335
        %v544 = vmul.f32 %v542, %v336
        %v545 = vmul.f32 %v542, %v337
        %v549 = vrot.slane %v543, 1
        %v550 = vrot.slane %v544, 1
        %v551 = vsel %vm373, %v549, %v550
        %v552 = vrot.slane %v545, 1
        %v553 = vsel %vm373, %v550, %v552
        %554 = vrot.lane.b32.xlu0 %v551, 127
        %v555 = vpop.permute.xlu0 %554
        %556 = vrot.lane.b32.xlu0 %v553, 127
        %v557 = vpop.permute.xlu0 %556
        %558 = vrot.lane.b32.xlu0 %v552, 127
        %v559 = vpop.permute.xlu0 %558
        %v563 = vadd.f32 %v498, %v555
        %v564 = vadd.f32 %v499, %v557
        %v565 = vadd.f32 %v500, %v559
        %s566 = sld [smem:[#allocation2 + $0x1f]]
        %v567 = vstv %s566
        %v568 = vmul.f32 %v567, %v335
        %v569 = vmul.f32 %v567, %v336
        %v570 = vmul.f32 %v567, %v337
        %v574 = vrot.slane %v568, 1
        %v575 = vrot.slane %v569, 1
        %v576 = vsel %vm373, %v574, %v575
        %v577 = vrot.slane %v570, 1
        %v578 = vsel %vm373, %v575, %v577
        %579 = vrot.lane.b32.xlu0 %v576, 127
        %v580 = vpop.permute.xlu0 %579
        %581 = vrot.lane.b32.xlu0 %v578, 127
        %v582 = vpop.permute.xlu0 %581
        %583 = vrot.lane.b32.xlu0 %v577, 127
        %v584 = vpop.permute.xlu0 %583
        %v588 = vadd.f32 %v518, %v580
        %v589 = vadd.f32 %v519, %v582
        %v590 = vadd.f32 %v520, %v584
        %s591 = sld [smem:[#allocation2 + $0x3a]]
        %v592 = vstv %s591
        %v593 = vmul.f32 %v592, %v335
        %v594 = vmul.f32 %v592, %v336
        %v595 = vmul.f32 %v592, %v337
        %v599 = vrot.slane %v593, 1
        %v600 = vrot.slane %v594, 1
        %v601 = vsel %vm373, %v599, %v600
        %v602 = vrot.slane %v595, 1
        %v603 = vsel %vm373, %v600, %v602
        %604 = vrot.lane.b32.xlu0 %v601, 127
        %v605 = vpop.permute.xlu0 %604
        %606 = vrot.lane.b32.xlu0 %v603, 127
        %v607 = vpop.permute.xlu0 %606
        %608 = vrot.lane.b32.xlu0 %v602, 127
        %v609 = vpop.permute.xlu0 %608
        %v613 = vadd.f32 %v538, %v605
        %v614 = vadd.f32 %v539, %v607
        %v615 = vadd.f32 %v540, %v609
        %s616 = sld [smem:[#allocation2 + $0x7]]
        %v617 = vstv %s616
        %v618 = vmul.f32 %v617, %v335
        %v619 = vmul.f32 %v617, %v336
        %v620 = vmul.f32 %v617, %v337
        %v624 = vrot.slane %v618, 2
        %v625 = vrot.slane %v619, 2
        %v626 = vsel %vm431, %v624, %v625
        %v627 = vrot.slane %v620, 2
        %v628 = vsel %vm431, %v625, %v627
        %629 = vrot.lane.b32.xlu0 %v626, 127
        %v630 = vpop.permute.xlu0 %629
        %631 = vrot.lane.b32.xlu0 %v628, 127
        %v632 = vpop.permute.xlu0 %631
        %633 = vrot.lane.b32.xlu0 %v627, 127
        %v634 = vpop.permute.xlu0 %633
        %v638 = vadd.f32 %v563, %v630
        %v639 = vadd.f32 %v564, %v632
        %v640 = vadd.f32 %v565, %v634
        %s641 = sld [smem:[#allocation2 + $0x22]]
        %v642 = vstv %s641
        %v643 = vmul.f32 %v642, %v335
        %v644 = vmul.f32 %v642, %v336
        %v645 = vmul.f32 %v642, %v337
        %v649 = vrot.slane %v643, 2
        %v650 = vrot.slane %v644, 2
        %v651 = vsel %vm431, %v649, %v650
        %v652 = vrot.slane %v645, 2
        %v653 = vsel %vm431, %v650, %v652
        %654 = vrot.lane.b32.xlu0 %v651, 127
        %v655 = vpop.permute.xlu0 %654
        %656 = vrot.lane.b32.xlu0 %v653, 127
        %v657 = vpop.permute.xlu0 %656
        %658 = vrot.lane.b32.xlu0 %v652, 127
        %v659 = vpop.permute.xlu0 %658
        %v663 = vadd.f32 %v588, %v655
        %v664 = vadd.f32 %v589, %v657
        %v665 = vadd.f32 %v590, %v659
        %s666 = sld [smem:[#allocation2 + $0x3d]]
        %v667 = vstv %s666
        %v668 = vmul.f32 %v667, %v335
        %v669 = vmul.f32 %v667, %v336
        %v670 = vmul.f32 %v667, %v337
        %v674 = vrot.slane %v668, 2
        %v675 = vrot.slane %v669, 2
        %v676 = vsel %vm431, %v674, %v675
        %v677 = vrot.slane %v670, 2
        %v678 = vsel %vm431, %v675, %v677
        %679 = vrot.lane.b32.xlu0 %v676, 127
        %v680 = vpop.permute.xlu0 %679
        %681 = vrot.lane.b32.xlu0 %v678, 127
        %v682 = vpop.permute.xlu0 %681
        %683 = vrot.lane.b32.xlu0 %v677, 127
        %v684 = vpop.permute.xlu0 %683
        %v688 = vadd.f32 %v613, %v680
        %v689 = vadd.f32 %v614, %v682
        %v690 = vadd.f32 %v615, %v684
        %694 = vrot.lane.b32.xlu0 %v335, 126
        %v695 = vpop.permute.xlu0 %694
        %696 = vrot.lane.b32.xlu0 %v336, 126
        %v697 = vpop.permute.xlu0 %696
        %698 = vrot.lane.b32.xlu0 %v337, 126
        %v699 = vpop.permute.xlu0 %698
        %v703 = vsel %vm293, %v695, 0.0
        %v704 = vsel %vm293, %v697, 0.0
        %v705 = vsel %vm293, %v699, 0.0
        %s706 = sld [smem:[#allocation2 + $0x2]]
        %v707 = vstv %s706
        %v708 = vmul.f32 %v707, %v703
        %v709 = vmul.f32 %v707, %v704
        %v710 = vmul.f32 %v707, %v705
        %v711 = vadd.f32 %v638, %v708
        %v712 = vadd.f32 %v639, %v709
        %v713 = vadd.f32 %v640, %v710
        %s714 = sld [smem:[#allocation2 + $0x1d]]
        %v715 = vstv %s714
        %v716 = vmul.f32 %v715, %v703
        %v717 = vmul.f32 %v715, %v704
        %v718 = vmul.f32 %v715, %v705
        %v719 = vadd.f32 %v663, %v716
        %v720 = vadd.f32 %v664, %v717
        %v721 = vadd.f32 %v665, %v718
        %s722 = sld [smem:[#allocation2 + $0x38]]
        %v723 = vstv %s722
        %v724 = vmul.f32 %v723, %v703
        %v725 = vmul.f32 %v723, %v704
        %v726 = vmul.f32 %v723, %v705
        %v727 = vadd.f32 %v688, %v724
        %v728 = vadd.f32 %v689, %v725
        %v729 = vadd.f32 %v690, %v726
        %s730 = sld [smem:[#allocation2 + $0x5]]
        %v731 = vstv %s730
        %v732 = vmul.f32 %v731, %v703
        %v733 = vmul.f32 %v731, %v704
        %v734 = vmul.f32 %v731, %v705
        %v738 = vrot.slane %v732, 1
        %v739 = vrot.slane %v733, 1
        %v740 = vsel %vm373, %v738, %v739
        %v741 = vrot.slane %v734, 1
        %v742 = vsel %vm373, %v739, %v741
        %v746 = vadd.f32 %v711, %v740
        %v747 = vadd.f32 %v712, %v742
        %v748 = vadd.f32 %v713, %v741
        %s749 = sld [smem:[#allocation2 + $0x20]]
        %v750 = vstv %s749
        %v751 = vmul.f32 %v750, %v703
        %v752 = vmul.f32 %v750, %v704
        %v753 = vmul.f32 %v750, %v705
        %v757 = vrot.slane %v751, 1
        %v758 = vrot.slane %v752, 1
        %v759 = vsel %vm373, %v757, %v758
        %v760 = vrot.slane %v753, 1
        %v761 = vsel %vm373, %v758, %v760
        %v765 = vadd.f32 %v719, %v759
        %v766 = vadd.f32 %v720, %v761
        %v767 = vadd.f32 %v721, %v760
        %s768 = sld [smem:[#allocation2 + $0x3b]]
        %v769 = vstv %s768
        %v770 = vmul.f32 %v769, %v703
        %v771 = vmul.f32 %v769, %v704
        %v772 = vmul.f32 %v769, %v705
        %v776 = vrot.slane %v770, 1
        %v777 = vrot.slane %v771, 1
        %v778 = vsel %vm373, %v776, %v777
        %v779 = vrot.slane %v772, 1
        %v780 = vsel %vm373, %v777, %v779
        %v784 = vadd.f32 %v727, %v778
        %v785 = vadd.f32 %v728, %v780
        %v786 = vadd.f32 %v729, %v779
        %s787 = sld [smem:[#allocation2 + $0x8]]
        %v788 = vstv %s787
        %v789 = vmul.f32 %v788, %v703
        %v790 = vmul.f32 %v788, %v704
        %v791 = vmul.f32 %v788, %v705
        %v795 = vrot.slane %v789, 2
        %v796 = vrot.slane %v790, 2
        %v797 = vsel %vm431, %v795, %v796
        %v798 = vrot.slane %v791, 2
        %v799 = vsel %vm431, %v796, %v798
        %v803 = vadd.f32 %v746, %v797
        %v804 = vadd.f32 %v747, %v799
        %v805 = vadd.f32 %v748, %v798
        %s806 = sld [smem:[#allocation2 + $0x23]]
        %v807 = vstv %s806
        %v808 = vmul.f32 %v807, %v703
        %v809 = vmul.f32 %v807, %v704
        %v810 = vmul.f32 %v807, %v705
        %v814 = vrot.slane %v808, 2
        %v815 = vrot.slane %v809, 2
        %v816 = vsel %vm431, %v814, %v815
        %v817 = vrot.slane %v810, 2
        %v818 = vsel %vm431, %v815, %v817
        %v822 = vadd.f32 %v765, %v816
        %v823 = vadd.f32 %v766, %v818
        %v824 = vadd.f32 %v767, %v817
        %s825 = sld [smem:[#allocation2 + $0x3e]]
        %v826 = vstv %s825
        %v827 = vmul.f32 %v826, %v703
        %v828 = vmul.f32 %v826, %v704
        %v829 = vmul.f32 %v826, %v705
        %v833 = vrot.slane %v827, 2
        %v834 = vrot.slane %v828, 2
        %v835 = vsel %vm431, %v833, %v834
        %v836 = vrot.slane %v829, 2
        %v837 = vsel %vm431, %v834, %v836
        %v841 = vadd.f32 %v784, %v835
        %v842 = vadd.f32 %v785, %v837
        %v843 = vadd.f32 %v786, %v836
        %s844 = scalar_lea.vmem %s271, 24
        %v845 = vld [vmem:[%s844] sm:$0xff]
        %v846 = vld [vmem:[%s844 + $0x8] sm:$0xff]
        %v847 = vld [vmem:[%s844 + $0x10] sm:$0xf]
        %v848 = vsel %vm292, %v845, 0.0
        %v849 = vsel %vm292, %v846, 0.0
        %v850 = vsel %vm292, %v847, 0.0
        %s851 = sld [smem:[#allocation2 + $0x9]]
        %v852 = vstv %s851
        %v853 = vmul.f32 %v852, %v848
        %v854 = vmul.f32 %v852, %v849
        %v855 = vmul.f32 %v852, %v850
        %v856 = vadd.f32 %v803, %v853
        %v857 = vadd.f32 %v804, %v854
        %v858 = vadd.f32 %v805, %v855
        %s859 = sld [smem:[#allocation2 + $0x24]]
        %v860 = vstv %s859
        %v861 = vmul.f32 %v860, %v848
        %v862 = vmul.f32 %v860, %v849
        %v863 = vmul.f32 %v860, %v850
        %v864 = vadd.f32 %v822, %v861
        %v865 = vadd.f32 %v823, %v862
        %v866 = vadd.f32 %v824, %v863
        %s867 = sld [smem:[#allocation2 + $0x3f]]
        %v868 = vstv %s867
        %v869 = vmul.f32 %v868, %v848
        %v870 = vmul.f32 %v868, %v849
        %v871 = vmul.f32 %v868, %v850
        %v872 = vadd.f32 %v841, %v869
        %v873 = vadd.f32 %v842, %v870
        %v874 = vadd.f32 %v843, %v871
        %s875 = sld [smem:[#allocation2 + $0xc]]
        %v876 = vstv %s875
        %v877 = vmul.f32 %v876, %v848
        %v878 = vmul.f32 %v876, %v849
        %v879 = vmul.f32 %v876, %v850
        %v883 = vrot.slane %v877, 1
        %v884 = vrot.slane %v878, 1
        %v885 = vsel %vm373, %v883, %v884
        %v886 = vrot.slane %v879, 1
        %v887 = vsel %vm373, %v884, %v886
        %v891 = vadd.f32 %v856, %v885
        %v892 = vadd.f32 %v857, %v887
        %v893 = vadd.f32 %v858, %v886
        %s894 = sld [smem:[#allocation2 + $0x27]]
        %v895 = vstv %s894
        %v896 = vmul.f32 %v895, %v848
        %v897 = vmul.f32 %v895, %v849
        %v898 = vmul.f32 %v895, %v850
        %v902 = vrot.slane %v896, 1
        %v903 = vrot.slane %v897, 1
        %v904 = vsel %vm373, %v902, %v903
        %v905 = vrot.slane %v898, 1
        %v906 = vsel %vm373, %v903, %v905
        %v910 = vadd.f32 %v864, %v904
        %v911 = vadd.f32 %v865, %v906
        %v912 = vadd.f32 %v866, %v905
        %s913 = sld [smem:[#allocation2 + $0x42]]
        %v914 = vstv %s913
        %v915 = vmul.f32 %v914, %v848
        %v916 = vmul.f32 %v914, %v849
        %v917 = vmul.f32 %v914, %v850
        %v921 = vrot.slane %v915, 1
        %v922 = vrot.slane %v916, 1
        %v923 = vsel %vm373, %v921, %v922
        %v924 = vrot.slane %v917, 1
        %v925 = vsel %vm373, %v922, %v924
        %v929 = vadd.f32 %v872, %v923
        %v930 = vadd.f32 %v873, %v925
        %v931 = vadd.f32 %v874, %v924
        %s932 = sld [smem:[#allocation2 + $0xf]]
        %v933 = vstv %s932
        %v934 = vmul.f32 %v933, %v848
        %v935 = vmul.f32 %v933, %v849
        %v936 = vmul.f32 %v933, %v850
        %v940 = vrot.slane %v934, 2
        %v941 = vrot.slane %v935, 2
        %v942 = vsel %vm431, %v940, %v941
        %v943 = vrot.slane %v936, 2
        %v944 = vsel %vm431, %v941, %v943
        %v948 = vadd.f32 %v891, %v942
        %v949 = vadd.f32 %v892, %v944
        %v950 = vadd.f32 %v893, %v943
        %s951 = sld [smem:[#allocation2 + $0x2a]]
        %v952 = vstv %s951
        %v953 = vmul.f32 %v952, %v848
        %v954 = vmul.f32 %v952, %v849
        %v955 = vmul.f32 %v952, %v850
        %v959 = vrot.slane %v953, 2
        %v960 = vrot.slane %v954, 2
        %v961 = vsel %vm431, %v959, %v960
        %v962 = vrot.slane %v955, 2
        %v963 = vsel %vm431, %v960, %v962
        %v967 = vadd.f32 %v910, %v961
        %v968 = vadd.f32 %v911, %v963
        %v969 = vadd.f32 %v912, %v962
        %s970 = sld [smem:[#allocation2 + $0x45]]
        %v971 = vstv %s970
        %v972 = vmul.f32 %v971, %v848
        %v973 = vmul.f32 %v971, %v849
        %v974 = vmul.f32 %v971, %v850
        %v978 = vrot.slane %v972, 2
        %v979 = vrot.slane %v973, 2
        %v980 = vsel %vm431, %v978, %v979
        %v981 = vrot.slane %v974, 2
        %v982 = vsel %vm431, %v979, %v981
        %v986 = vadd.f32 %v929, %v980
        %v987 = vadd.f32 %v930, %v982
        %v988 = vadd.f32 %v931, %v981
        %s989 = sld [smem:[#allocation2 + $0xa]]
        %v990 = vstv %s989
        %v991 = vmul.f32 %v990, %v845
        %v992 = vmul.f32 %v990, %v846
        %v993 = vmul.f32 %v990, %v847
        %997 = vrot.lane.b32.xlu0 %v991, 127
        %v998 = vpop.permute.xlu0 %997
        %999 = vrot.lane.b32.xlu0 %v992, 127
        %v1000 = vpop.permute.xlu0 %999
        %1001 = vrot.lane.b32.xlu0 %v993, 127
        %v1002 = vpop.permute.xlu0 %1001
        %v1006 = vadd.f32 %v948, %v998
        %v1007 = vadd.f32 %v949, %v1000
        %v1008 = vadd.f32 %v950, %v1002
        %s1009 = sld [smem:[#allocation2 + $0x25]]
        %v1010 = vstv %s1009
        %v1011 = vmul.f32 %v1010, %v845
        %v1012 = vmul.f32 %v1010, %v846
        %v1013 = vmul.f32 %v1010, %v847
        %1017 = vrot.lane.b32.xlu0 %v1011, 127
        %v1018 = vpop.permute.xlu0 %1017
        %1019 = vrot.lane.b32.xlu0 %v1012, 127
        %v1020 = vpop.permute.xlu0 %1019
        %1021 = vrot.lane.b32.xlu0 %v1013, 127
        %v1022 = vpop.permute.xlu0 %1021
        %v1026 = vadd.f32 %v967, %v1018
        %v1027 = vadd.f32 %v968, %v1020
        %v1028 = vadd.f32 %v969, %v1022
        %s1029 = sld [smem:[#allocation2 + $0x40]]
        %v1030 = vstv %s1029
        %v1031 = vmul.f32 %v1030, %v845
        %v1032 = vmul.f32 %v1030, %v846
        %v1033 = vmul.f32 %v1030, %v847
        %1037 = vrot.lane.b32.xlu0 %v1031, 127
        %v1038 = vpop.permute.xlu0 %1037
        %1039 = vrot.lane.b32.xlu0 %v1032, 127
        %v1040 = vpop.permute.xlu0 %1039
        %1041 = vrot.lane.b32.xlu0 %v1033, 127
        %v1042 = vpop.permute.xlu0 %1041
        %v1046 = vadd.f32 %v986, %v1038
        %v1047 = vadd.f32 %v987, %v1040
        %v1048 = vadd.f32 %v988, %v1042
        %s1049 = sld [smem:[#allocation2 + $0xd]]
        %v1050 = vstv %s1049
        %v1051 = vmul.f32 %v1050, %v845
        %v1052 = vmul.f32 %v1050, %v846
        %v1053 = vmul.f32 %v1050, %v847
        %v1057 = vrot.slane %v1051, 1
        %v1058 = vrot.slane %v1052, 1
        %v1059 = vsel %vm373, %v1057, %v1058
        %v1060 = vrot.slane %v1053, 1
        %v1061 = vsel %vm373, %v1058, %v1060
        %1062 = vrot.lane.b32.xlu0 %v1059, 127
        %v1063 = vpop.permute.xlu0 %1062
        %1064 = vrot.lane.b32.xlu0 %v1061, 127
        %v1065 = vpop.permute.xlu0 %1064
        %1066 = vrot.lane.b32.xlu0 %v1060, 127
        %v1067 = vpop.permute.xlu0 %1066
        %v1071 = vadd.f32 %v1006, %v1063
        %v1072 = vadd.f32 %v1007, %v1065
        %v1073 = vadd.f32 %v1008, %v1067
        %s1074 = sld [smem:[#allocation2 + $0x28]]
        %v1075 = vstv %s1074
        %v1076 = vmul.f32 %v1075, %v845
        %v1077 = vmul.f32 %v1075, %v846
        %v1078 = vmul.f32 %v1075, %v847
        %v1082 = vrot.slane %v1076, 1
        %v1083 = vrot.slane %v1077, 1
        %v1084 = vsel %vm373, %v1082, %v1083
        %v1085 = vrot.slane %v1078, 1
        %v1086 = vsel %vm373, %v1083, %v1085
        %1087 = vrot.lane.b32.xlu0 %v1084, 127
        %v1088 = vpop.permute.xlu0 %1087
        %1089 = vrot.lane.b32.xlu0 %v1086, 127
        %v1090 = vpop.permute.xlu0 %1089
        %1091 = vrot.lane.b32.xlu0 %v1085, 127
        %v1092 = vpop.permute.xlu0 %1091
        %v1096 = vadd.f32 %v1026, %v1088
        %v1097 = vadd.f32 %v1027, %v1090
        %v1098 = vadd.f32 %v1028, %v1092
        %s1099 = sld [smem:[#allocation2 + $0x43]]
        %v1100 = vstv %s1099
        %v1101 = vmul.f32 %v1100, %v845
        %v1102 = vmul.f32 %v1100, %v846
        %v1103 = vmul.f32 %v1100, %v847
        %v1107 = vrot.slane %v1101, 1
        %v1108 = vrot.slane %v1102, 1
        %v1109 = vsel %vm373, %v1107, %v1108
        %v1110 = vrot.slane %v1103, 1
        %v1111 = vsel %vm373, %v1108, %v1110
        %1112 = vrot.lane.b32.xlu0 %v1109, 127
        %v1113 = vpop.permute.xlu0 %1112
        %1114 = vrot.lane.b32.xlu0 %v1111, 127
        %v1115 = vpop.permute.xlu0 %1114
        %1116 = vrot.lane.b32.xlu0 %v1110, 127
        %v1117 = vpop.permute.xlu0 %1116
        %v1121 = vadd.f32 %v1046, %v1113
        %v1122 = vadd.f32 %v1047, %v1115
        %v1123 = vadd.f32 %v1048, %v1117
        %s1124 = sld [smem:[#allocation2 + $0x10]]
        %v1125 = vstv %s1124
        %v1126 = vmul.f32 %v1125, %v845
        %v1127 = vmul.f32 %v1125, %v846
        %v1128 = vmul.f32 %v1125, %v847
        %v1132 = vrot.slane %v1126, 2
        %v1133 = vrot.slane %v1127, 2
        %v1134 = vsel %vm431, %v1132, %v1133
        %v1135 = vrot.slane %v1128, 2
        %v1136 = vsel %vm431, %v1133, %v1135
        %1137 = vrot.lane.b32.xlu0 %v1134, 127
        %v1138 = vpop.permute.xlu0 %1137
        %1139 = vrot.lane.b32.xlu0 %v1136, 127
        %v1140 = vpop.permute.xlu0 %1139
        %1141 = vrot.lane.b32.xlu0 %v1135, 127
        %v1142 = vpop.permute.xlu0 %1141
        %v1146 = vadd.f32 %v1071, %v1138
        %v1147 = vadd.f32 %v1072, %v1140
        %v1148 = vadd.f32 %v1073, %v1142
        %s1149 = sld [smem:[#allocation2 + $0x2b]]
        %v1150 = vstv %s1149
        %v1151 = vmul.f32 %v1150, %v845
        %v1152 = vmul.f32 %v1150, %v846
        %v1153 = vmul.f32 %v1150, %v847
        %v1157 = vrot.slane %v1151, 2
        %v1158 = vrot.slane %v1152, 2
        %v1159 = vsel %vm431, %v1157, %v1158
        %v1160 = vrot.slane %v1153, 2
        %v1161 = vsel %vm431, %v1158, %v1160
        %1162 = vrot.lane.b32.xlu0 %v1159, 127
        %v1163 = vpop.permute.xlu0 %1162
        %1164 = vrot.lane.b32.xlu0 %v1161, 127
        %v1165 = vpop.permute.xlu0 %1164
        %1166 = vrot.lane.b32.xlu0 %v1160, 127
        %v1167 = vpop.permute.xlu0 %1166
        %v1171 = vadd.f32 %v1096, %v1163
        %v1172 = vadd.f32 %v1097, %v1165
        %v1173 = vadd.f32 %v1098, %v1167
        %s1174 = sld [smem:[#allocation2 + $0x46]]
        %v1175 = vstv %s1174
        %v1176 = vmul.f32 %v1175, %v845
        %v1177 = vmul.f32 %v1175, %v846
        %v1178 = vmul.f32 %v1175, %v847
        %v1182 = vrot.slane %v1176, 2
        %v1183 = vrot.slane %v1177, 2
        %v1184 = vsel %vm431, %v1182, %v1183
        %v1185 = vrot.slane %v1178, 2
        %v1186 = vsel %vm431, %v1183, %v1185
        %1187 = vrot.lane.b32.xlu0 %v1184, 127
        %v1188 = vpop.permute.xlu0 %1187
        %1189 = vrot.lane.b32.xlu0 %v1186, 127
        %v1190 = vpop.permute.xlu0 %1189
        %1191 = vrot.lane.b32.xlu0 %v1185, 127
        %v1192 = vpop.permute.xlu0 %1191
        %v1196 = vadd.f32 %v1121, %v1188
        %v1197 = vadd.f32 %v1122, %v1190
        %v1198 = vadd.f32 %v1123, %v1192
        %1202 = vrot.lane.b32.xlu0 %v845, 126
        %v1203 = vpop.permute.xlu0 %1202
        %1204 = vrot.lane.b32.xlu0 %v846, 126
        %v1205 = vpop.permute.xlu0 %1204
        %1206 = vrot.lane.b32.xlu0 %v847, 126
        %v1207 = vpop.permute.xlu0 %1206
        %v1211 = vsel %vm293, %v1203, 0.0
        %v1212 = vsel %vm293, %v1205, 0.0
        %v1213 = vsel %vm293, %v1207, 0.0
        %s1214 = sld [smem:[#allocation2 + $0xb]]
        %v1215 = vstv %s1214
        %v1216 = vmul.f32 %v1215, %v1211
        %v1217 = vmul.f32 %v1215, %v1212
        %v1218 = vmul.f32 %v1215, %v1213
        %v1219 = vadd.f32 %v1146, %v1216
        %v1220 = vadd.f32 %v1147, %v1217
        %v1221 = vadd.f32 %v1148, %v1218
        %s1222 = sld [smem:[#allocation2 + $0x26]]
        %v1223 = vstv %s1222
        %v1224 = vmul.f32 %v1223, %v1211
        %v1225 = vmul.f32 %v1223, %v1212
        %v1226 = vmul.f32 %v1223, %v1213
        %v1227 = vadd.f32 %v1171, %v1224
        %v1228 = vadd.f32 %v1172, %v1225
        %v1229 = vadd.f32 %v1173, %v1226
        %s1230 = sld [smem:[#allocation2 + $0x41]]
        %v1231 = vstv %s1230
        %v1232 = vmul.f32 %v1231, %v1211
        %v1233 = vmul.f32 %v1231, %v1212
        %v1234 = vmul.f32 %v1231, %v1213
        %v1235 = vadd.f32 %v1196, %v1232
        %v1236 = vadd.f32 %v1197, %v1233
        %v1237 = vadd.f32 %v1198, %v1234
        %s1238 = sld [smem:[#allocation2 + $0xe]]
        %v1239 = vstv %s1238
        %v1240 = vmul.f32 %v1239, %v1211
        %v1241 = vmul.f32 %v1239, %v1212
        %v1242 = vmul.f32 %v1239, %v1213
        %v1246 = vrot.slane %v1240, 1
        %v1247 = vrot.slane %v1241, 1
        %v1248 = vsel %vm373, %v1246, %v1247
        %v1249 = vrot.slane %v1242, 1
        %v1250 = vsel %vm373, %v1247, %v1249
        %v1254 = vadd.f32 %v1219, %v1248
        %v1255 = vadd.f32 %v1220, %v1250
        %v1256 = vadd.f32 %v1221, %v1249
        %s1257 = sld [smem:[#allocation2 + $0x29]]
        %v1258 = vstv %s1257
        %v1259 = vmul.f32 %v1258, %v1211
        %v1260 = vmul.f32 %v1258, %v1212
        %v1261 = vmul.f32 %v1258, %v1213
        %v1265 = vrot.slane %v1259, 1
        %v1266 = vrot.slane %v1260, 1
        %v1267 = vsel %vm373, %v1265, %v1266
        %v1268 = vrot.slane %v1261, 1
        %v1269 = vsel %vm373, %v1266, %v1268
        %v1273 = vadd.f32 %v1227, %v1267
        %v1274 = vadd.f32 %v1228, %v1269
        %v1275 = vadd.f32 %v1229, %v1268
        %s1276 = sld [smem:[#allocation2 + $0x44]]
        %v1277 = vstv %s1276
        %v1278 = vmul.f32 %v1277, %v1211
        %v1279 = vmul.f32 %v1277, %v1212
        %v1280 = vmul.f32 %v1277, %v1213
        %v1284 = vrot.slane %v1278, 1
        %v1285 = vrot.slane %v1279, 1
        %v1286 = vsel %vm373, %v1284, %v1285
        %v1287 = vrot.slane %v1280, 1
        %v1288 = vsel %vm373, %v1285, %v1287
        %v1292 = vadd.f32 %v1235, %v1286
        %v1293 = vadd.f32 %v1236, %v1288
        %v1294 = vadd.f32 %v1237, %v1287
        %s1295 = sld [smem:[#allocation2 + $0x11]]
        %v1296 = vstv %s1295
        %v1297 = vmul.f32 %v1296, %v1211
        %v1298 = vmul.f32 %v1296, %v1212
        %v1299 = vmul.f32 %v1296, %v1213
        %v1303 = vrot.slane %v1297, 2
        %v1304 = vrot.slane %v1298, 2
        %v1305 = vsel %vm431, %v1303, %v1304
        %v1306 = vrot.slane %v1299, 2
        %v1307 = vsel %vm431, %v1304, %v1306
        %v1311 = vadd.f32 %v1254, %v1305
        %v1312 = vadd.f32 %v1255, %v1307
        %v1313 = vadd.f32 %v1256, %v1306
        %s1314 = sld [smem:[#allocation2 + $0x2c]]
        %v1315 = vstv %s1314
        %v1316 = vmul.f32 %v1315, %v1211
        %v1317 = vmul.f32 %v1315, %v1212
        %v1318 = vmul.f32 %v1315, %v1213
        %v1322 = vrot.slane %v1316, 2
        %v1323 = vrot.slane %v1317, 2
        %v1324 = vsel %vm431, %v1322, %v1323
        %v1325 = vrot.slane %v1318, 2
        %v1326 = vsel %vm431, %v1323, %v1325
        %v1330 = vadd.f32 %v1273, %v1324
        %v1331 = vadd.f32 %v1274, %v1326
        %v1332 = vadd.f32 %v1275, %v1325
        %s1333 = sld [smem:[#allocation2 + $0x47]]
        %v1334 = vstv %s1333
        %v1335 = vmul.f32 %v1334, %v1211
        %v1336 = vmul.f32 %v1334, %v1212
        %v1337 = vmul.f32 %v1334, %v1213
        %v1341 = vrot.slane %v1335, 2
        %v1342 = vrot.slane %v1336, 2
        %v1343 = vsel %vm431, %v1341, %v1342
        %v1344 = vrot.slane %v1337, 2
        %v1345 = vsel %vm431, %v1342, %v1344
        %v1349 = vadd.f32 %v1292, %v1343
        %v1350 = vadd.f32 %v1293, %v1345
        %v1351 = vadd.f32 %v1294, %v1344
        %s1352 = scalar_lea.vmem %s271, 48
        %v1353 = vld [vmem:[%s1352] sm:$0xff]
        %v1354 = vld [vmem:[%s1352 + $0x8] sm:$0xff]
        %v1355 = vld [vmem:[%s1352 + $0x10] sm:$0xf]
        %v1356 = vsel %vm292, %v1353, 0.0
        %v1357 = vsel %vm292, %v1354, 0.0
        %v1358 = vsel %vm292, %v1355, 0.0
        %s1359 = sld [smem:[#allocation2 + $0x12]]
        %v1360 = vstv %s1359
        %v1361 = vmul.f32 %v1360, %v1356
        %v1362 = vmul.f32 %v1360, %v1357
        %v1363 = vmul.f32 %v1360, %v1358
        %v1364 = vadd.f32 %v1311, %v1361
        %v1365 = vadd.f32 %v1312, %v1362
        %v1366 = vadd.f32 %v1313, %v1363
        %s1367 = sld [smem:[#allocation2 + $0x2d]]
        %v1368 = vstv %s1367
        %v1369 = vmul.f32 %v1368, %v1356
        %v1370 = vmul.f32 %v1368, %v1357
        %v1371 = vmul.f32 %v1368, %v1358
        %v1372 = vadd.f32 %v1330, %v1369
        %v1373 = vadd.f32 %v1331, %v1370
        %v1374 = vadd.f32 %v1332, %v1371
        %s1375 = sld [smem:[#allocation2 + $0x48]]
        %v1376 = vstv %s1375
        %v1377 = vmul.f32 %v1376, %v1356
        %v1378 = vmul.f32 %v1376, %v1357
        %v1379 = vmul.f32 %v1376, %v1358
        %v1380 = vadd.f32 %v1349, %v1377
        %v1381 = vadd.f32 %v1350, %v1378
        %v1382 = vadd.f32 %v1351, %v1379
        %s1383 = sld [smem:[#allocation2 + $0x15]]
        %v1384 = vstv %s1383
        %v1385 = vmul.f32 %v1384, %v1356
        %v1386 = vmul.f32 %v1384, %v1357
        %v1387 = vmul.f32 %v1384, %v1358
        %v1391 = vrot.slane %v1385, 1
        %v1392 = vrot.slane %v1386, 1
        %v1393 = vsel %vm373, %v1391, %v1392
        %v1394 = vrot.slane %v1387, 1
        %v1395 = vsel %vm373, %v1392, %v1394
        %v1399 = vadd.f32 %v1364, %v1393
        %v1400 = vadd.f32 %v1365, %v1395
        %v1401 = vadd.f32 %v1366, %v1394
        %s1402 = sld [smem:[#allocation2 + $0x30]]
        %v1403 = vstv %s1402
        %v1404 = vmul.f32 %v1403, %v1356
        %v1405 = vmul.f32 %v1403, %v1357
        %v1406 = vmul.f32 %v1403, %v1358
        %v1410 = vrot.slane %v1404, 1
        %v1411 = vrot.slane %v1405, 1
        %v1412 = vsel %vm373, %v1410, %v1411
        %v1413 = vrot.slane %v1406, 1
        %v1414 = vsel %vm373, %v1411, %v1413
        %v1418 = vadd.f32 %v1372, %v1412
        %v1419 = vadd.f32 %v1373, %v1414
        %v1420 = vadd.f32 %v1374, %v1413
        %s1421 = sld [smem:[#allocation2 + $0x4b]]
        %v1422 = vstv %s1421
        %v1423 = vmul.f32 %v1422, %v1356
        %v1424 = vmul.f32 %v1422, %v1357
        %v1425 = vmul.f32 %v1422, %v1358
        %v1429 = vrot.slane %v1423, 1
        %v1430 = vrot.slane %v1424, 1
        %v1431 = vsel %vm373, %v1429, %v1430
        %v1432 = vrot.slane %v1425, 1
        %v1433 = vsel %vm373, %v1430, %v1432
        %v1437 = vadd.f32 %v1380, %v1431
        %v1438 = vadd.f32 %v1381, %v1433
        %v1439 = vadd.f32 %v1382, %v1432
        %s1440 = sld [smem:[#allocation2 + $0x18]]
        %v1441 = vstv %s1440
        %v1442 = vmul.f32 %v1441, %v1356
        %v1443 = vmul.f32 %v1441, %v1357
        %v1444 = vmul.f32 %v1441, %v1358
        %v1448 = vrot.slane %v1442, 2
        %v1449 = vrot.slane %v1443, 2
        %v1450 = vsel %vm431, %v1448, %v1449
        %v1451 = vrot.slane %v1444, 2
        %v1452 = vsel %vm431, %v1449, %v1451
        %v1456 = vadd.f32 %v1399, %v1450
        %v1457 = vadd.f32 %v1400, %v1452
        %v1458 = vadd.f32 %v1401, %v1451
        %s1459 = sld [smem:[#allocation2 + $0x33]]
        %v1460 = vstv %s1459
        %v1461 = vmul.f32 %v1460, %v1356
        %v1462 = vmul.f32 %v1460, %v1357
        %v1463 = vmul.f32 %v1460, %v1358
        %v1467 = vrot.slane %v1461, 2
        %v1468 = vrot.slane %v1462, 2
        %v1469 = vsel %vm431, %v1467, %v1468
        %v1470 = vrot.slane %v1463, 2
        %v1471 = vsel %vm431, %v1468, %v1470
        %v1475 = vadd.f32 %v1418, %v1469
        %v1476 = vadd.f32 %v1419, %v1471
        %v1477 = vadd.f32 %v1420, %v1470
        %s1478 = sld [smem:[#allocation2 + $0x4e]]
        %v1479 = vstv %s1478
        %v1480 = vmul.f32 %v1479, %v1356
        %v1481 = vmul.f32 %v1479, %v1357
        %v1482 = vmul.f32 %v1479, %v1358
        %v1486 = vrot.slane %v1480, 2
        %v1487 = vrot.slane %v1481, 2
        %v1488 = vsel %vm431, %v1486, %v1487
        %v1489 = vrot.slane %v1482, 2
        %v1490 = vsel %vm431, %v1487, %v1489
        %v1494 = vadd.f32 %v1437, %v1488
        %v1495 = vadd.f32 %v1438, %v1490
        %v1496 = vadd.f32 %v1439, %v1489
        %s1497 = sld [smem:[#allocation2 + $0x13]]
        %v1498 = vstv %s1497
        %v1499 = vmul.f32 %v1498, %v1353
        %v1500 = vmul.f32 %v1498, %v1354
        %v1501 = vmul.f32 %v1498, %v1355
        %1505 = vrot.lane.b32.xlu0 %v1499, 127
        %v1506 = vpop.permute.xlu0 %1505
        %1507 = vrot.lane.b32.xlu0 %v1500, 127
        %v1508 = vpop.permute.xlu0 %1507
        %1509 = vrot.lane.b32.xlu0 %v1501, 127
        %v1510 = vpop.permute.xlu0 %1509
        %v1514 = vadd.f32 %v1456, %v1506
        %v1515 = vadd.f32 %v1457, %v1508
        %v1516 = vadd.f32 %v1458, %v1510
        %s1517 = sld [smem:[#allocation2 + $0x2e]]
        %v1518 = vstv %s1517
        %v1519 = vmul.f32 %v1518, %v1353
        %v1520 = vmul.f32 %v1518, %v1354
        %v1521 = vmul.f32 %v1518, %v1355
        %1525 = vrot.lane.b32.xlu0 %v1519, 127
        %v1526 = vpop.permute.xlu0 %1525
        %1527 = vrot.lane.b32.xlu0 %v1520, 127
        %v1528 = vpop.permute.xlu0 %1527
        %1529 = vrot.lane.b32.xlu0 %v1521, 127
        %v1530 = vpop.permute.xlu0 %1529
        %v1534 = vadd.f32 %v1475, %v1526
        %v1535 = vadd.f32 %v1476, %v1528
        %v1536 = vadd.f32 %v1477, %v1530
        %s1537 = sld [smem:[#allocation2 + $0x49]]
        %v1538 = vstv %s1537
        %v1539 = vmul.f32 %v1538, %v1353
        %v1540 = vmul.f32 %v1538, %v1354
        %v1541 = vmul.f32 %v1538, %v1355
        %1545 = vrot.lane.b32.xlu0 %v1539, 127
        %v1546 = vpop.permute.xlu0 %1545
        %1547 = vrot.lane.b32.xlu0 %v1540, 127
        %v1548 = vpop.permute.xlu0 %1547
        %1549 = vrot.lane.b32.xlu0 %v1541, 127
        %v1550 = vpop.permute.xlu0 %1549
        %v1554 = vadd.f32 %v1494, %v1546
        %v1555 = vadd.f32 %v1495, %v1548
        %v1556 = vadd.f32 %v1496, %v1550
        %s1557 = sld [smem:[#allocation2 + $0x16]]
        %v1558 = vstv %s1557
        %v1559 = vmul.f32 %v1558, %v1353
        %v1560 = vmul.f32 %v1558, %v1354
        %v1561 = vmul.f32 %v1558, %v1355
        %v1565 = vrot.slane %v1559, 1
        %v1566 = vrot.slane %v1560, 1
        %v1567 = vsel %vm373, %v1565, %v1566
        %v1568 = vrot.slane %v1561, 1
        %v1569 = vsel %vm373, %v1566, %v1568
        %1570 = vrot.lane.b32.xlu0 %v1567, 127
        %v1571 = vpop.permute.xlu0 %1570
        %1572 = vrot.lane.b32.xlu0 %v1569, 127
        %v1573 = vpop.permute.xlu0 %1572
        %1574 = vrot.lane.b32.xlu0 %v1568, 127
        %v1575 = vpop.permute.xlu0 %1574
        %v1579 = vadd.f32 %v1514, %v1571
        %v1580 = vadd.f32 %v1515, %v1573
        %v1581 = vadd.f32 %v1516, %v1575
        %s1582 = sld [smem:[#allocation2 + $0x31]]
        %v1583 = vstv %s1582
        %v1584 = vmul.f32 %v1583, %v1353
        %v1585 = vmul.f32 %v1583, %v1354
        %v1586 = vmul.f32 %v1583, %v1355
        %v1590 = vrot.slane %v1584, 1
        %v1591 = vrot.slane %v1585, 1
        %v1592 = vsel %vm373, %v1590, %v1591
        %v1593 = vrot.slane %v1586, 1
        %v1594 = vsel %vm373, %v1591, %v1593
        %1595 = vrot.lane.b32.xlu0 %v1592, 127
        %v1596 = vpop.permute.xlu0 %1595
        %1597 = vrot.lane.b32.xlu0 %v1594, 127
        %v1598 = vpop.permute.xlu0 %1597
        %1599 = vrot.lane.b32.xlu0 %v1593, 127
        %v1600 = vpop.permute.xlu0 %1599
        %v1604 = vadd.f32 %v1534, %v1596
        %v1605 = vadd.f32 %v1535, %v1598
        %v1606 = vadd.f32 %v1536, %v1600
        %s1607 = sld [smem:[#allocation2 + $0x4c]]
        %v1608 = vstv %s1607
        %v1609 = vmul.f32 %v1608, %v1353
        %v1610 = vmul.f32 %v1608, %v1354
        %v1611 = vmul.f32 %v1608, %v1355
        %v1615 = vrot.slane %v1609, 1
        %v1616 = vrot.slane %v1610, 1
        %v1617 = vsel %vm373, %v1615, %v1616
        %v1618 = vrot.slane %v1611, 1
        %v1619 = vsel %vm373, %v1616, %v1618
        %1620 = vrot.lane.b32.xlu0 %v1617, 127
        %v1621 = vpop.permute.xlu0 %1620
        %1622 = vrot.lane.b32.xlu0 %v1619, 127
        %v1623 = vpop.permute.xlu0 %1622
        %1624 = vrot.lane.b32.xlu0 %v1618, 127
        %v1625 = vpop.permute.xlu0 %1624
        %v1629 = vadd.f32 %v1554, %v1621
        %v1630 = vadd.f32 %v1555, %v1623
        %v1631 = vadd.f32 %v1556, %v1625
        %s1632 = sld [smem:[#allocation2 + $0x19]]
        %v1633 = vstv %s1632
        %v1634 = vmul.f32 %v1633, %v1353
        %v1635 = vmul.f32 %v1633, %v1354
        %v1636 = vmul.f32 %v1633, %v1355
        %v1640 = vrot.slane %v1634, 2
        %v1641 = vrot.slane %v1635, 2
        %v1642 = vsel %vm431, %v1640, %v1641
        %v1643 = vrot.slane %v1636, 2
        %v1644 = vsel %vm431, %v1641, %v1643
        %1645 = vrot.lane.b32.xlu0 %v1642, 127
        %v1646 = vpop.permute.xlu0 %1645
        %1647 = vrot.lane.b32.xlu0 %v1644, 127
        %v1648 = vpop.permute.xlu0 %1647
        %1649 = vrot.lane.b32.xlu0 %v1643, 127
        %v1650 = vpop.permute.xlu0 %1649
        %v1654 = vadd.f32 %v1579, %v1646
        %v1655 = vadd.f32 %v1580, %v1648
        %v1656 = vadd.f32 %v1581, %v1650
        %s1657 = sld [smem:[#allocation2 + $0x34]]
        %v1658 = vstv %s1657
        %v1659 = vmul.f32 %v1658, %v1353
        %v1660 = vmul.f32 %v1658, %v1354
        %v1661 = vmul.f32 %v1658, %v1355
        %v1665 = vrot.slane %v1659, 2
        %v1666 = vrot.slane %v1660, 2
        %v1667 = vsel %vm431, %v1665, %v1666
        %v1668 = vrot.slane %v1661, 2
        %v1669 = vsel %vm431, %v1666, %v1668
        %1670 = vrot.lane.b32.xlu0 %v1667, 127
        %v1671 = vpop.permute.xlu0 %1670
        %1672 = vrot.lane.b32.xlu0 %v1669, 127
        %v1673 = vpop.permute.xlu0 %1672
        %1674 = vrot.lane.b32.xlu0 %v1668, 127
        %v1675 = vpop.permute.xlu0 %1674
        %v1679 = vadd.f32 %v1604, %v1671
        %v1680 = vadd.f32 %v1605, %v1673
        %v1681 = vadd.f32 %v1606, %v1675
        %s1682 = sld [smem:[#allocation2 + $0x4f]]
        %v1683 = vstv %s1682
        %v1684 = vmul.f32 %v1683, %v1353
        %v1685 = vmul.f32 %v1683, %v1354
        %v1686 = vmul.f32 %v1683, %v1355
        %v1690 = vrot.slane %v1684, 2
        %v1691 = vrot.slane %v1685, 2
        %v1692 = vsel %vm431, %v1690, %v1691
        %v1693 = vrot.slane %v1686, 2
        %v1694 = vsel %vm431, %v1691, %v1693
        %1695 = vrot.lane.b32.xlu0 %v1692, 127
        %v1696 = vpop.permute.xlu0 %1695
        %1697 = vrot.lane.b32.xlu0 %v1694, 127
        %v1698 = vpop.permute.xlu0 %1697
        %1699 = vrot.lane.b32.xlu0 %v1693, 127
        %v1700 = vpop.permute.xlu0 %1699
        %v1704 = vadd.f32 %v1629, %v1696
        %v1705 = vadd.f32 %v1630, %v1698
        %v1706 = vadd.f32 %v1631, %v1700
        %1710 = vrot.lane.b32.xlu0 %v1353, 126
        %v1711 = vpop.permute.xlu0 %1710
        %1712 = vrot.lane.b32.xlu0 %v1354, 126
        %v1713 = vpop.permute.xlu0 %1712
        %1714 = vrot.lane.b32.xlu0 %v1355, 126
        %v1715 = vpop.permute.xlu0 %1714
        %v1719 = vsel %vm293, %v1711, 0.0
        %v1720 = vsel %vm293, %v1713, 0.0
        %v1721 = vsel %vm293, %v1715, 0.0
        %s1722 = sld [smem:[#allocation2 + $0x14]]
        %v1723 = vstv %s1722
        %v1724 = vmul.f32 %v1723, %v1719
        %v1725 = vmul.f32 %v1723, %v1720
        %v1726 = vmul.f32 %v1723, %v1721
        %v1727 = vadd.f32 %v1654, %v1724
        %v1728 = vadd.f32 %v1655, %v1725
        %v1729 = vadd.f32 %v1656, %v1726
        %s1730 = sld [smem:[#allocation2 + $0x2f]]
        %v1731 = vstv %s1730
        %v1732 = vmul.f32 %v1731, %v1719
        %v1733 = vmul.f32 %v1731, %v1720
        %v1734 = vmul.f32 %v1731, %v1721
        %v1735 = vadd.f32 %v1679, %v1732
        %v1736 = vadd.f32 %v1680, %v1733
        %v1737 = vadd.f32 %v1681, %v1734
        %s1738 = sld [smem:[#allocation2 + $0x4a]]
        %v1739 = vstv %s1738
        %v1740 = vmul.f32 %v1739, %v1719
        %v1741 = vmul.f32 %v1739, %v1720
        %v1742 = vmul.f32 %v1739, %v1721
        %v1743 = vadd.f32 %v1704, %v1740
        %v1744 = vadd.f32 %v1705, %v1741
        %v1745 = vadd.f32 %v1706, %v1742
        %s1746 = sld [smem:[#allocation2 + $0x17]]
        %v1747 = vstv %s1746
        %v1748 = vmul.f32 %v1747, %v1719
        %v1749 = vmul.f32 %v1747, %v1720
        %v1750 = vmul.f32 %v1747, %v1721
        %v1754 = vrot.slane %v1748, 1
        %v1755 = vrot.slane %v1749, 1
        %v1756 = vsel %vm373, %v1754, %v1755
        %v1757 = vrot.slane %v1750, 1
        %v1758 = vsel %vm373, %v1755, %v1757
        %v1762 = vadd.f32 %v1727, %v1756
        %v1763 = vadd.f32 %v1728, %v1758
        %v1764 = vadd.f32 %v1729, %v1757
        %s1765 = sld [smem:[#allocation2 + $0x32]]
        %v1766 = vstv %s1765
        %v1767 = vmul.f32 %v1766, %v1719
        %v1768 = vmul.f32 %v1766, %v1720
        %v1769 = vmul.f32 %v1766, %v1721
        %v1773 = vrot.slane %v1767, 1
        %v1774 = vrot.slane %v1768, 1
        %v1775 = vsel %vm373, %v1773, %v1774
        %v1776 = vrot.slane %v1769, 1
        %v1777 = vsel %vm373, %v1774, %v1776
        %v1781 = vadd.f32 %v1735, %v1775
        %v1782 = vadd.f32 %v1736, %v1777
        %v1783 = vadd.f32 %v1737, %v1776
        %s1784 = sld [smem:[#allocation2 + $0x4d]]
        %v1785 = vstv %s1784
        %v1786 = vmul.f32 %v1785, %v1719
        %v1787 = vmul.f32 %v1785, %v1720
        %v1788 = vmul.f32 %v1785, %v1721
        %v1792 = vrot.slane %v1786, 1
        %v1793 = vrot.slane %v1787, 1
        %v1794 = vsel %vm373, %v1792, %v1793
        %v1795 = vrot.slane %v1788, 1
        %v1796 = vsel %vm373, %v1793, %v1795
        %v1800 = vadd.f32 %v1743, %v1794
        %v1801 = vadd.f32 %v1744, %v1796
        %v1802 = vadd.f32 %v1745, %v1795
        %s1803 = sld [smem:[#allocation2 + $0x1a]]
        %v1804 = vstv %s1803
        %v1805 = vmul.f32 %v1804, %v1719
        %v1806 = vmul.f32 %v1804, %v1720
        %v1807 = vmul.f32 %v1804, %v1721
        %v1811 = vrot.slane %v1805, 2
        %v1812 = vrot.slane %v1806, 2
        %v1813 = vsel %vm431, %v1811, %v1812
        %v1814 = vrot.slane %v1807, 2
        %v1815 = vsel %vm431, %v1812, %v1814
        %v1819 = vadd.f32 %v1762, %v1813
        %v1820 = vadd.f32 %v1763, %v1815
        %v1821 = vadd.f32 %v1764, %v1814
        %s1822 = sld [smem:[#allocation2 + $0x35]]
        %v1823 = vstv %s1822
        %v1824 = vmul.f32 %v1823, %v1719
        %v1825 = vmul.f32 %v1823, %v1720
        %v1826 = vmul.f32 %v1823, %v1721
        %v1830 = vrot.slane %v1824, 2
        %v1831 = vrot.slane %v1825, 2
        %v1832 = vsel %vm431, %v1830, %v1831
        %v1833 = vrot.slane %v1826, 2
        %v1834 = vsel %vm431, %v1831, %v1833
        %v1838 = vadd.f32 %v1781, %v1832
        %v1839 = vadd.f32 %v1782, %v1834
        %v1840 = vadd.f32 %v1783, %v1833
        %s1841 = sld [smem:[#allocation2 + $0x50]]
        %v1842 = vstv %s1841
        %v1843 = vmul.f32 %v1842, %v1719
        %v1844 = vmul.f32 %v1842, %v1720
        %v1845 = vmul.f32 %v1842, %v1721
        %v1849 = vrot.slane %v1843, 2
        %v1850 = vrot.slane %v1844, 2
        %v1851 = vsel %vm431, %v1849, %v1850
        %v1852 = vrot.slane %v1845, 2
        %v1853 = vsel %vm431, %v1850, %v1852
        %v1857 = vadd.f32 %v1800, %v1851
        %v1858 = vadd.f32 %v1801, %v1853
        %v1859 = vadd.f32 %v1802, %v1852
        %v1860 = vmax.f32 %v1819, 0.0
        %v1861 = vmax.f32 %v1820, 0.0
        %v1862 = vmax.f32 %v1821, 0.0
        %v1863 = vsel %vm312, %v1860, 0.0
        %v1864 = vsel %vm313, %v1861, 0.0
        %v1865 = vsel %vm314, %v1862, 0.0
        %v1866 = vmax.f32 %v1838, 0.0
        %v1867 = vmax.f32 %v1839, 0.0
        %v1868 = vmax.f32 %v1840, 0.0
        %v1869 = vsel %vm312, %v1866, 0.0
        %v1870 = vsel %vm313, %v1867, 0.0
        %v1871 = vsel %vm314, %v1868, 0.0
        %v1872 = vmax.f32 %v1857, 0.0
        %v1873 = vmax.f32 %v1858, 0.0
        %v1874 = vmax.f32 %v1859, 0.0
        %v1875 = vsel %vm312, %v1872, 0.0
        %v1876 = vsel %vm313, %v1873, 0.0
        %v1877 = vsel %vm314, %v1874, 0.0
        %s1878 = sld [smem:[#allocation7]]
        %v1879 = vstv %s1878
        %s1880 = sld [smem:[#allocation7 + $0x1]]
        %v1881 = vstv %s1880
        %s1882 = sld [smem:[#allocation7 + $0x2]]
        %v1883 = vstv %s1882
        %v1884 = vsel %vm327, %v1863, 0.0
        %v1885 = vsel %vm327, %v1864, 0.0
        %v1886 = vsel %vm327, %v1865, 0.0
        %s1887 = sld [smem:[#allocation6]]
        %v1888 = vstv %s1887
        %v1889 = vmul.f32 %v1888, %v1884
        %v1890 = vmul.f32 %v1888, %v1885
        %v1891 = vadd.f32 %v1879, %v1889
        %v1892 = vadd.f32 %v1879, %v1890
        %s1893 = sld [smem:[#allocation6 + $0x1b]]
        %v1894 = vstv %s1893
        %v1895 = vmul.f32 %v1894, %v1884
        %v1896 = vmul.f32 %v1894, %v1885
        %v1897 = vadd.f32 %v1881, %v1895
        %v1898 = vadd.f32 %v1881, %v1896
        %s1899 = sld [smem:[#allocation6 + $0x36]]
        %v1900 = vstv %s1899
        %v1901 = vmul.f32 %v1900, %v1884
        %v1902 = vmul.f32 %v1900, %v1885
        %v1903 = vadd.f32 %v1883, %v1901
        %v1904 = vadd.f32 %v1883, %v1902
        %s1905 = sld [smem:[#allocation6 + $0x3]]
        %v1906 = vstv %s1905
        %v1907 = vmul.f32 %v1906, %v1884
        %v1908 = vmul.f32 %v1906, %v1885
        %v1909 = vmul.f32 %v1906, %v1886
        %v1913 = vrot.slane %v1907, 1
        %v1914 = vrot.slane %v1908, 1
        %v1915 = vsel %vm373, %v1913, %v1914
        %v1916 = vrot.slane %v1909, 1
        %v1917 = vsel %vm373, %v1914, %v1916
        %v1920 = vadd.f32 %v1891, %v1915
        %v1921 = vadd.f32 %v1892, %v1917
        %s1922 = sld [smem:[#allocation6 + $0x1e]]
        %v1923 = vstv %s1922
        %v1924 = vmul.f32 %v1923, %v1884
        %v1925 = vmul.f32 %v1923, %v1885
        %v1926 = vmul.f32 %v1923, %v1886
        %v1930 = vrot.slane %v1924, 1
        %v1931 = vrot.slane %v1925, 1
        %v1932 = vsel %vm373, %v1930, %v1931
        %v1933 = vrot.slane %v1926, 1
        %v1934 = vsel %vm373, %v1931, %v1933
        %v1937 = vadd.f32 %v1897, %v1932
        %v1938 = vadd.f32 %v1898, %v1934
        %s1939 = sld [smem:[#allocation6 + $0x39]]
        %v1940 = vstv %s1939
        %v1941 = vmul.f32 %v1940, %v1884
        %v1942 = vmul.f32 %v1940, %v1885
        %v1943 = vmul.f32 %v1940, %v1886
        %v1947 = vrot.slane %v1941, 1
        %v1948 = vrot.slane %v1942, 1
        %v1949 = vsel %vm373, %v1947, %v1948
        %v1950 = vrot.slane %v1943, 1
        %v1951 = vsel %vm373, %v1948, %v1950
        %v1954 = vadd.f32 %v1903, %v1949
        %v1955 = vadd.f32 %v1904, %v1951
        %s1956 = sld [smem:[#allocation6 + $0x6]]
        %v1957 = vstv %s1956
        %v1958 = vmul.f32 %v1957, %v1884
        %v1959 = vmul.f32 %v1957, %v1885
        %v1960 = vmul.f32 %v1957, %v1886
        %v1964 = vrot.slane %v1958, 2
        %v1965 = vrot.slane %v1959, 2
        %v1966 = vsel %vm431, %v1964, %v1965
        %v1967 = vrot.slane %v1960, 2
        %v1968 = vsel %vm431, %v1965, %v1967
        %v1971 = vadd.f32 %v1920, %v1966
        %v1972 = vadd.f32 %v1921, %v1968
        %s1973 = sld [smem:[#allocation6 + $0x21]]
        %v1974 = vstv %s1973
        %v1975 = vmul.f32 %v1974, %v1884
        %v1976 = vmul.f32 %v1974, %v1885
        %v1977 = vmul.f32 %v1974, %v1886
        %v1981 = vrot.slane %v1975, 2
        %v1982 = vrot.slane %v1976, 2
        %v1983 = vsel %vm431, %v1981, %v1982
        %v1984 = vrot.slane %v1977, 2
        %v1985 = vsel %vm431, %v1982, %v1984
        %v1988 = vadd.f32 %v1937, %v1983
        %v1989 = vadd.f32 %v1938, %v1985
        %s1990 = sld [smem:[#allocation6 + $0x3c]]
        %v1991 = vstv %s1990
        %v1992 = vmul.f32 %v1991, %v1884
        %v1993 = vmul.f32 %v1991, %v1885
        %v1994 = vmul.f32 %v1991, %v1886
        %v1998 = vrot.slane %v1992, 2
        %v1999 = vrot.slane %v1993, 2
        %v2000 = vsel %vm431, %v1998, %v1999
        %v2001 = vrot.slane %v1994, 2
        %v2002 = vsel %vm431, %v1999, %v2001
        %v2005 = vadd.f32 %v1954, %v2000
        %v2006 = vadd.f32 %v1955, %v2002
        %s2007 = sld [smem:[#allocation6 + $0x1]]
        %v2008 = vstv %s2007
        %v2009 = vmul.f32 %v2008, %v1863
        %v2010 = vmul.f32 %v2008, %v1864
        %2013 = vrot.lane.b32.xlu0 %v2009, 127
        %v2014 = vpop.permute.xlu0 %2013
        %2015 = vrot.lane.b32.xlu0 %v2010, 127
        %v2016 = vpop.permute.xlu0 %2015
        %v2019 = vadd.f32 %v1971, %v2014
        %v2020 = vadd.f32 %v1972, %v2016
        %s2021 = sld [smem:[#allocation6 + $0x1c]]
        %v2022 = vstv %s2021
        %v2023 = vmul.f32 %v2022, %v1863
        %v2024 = vmul.f32 %v2022, %v1864
        %2027 = vrot.lane.b32.xlu0 %v2023, 127
        %v2028 = vpop.permute.xlu0 %2027
        %2029 = vrot.lane.b32.xlu0 %v2024, 127
        %v2030 = vpop.permute.xlu0 %2029
        %v2033 = vadd.f32 %v1988, %v2028
        %v2034 = vadd.f32 %v1989, %v2030
        %s2035 = sld [smem:[#allocation6 + $0x37]]
        %v2036 = vstv %s2035
        %v2037 = vmul.f32 %v2036, %v1863
        %v2038 = vmul.f32 %v2036, %v1864
        %2041 = vrot.lane.b32.xlu0 %v2037, 127
        %v2042 = vpop.permute.xlu0 %2041
        %2043 = vrot.lane.b32.xlu0 %v2038, 127
        %v2044 = vpop.permute.xlu0 %2043
        %v2047 = vadd.f32 %v2005, %v2042
        %v2048 = vadd.f32 %v2006, %v2044
        %s2049 = sld [smem:[#allocation6 + $0x4]]
        %v2050 = vstv %s2049
        %v2051 = vmul.f32 %v2050, %v1863
        %v2052 = vmul.f32 %v2050, %v1864
        %v2053 = vmul.f32 %v2050, %v1865
        %v2057 = vrot.slane %v2051, 1
        %v2058 = vrot.slane %v2052, 1
        %v2059 = vsel %vm373, %v2057, %v2058
        %v2060 = vrot.slane %v2053, 1
        %v2061 = vsel %vm373, %v2058, %v2060
        %2062 = vrot.lane.b32.xlu0 %v2059, 127
        %v2063 = vpop.permute.xlu0 %2062
        %2064 = vrot.lane.b32.xlu0 %v2061, 127
        %v2065 = vpop.permute.xlu0 %2064
        %v2068 = vadd.f32 %v2019, %v2063
        %v2069 = vadd.f32 %v2020, %v2065
        %s2070 = sld [smem:[#allocation6 + $0x1f]]
        %v2071 = vstv %s2070
        %v2072 = vmul.f32 %v2071, %v1863
        %v2073 = vmul.f32 %v2071, %v1864
        %v2074 = vmul.f32 %v2071, %v1865
        %v2078 = vrot.slane %v2072, 1
        %v2079 = vrot.slane %v2073, 1
        %v2080 = vsel %vm373, %v2078, %v2079
        %v2081 = vrot.slane %v2074, 1
        %v2082 = vsel %vm373, %v2079, %v2081
        %2083 = vrot.lane.b32.xlu0 %v2080, 127
        %v2084 = vpop.permute.xlu0 %2083
        %2085 = vrot.lane.b32.xlu0 %v2082, 127
        %v2086 = vpop.permute.xlu0 %2085
        %v2089 = vadd.f32 %v2033, %v2084
        %v2090 = vadd.f32 %v2034, %v2086
        %s2091 = sld [smem:[#allocation6 + $0x3a]]
        %v2092 = vstv %s2091
        %v2093 = vmul.f32 %v2092, %v1863
        %v2094 = vmul.f32 %v2092, %v1864
        %v2095 = vmul.f32 %v2092, %v1865
        %v2099 = vrot.slane %v2093, 1
        %v2100 = vrot.slane %v2094, 1
        %v2101 = vsel %vm373, %v2099, %v2100
        %v2102 = vrot.slane %v2095, 1
        %v2103 = vsel %vm373, %v2100, %v2102
        %2104 = vrot.lane.b32.xlu0 %v2101, 127
        %v2105 = vpop.permute.xlu0 %2104
        %2106 = vrot.lane.b32.xlu0 %v2103, 127
        %v2107 = vpop.permute.xlu0 %2106
        %v2110 = vadd.f32 %v2047, %v2105
        %v2111 = vadd.f32 %v2048, %v2107
        %s2112 = sld [smem:[#allocation6 + $0x7]]
        %v2113 = vstv %s2112
        %v2114 = vmul.f32 %v2113, %v1863
        %v2115 = vmul.f32 %v2113, %v1864
        %v2116 = vmul.f32 %v2113, %v1865
        %v2120 = vrot.slane %v2114, 2
        %v2121 = vrot.slane %v2115, 2
        %v2122 = vsel %vm431, %v2120, %v2121
        %v2123 = vrot.slane %v2116, 2
        %v2124 = vsel %vm431, %v2121, %v2123
        %2125 = vrot.lane.b32.xlu0 %v2122, 127
        %v2126 = vpop.permute.xlu0 %2125
        %2127 = vrot.lane.b32.xlu0 %v2124, 127
        %v2128 = vpop.permute.xlu0 %2127
        %v2131 = vadd.f32 %v2068, %v2126
        %v2132 = vadd.f32 %v2069, %v2128
        %s2133 = sld [smem:[#allocation6 + $0x22]]
        %v2134 = vstv %s2133
        %v2135 = vmul.f32 %v2134, %v1863
        %v2136 = vmul.f32 %v2134, %v1864
        %v2137 = vmul.f32 %v2134, %v1865
        %v2141 = vrot.slane %v2135, 2
        %v2142 = vrot.slane %v2136, 2
        %v2143 = vsel %vm431, %v2141, %v2142
        %v2144 = vrot.slane %v2137, 2
        %v2145 = vsel %vm431, %v2142, %v2144
        %2146 = vrot.lane.b32.xlu0 %v2143, 127
        %v2147 = vpop.permute.xlu0 %2146
        %2148 = vrot.lane.b32.xlu0 %v2145, 127
        %v2149 = vpop.permute.xlu0 %2148
        %v2152 = vadd.f32 %v2089, %v2147
        %v2153 = vadd.f32 %v2090, %v2149
        %s2154 = sld [smem:[#allocation6 + $0x3d]]
        %v2155 = vstv %s2154
        %v2156 = vmul.f32 %v2155, %v1863
        %v2157 = vmul.f32 %v2155, %v1864
        %v2158 = vmul.f32 %v2155, %v1865
        %v2162 = vrot.slane %v2156, 2
        %v2163 = vrot.slane %v2157, 2
        %v2164 = vsel %vm431, %v2162, %v2163
        %v2165 = vrot.slane %v2158, 2
        %v2166 = vsel %vm431, %v2163, %v2165
        %2167 = vrot.lane.b32.xlu0 %v2164, 127
        %v2168 = vpop.permute.xlu0 %2167
        %2169 = vrot.lane.b32.xlu0 %v2166, 127
        %v2170 = vpop.permute.xlu0 %2169
        %v2173 = vadd.f32 %v2110, %v2168
        %v2174 = vadd.f32 %v2111, %v2170
        %2178 = vrot.lane.b32.xlu0 %v1863, 126
        %v2179 = vpop.permute.xlu0 %2178
        %2180 = vrot.lane.b32.xlu0 %v1864, 126
        %v2181 = vpop.permute.xlu0 %2180
        %2182 = vrot.lane.b32.xlu0 %v1865, 126
        %v2183 = vpop.permute.xlu0 %2182
        %v2187 = vsel %vm328, %v2179, 0.0
        %v2188 = vsel %vm328, %v2181, 0.0
        %v2189 = vsel %vm328, %v2183, 0.0
        %s2190 = sld [smem:[#allocation6 + $0x2]]
        %v2191 = vstv %s2190
        %v2192 = vmul.f32 %v2191, %v2187
        %v2193 = vmul.f32 %v2191, %v2188
        %v2194 = vadd.f32 %v2131, %v2192
        %v2195 = vadd.f32 %v2132, %v2193
        %s2196 = sld [smem:[#allocation6 + $0x1d]]
        %v2197 = vstv %s2196
        %v2198 = vmul.f32 %v2197, %v2187
        %v2199 = vmul.f32 %v2197, %v2188
        %v2200 = vadd.f32 %v2152, %v2198
        %v2201 = vadd.f32 %v2153, %v2199
        %s2202 = sld [smem:[#allocation6 + $0x38]]
        %v2203 = vstv %s2202
        %v2204 = vmul.f32 %v2203, %v2187
        %v2205 = vmul.f32 %v2203, %v2188
        %v2206 = vadd.f32 %v2173, %v2204
        %v2207 = vadd.f32 %v2174, %v2205
        %s2208 = sld [smem:[#allocation6 + $0x5]]
        %v2209 = vstv %s2208
        %v2210 = vmul.f32 %v2209, %v2187
        %v2211 = vmul.f32 %v2209, %v2188
        %v2212 = vmul.f32 %v2209, %v2189
        %v2216 = vrot.slane %v2210, 1
        %v2217 = vrot.slane %v2211, 1
        %v2218 = vsel %vm373, %v2216, %v2217
        %v2219 = vrot.slane %v2212, 1
        %v2220 = vsel %vm373, %v2217, %v2219
        %v2223 = vadd.f32 %v2194, %v2218
        %v2224 = vadd.f32 %v2195, %v2220
        %s2225 = sld [smem:[#allocation6 + $0x20]]
        %v2226 = vstv %s2225
        %v2227 = vmul.f32 %v2226, %v2187
        %v2228 = vmul.f32 %v2226, %v2188
        %v2229 = vmul.f32 %v2226, %v2189
        %v2233 = vrot.slane %v2227, 1
        %v2234 = vrot.slane %v2228, 1
        %v2235 = vsel %vm373, %v2233, %v2234
        %v2236 = vrot.slane %v2229, 1
        %v2237 = vsel %vm373, %v2234, %v2236
        %v2240 = vadd.f32 %v2200, %v2235
        %v2241 = vadd.f32 %v2201, %v2237
        %s2242 = sld [smem:[#allocation6 + $0x3b]]
        %v2243 = vstv %s2242
        %v2244 = vmul.f32 %v2243, %v2187
        %v2245 = vmul.f32 %v2243, %v2188
        %v2246 = vmul.f32 %v2243, %v2189
        %v2250 = vrot.slane %v2244, 1
        %v2251 = vrot.slane %v2245, 1
        %v2252 = vsel %vm373, %v2250, %v2251
        %v2253 = vrot.slane %v2246, 1
        %v2254 = vsel %vm373, %v2251, %v2253
        %v2257 = vadd.f32 %v2206, %v2252
        %v2258 = vadd.f32 %v2207, %v2254
        %s2259 = sld [smem:[#allocation6 + $0x8]]
        %v2260 = vstv %s2259
        %v2261 = vmul.f32 %v2260, %v2187
        %v2262 = vmul.f32 %v2260, %v2188
        %v2263 = vmul.f32 %v2260, %v2189
        %v2267 = vrot.slane %v2261, 2
        %v2268 = vrot.slane %v2262, 2
        %v2269 = vsel %vm431, %v2267, %v2268
        %v2270 = vrot.slane %v2263, 2
        %v2271 = vsel %vm431, %v2268, %v2270
        %v2274 = vadd.f32 %v2223, %v2269
        %v2275 = vadd.f32 %v2224, %v2271
        %s2276 = sld [smem:[#allocation6 + $0x23]]
        %v2277 = vstv %s2276
        %v2278 = vmul.f32 %v2277, %v2187
        %v2279 = vmul.f32 %v2277, %v2188
        %v2280 = vmul.f32 %v2277, %v2189
        %v2284 = vrot.slane %v2278, 2
        %v2285 = vrot.slane %v2279, 2
        %v2286 = vsel %vm431, %v2284, %v2285
        %v2287 = vrot.slane %v2280, 2
        %v2288 = vsel %vm431, %v2285, %v2287
        %v2291 = vadd.f32 %v2240, %v2286
        %v2292 = vadd.f32 %v2241, %v2288
        %s2293 = sld [smem:[#allocation6 + $0x3e]]
        %v2294 = vstv %s2293
        %v2295 = vmul.f32 %v2294, %v2187
        %v2296 = vmul.f32 %v2294, %v2188
        %v2297 = vmul.f32 %v2294, %v2189
        %v2301 = vrot.slane %v2295, 2
        %v2302 = vrot.slane %v2296, 2
        %v2303 = vsel %vm431, %v2301, %v2302
        %v2304 = vrot.slane %v2297, 2
        %v2305 = vsel %vm431, %v2302, %v2304
        %v2308 = vadd.f32 %v2257, %v2303
        %v2309 = vadd.f32 %v2258, %v2305
        %v2310 = vsel %vm327, %v1869, 0.0
        %v2311 = vsel %vm327, %v1870, 0.0
        %v2312 = vsel %vm327, %v1871, 0.0
        %s2313 = sld [smem:[#allocation6 + $0x9]]
        %v2314 = vstv %s2313
        %v2315 = vmul.f32 %v2314, %v2310
        %v2316 = vmul.f32 %v2314, %v2311
        %v2317 = vadd.f32 %v2274, %v2315
        %v2318 = vadd.f32 %v2275, %v2316
        %s2319 = sld [smem:[#allocation6 + $0x24]]
        %v2320 = vstv %s2319
        %v2321 = vmul.f32 %v2320, %v2310
        %v2322 = vmul.f32 %v2320, %v2311
        %v2323 = vadd.f32 %v2291, %v2321
        %v2324 = vadd.f32 %v2292, %v2322
        %s2325 = sld [smem:[#allocation6 + $0x3f]]
        %v2326 = vstv %s2325
        %v2327 = vmul.f32 %v2326, %v2310
        %v2328 = vmul.f32 %v2326, %v2311
        %v2329 = vadd.f32 %v2308, %v2327
        %v2330 = vadd.f32 %v2309, %v2328
        %s2331 = sld [smem:[#allocation6 + $0xc]]
        %v2332 = vstv %s2331
        %v2333 = vmul.f32 %v2332, %v2310
        %v2334 = vmul.f32 %v2332, %v2311
        %v2335 = vmul.f32 %v2332, %v2312
        %v2339 = vrot.slane %v2333, 1
        %v2340 = vrot.slane %v2334, 1
        %v2341 = vsel %vm373, %v2339, %v2340
        %v2342 = vrot.slane %v2335, 1
        %v2343 = vsel %vm373, %v2340, %v2342
        %v2346 = vadd.f32 %v2317, %v2341
        %v2347 = vadd.f32 %v2318, %v2343
        %s2348 = sld [smem:[#allocation6 + $0x27]]
        %v2349 = vstv %s2348
        %v2350 = vmul.f32 %v2349, %v2310
        %v2351 = vmul.f32 %v2349, %v2311
        %v2352 = vmul.f32 %v2349, %v2312
        %v2356 = vrot.slane %v2350, 1
        %v2357 = vrot.slane %v2351, 1
        %v2358 = vsel %vm373, %v2356, %v2357
        %v2359 = vrot.slane %v2352, 1
        %v2360 = vsel %vm373, %v2357, %v2359
        %v2363 = vadd.f32 %v2323, %v2358
        %v2364 = vadd.f32 %v2324, %v2360
        %s2365 = sld [smem:[#allocation6 + $0x42]]
        %v2366 = vstv %s2365
        %v2367 = vmul.f32 %v2366, %v2310
        %v2368 = vmul.f32 %v2366, %v2311
        %v2369 = vmul.f32 %v2366, %v2312
        %v2373 = vrot.slane %v2367, 1
        %v2374 = vrot.slane %v2368, 1
        %v2375 = vsel %vm373, %v2373, %v2374
        %v2376 = vrot.slane %v2369, 1
        %v2377 = vsel %vm373, %v2374, %v2376
        %v2380 = vadd.f32 %v2329, %v2375
        %v2381 = vadd.f32 %v2330, %v2377
        %s2382 = sld [smem:[#allocation6 + $0xf]]
        %v2383 = vstv %s2382
        %v2384 = vmul.f32 %v2383, %v2310
        %v2385 = vmul.f32 %v2383, %v2311
        %v2386 = vmul.f32 %v2383, %v2312
        %v2390 = vrot.slane %v2384, 2
        %v2391 = vrot.slane %v2385, 2
        %v2392 = vsel %vm431, %v2390, %v2391
        %v2393 = vrot.slane %v2386, 2
        %v2394 = vsel %vm431, %v2391, %v2393
        %v2397 = vadd.f32 %v2346, %v2392
        %v2398 = vadd.f32 %v2347, %v2394
        %s2399 = sld [smem:[#allocation6 + $0x2a]]
        %v2400 = vstv %s2399
        %v2401 = vmul.f32 %v2400, %v2310
        %v2402 = vmul.f32 %v2400, %v2311
        %v2403 = vmul.f32 %v2400, %v2312
        %v2407 = vrot.slane %v2401, 2
        %v2408 = vrot.slane %v2402, 2
        %v2409 = vsel %vm431, %v2407, %v2408
        %v2410 = vrot.slane %v2403, 2
        %v2411 = vsel %vm431, %v2408, %v2410
        %v2414 = vadd.f32 %v2363, %v2409
        %v2415 = vadd.f32 %v2364, %v2411
        %s2416 = sld [smem:[#allocation6 + $0x45]]
        %v2417 = vstv %s2416
        %v2418 = vmul.f32 %v2417, %v2310
        %v2419 = vmul.f32 %v2417, %v2311
        %v2420 = vmul.f32 %v2417, %v2312
        %v2424 = vrot.slane %v2418, 2
        %v2425 = vrot.slane %v2419, 2
        %v2426 = vsel %vm431, %v2424, %v2425
        %v2427 = vrot.slane %v2420, 2
        %v2428 = vsel %vm431, %v2425, %v2427
        %v2431 = vadd.f32 %v2380, %v2426
        %v2432 = vadd.f32 %v2381, %v2428
        %s2433 = sld [smem:[#allocation6 + $0xa]]
        %v2434 = vstv %s2433
        %v2435 = vmul.f32 %v2434, %v1869
        %v2436 = vmul.f32 %v2434, %v1870
        %2439 = vrot.lane.b32.xlu0 %v2435, 127
        %v2440 = vpop.permute.xlu0 %2439
        %2441 = vrot.lane.b32.xlu0 %v2436, 127
        %v2442 = vpop.permute.xlu0 %2441
        %v2445 = vadd.f32 %v2397, %v2440
        %v2446 = vadd.f32 %v2398, %v2442
        %s2447 = sld [smem:[#allocation6 + $0x25]]
        %v2448 = vstv %s2447
        %v2449 = vmul.f32 %v2448, %v1869
        %v2450 = vmul.f32 %v2448, %v1870
        %2453 = vrot.lane.b32.xlu0 %v2449, 127
        %v2454 = vpop.permute.xlu0 %2453
        %2455 = vrot.lane.b32.xlu0 %v2450, 127
        %v2456 = vpop.permute.xlu0 %2455
        %v2459 = vadd.f32 %v2414, %v2454
        %v2460 = vadd.f32 %v2415, %v2456
        %s2461 = sld [smem:[#allocation6 + $0x40]]
        %v2462 = vstv %s2461
        %v2463 = vmul.f32 %v2462, %v1869
        %v2464 = vmul.f32 %v2462, %v1870
        %2467 = vrot.lane.b32.xlu0 %v2463, 127
        %v2468 = vpop.permute.xlu0 %2467
        %2469 = vrot.lane.b32.xlu0 %v2464, 127
        %v2470 = vpop.permute.xlu0 %2469
        %v2473 = vadd.f32 %v2431, %v2468
        %v2474 = vadd.f32 %v2432, %v2470
        %s2475 = sld [smem:[#allocation6 + $0xd]]
        %v2476 = vstv %s2475
        %v2477 = vmul.f32 %v2476, %v1869
        %v2478 = vmul.f32 %v2476, %v1870
        %v2479 = vmul.f32 %v2476, %v1871
        %v2483 = vrot.slane %v2477, 1
        %v2484 = vrot.slane %v2478, 1
        %v2485 = vsel %vm373, %v2483, %v2484
        %v2486 = vrot.slane %v2479, 1
        %v2487 = vsel %vm373, %v2484, %v2486
        %2488 = vrot.lane.b32.xlu0 %v2485, 127
        %v2489 = vpop.permute.xlu0 %2488
        %2490 = vrot.lane.b32.xlu0 %v2487, 127
        %v2491 = vpop.permute.xlu0 %2490
        %v2494 = vadd.f32 %v2445, %v2489
        %v2495 = vadd.f32 %v2446, %v2491
        %s2496 = sld [smem:[#allocation6 + $0x28]]
        %v2497 = vstv %s2496
        %v2498 = vmul.f32 %v2497, %v1869
        %v2499 = vmul.f32 %v2497, %v1870
        %v2500 = vmul.f32 %v2497, %v1871
        %v2504 = vrot.slane %v2498, 1
        %v2505 = vrot.slane %v2499, 1
        %v2506 = vsel %vm373, %v2504, %v2505
        %v2507 = vrot.slane %v2500, 1
        %v2508 = vsel %vm373, %v2505, %v2507
        %2509 = vrot.lane.b32.xlu0 %v2506, 127
        %v2510 = vpop.permute.xlu0 %2509
        %2511 = vrot.lane.b32.xlu0 %v2508, 127
        %v2512 = vpop.permute.xlu0 %2511
        %v2515 = vadd.f32 %v2459, %v2510
        %v2516 = vadd.f32 %v2460, %v2512
        %s2517 = sld [smem:[#allocation6 + $0x43]]
        %v2518 = vstv %s2517
        %v2519 = vmul.f32 %v2518, %v1869
        %v2520 = vmul.f32 %v2518, %v1870
        %v2521 = vmul.f32 %v2518, %v1871
        %v2525 = vrot.slane %v2519, 1
        %v2526 = vrot.slane %v2520, 1
        %v2527 = vsel %vm373, %v2525, %v2526
        %v2528 = vrot.slane %v2521, 1
        %v2529 = vsel %vm373, %v2526, %v2528
        %2530 = vrot.lane.b32.xlu0 %v2527, 127
        %v2531 = vpop.permute.xlu0 %2530
        %2532 = vrot.lane.b32.xlu0 %v2529, 127
        %v2533 = vpop.permute.xlu0 %2532
        %v2536 = vadd.f32 %v2473, %v2531
        %v2537 = vadd.f32 %v2474, %v2533
        %s2538 = sld [smem:[#allocation6 + $0x10]]
        %v2539 = vstv %s2538
        %v2540 = vmul.f32 %v2539, %v1869
        %v2541 = vmul.f32 %v2539, %v1870
        %v2542 = vmul.f32 %v2539, %v1871
        %v2546 = vrot.slane %v2540, 2
        %v2547 = vrot.slane %v2541, 2
        %v2548 = vsel %vm431, %v2546, %v2547
        %v2549 = vrot.slane %v2542, 2
        %v2550 = vsel %vm431, %v2547, %v2549
        %2551 = vrot.lane.b32.xlu0 %v2548, 127
        %v2552 = vpop.permute.xlu0 %2551
        %2553 = vrot.lane.b32.xlu0 %v2550, 127
        %v2554 = vpop.permute.xlu0 %2553
        %v2557 = vadd.f32 %v2494, %v2552
        %v2558 = vadd.f32 %v2495, %v2554
        %s2559 = sld [smem:[#allocation6 + $0x2b]]
        %v2560 = vstv %s2559
        %v2561 = vmul.f32 %v2560, %v1869
        %v2562 = vmul.f32 %v2560, %v1870
        %v2563 = vmul.f32 %v2560, %v1871
        %v2567 = vrot.slane %v2561, 2
        %v2568 = vrot.slane %v2562, 2
        %v2569 = vsel %vm431, %v2567, %v2568
        %v2570 = vrot.slane %v2563, 2
        %v2571 = vsel %vm431, %v2568, %v2570
        %2572 = vrot.lane.b32.xlu0 %v2569, 127
        %v2573 = vpop.permute.xlu0 %2572
        %2574 = vrot.lane.b32.xlu0 %v2571, 127
        %v2575 = vpop.permute.xlu0 %2574
        %v2578 = vadd.f32 %v2515, %v2573
        %v2579 = vadd.f32 %v2516, %v2575
        %s2580 = sld [smem:[#allocation6 + $0x46]]
        %v2581 = vstv %s2580
        %v2582 = vmul.f32 %v2581, %v1869
        %v2583 = vmul.f32 %v2581, %v1870
        %v2584 = vmul.f32 %v2581, %v1871
        %v2588 = vrot.slane %v2582, 2
        %v2589 = vrot.slane %v2583, 2
        %v2590 = vsel %vm431, %v2588, %v2589
        %v2591 = vrot.slane %v2584, 2
        %v2592 = vsel %vm431, %v2589, %v2591
        %2593 = vrot.lane.b32.xlu0 %v2590, 127
        %v2594 = vpop.permute.xlu0 %2593
        %2595 = vrot.lane.b32.xlu0 %v2592, 127
        %v2596 = vpop.permute.xlu0 %2595
        %v2599 = vadd.f32 %v2536, %v2594
        %v2600 = vadd.f32 %v2537, %v2596
        %2604 = vrot.lane.b32.xlu0 %v1869, 126
        %v2605 = vpop.permute.xlu0 %2604
        %2606 = vrot.lane.b32.xlu0 %v1870, 126
        %v2607 = vpop.permute.xlu0 %2606
        %2608 = vrot.lane.b32.xlu0 %v1871, 126
        %v2609 = vpop.permute.xlu0 %2608
        %v2613 = vsel %vm328, %v2605, 0.0
        %v2614 = vsel %vm328, %v2607, 0.0
        %v2615 = vsel %vm328, %v2609, 0.0
        %s2616 = sld [smem:[#allocation6 + $0xb]]
        %v2617 = vstv %s2616
        %v2618 = vmul.f32 %v2617, %v2613
        %v2619 = vmul.f32 %v2617, %v2614
        %v2620 = vadd.f32 %v2557, %v2618
        %v2621 = vadd.f32 %v2558, %v2619
        %s2622 = sld [smem:[#allocation6 + $0x26]]
        %v2623 = vstv %s2622
        %v2624 = vmul.f32 %v2623, %v2613
        %v2625 = vmul.f32 %v2623, %v2614
        %v2626 = vadd.f32 %v2578, %v2624
        %v2627 = vadd.f32 %v2579, %v2625
        %s2628 = sld [smem:[#allocation6 + $0x41]]
        %v2629 = vstv %s2628
        %v2630 = vmul.f32 %v2629, %v2613
        %v2631 = vmul.f32 %v2629, %v2614
        %v2632 = vadd.f32 %v2599, %v2630
        %v2633 = vadd.f32 %v2600, %v2631
        %s2634 = sld [smem:[#allocation6 + $0xe]]
        %v2635 = vstv %s2634
        %v2636 = vmul.f32 %v2635, %v2613
        %v2637 = vmul.f32 %v2635, %v2614
        %v2638 = vmul.f32 %v2635, %v2615
        %v2642 = vrot.slane %v2636, 1
        %v2643 = vrot.slane %v2637, 1
        %v2644 = vsel %vm373, %v2642, %v2643
        %v2645 = vrot.slane %v2638, 1
        %v2646 = vsel %vm373, %v2643, %v2645
        %v2649 = vadd.f32 %v2620, %v2644
        %v2650 = vadd.f32 %v2621, %v2646
        %s2651 = sld [smem:[#allocation6 + $0x29]]
        %v2652 = vstv %s2651
        %v2653 = vmul.f32 %v2652, %v2613
        %v2654 = vmul.f32 %v2652, %v2614
        %v2655 = vmul.f32 %v2652, %v2615
        %v2659 = vrot.slane %v2653, 1
        %v2660 = vrot.slane %v2654, 1
        %v2661 = vsel %vm373, %v2659, %v2660
        %v2662 = vrot.slane %v2655, 1
        %v2663 = vsel %vm373, %v2660, %v2662
        %v2666 = vadd.f32 %v2626, %v2661
        %v2667 = vadd.f32 %v2627, %v2663
        %s2668 = sld [smem:[#allocation6 + $0x44]]
        %v2669 = vstv %s2668
        %v2670 = vmul.f32 %v2669, %v2613
        %v2671 = vmul.f32 %v2669, %v2614
        %v2672 = vmul.f32 %v2669, %v2615
        %v2676 = vrot.slane %v2670, 1
        %v2677 = vrot.slane %v2671, 1
        %v2678 = vsel %vm373, %v2676, %v2677
        %v2679 = vrot.slane %v2672, 1
        %v2680 = vsel %vm373, %v2677, %v2679
        %v2683 = vadd.f32 %v2632, %v2678
        %v2684 = vadd.f32 %v2633, %v2680
        %s2685 = sld [smem:[#allocation6 + $0x11]]
        %v2686 = vstv %s2685
        %v2687 = vmul.f32 %v2686, %v2613
        %v2688 = vmul.f32 %v2686, %v2614
        %v2689 = vmul.f32 %v2686, %v2615
        %v2693 = vrot.slane %v2687, 2
        %v2694 = vrot.slane %v2688, 2
        %v2695 = vsel %vm431, %v2693, %v2694
        %v2696 = vrot.slane %v2689, 2
        %v2697 = vsel %vm431, %v2694, %v2696
        %v2700 = vadd.f32 %v2649, %v2695
        %v2701 = vadd.f32 %v2650, %v2697
        %s2702 = sld [smem:[#allocation6 + $0x2c]]
        %v2703 = vstv %s2702
        %v2704 = vmul.f32 %v2703, %v2613
        %v2705 = vmul.f32 %v2703, %v2614
        %v2706 = vmul.f32 %v2703, %v2615
        %v2710 = vrot.slane %v2704, 2
        %v2711 = vrot.slane %v2705, 2
        %v2712 = vsel %vm431, %v2710, %v2711
        %v2713 = vrot.slane %v2706, 2
        %v2714 = vsel %vm431, %v2711, %v2713
        %v2717 = vadd.f32 %v2666, %v2712
        %v2718 = vadd.f32 %v2667, %v2714
        %s2719 = sld [smem:[#allocation6 + $0x47]]
        %v2720 = vstv %s2719
        %v2721 = vmul.f32 %v2720, %v2613
        %v2722 = vmul.f32 %v2720, %v2614
        %v2723 = vmul.f32 %v2720, %v2615
        %v2727 = vrot.slane %v2721, 2
        %v2728 = vrot.slane %v2722, 2
        %v2729 = vsel %vm431, %v2727, %v2728
        %v2730 = vrot.slane %v2723, 2
        %v2731 = vsel %vm431, %v2728, %v2730
        %v2734 = vadd.f32 %v2683, %v2729
        %v2735 = vadd.f32 %v2684, %v2731
        %v2736 = vsel %vm327, %v1875, 0.0
        %v2737 = vsel %vm327, %v1876, 0.0
        %v2738 = vsel %vm327, %v1877, 0.0
        %s2739 = sld [smem:[#allocation6 + $0x12]]
        %v2740 = vstv %s2739
        %v2741 = vmul.f32 %v2740, %v2736
        %v2742 = vmul.f32 %v2740, %v2737
        %v2743 = vadd.f32 %v2700, %v2741
        %v2744 = vadd.f32 %v2701, %v2742
        %s2745 = sld [smem:[#allocation6 + $0x2d]]
        %v2746 = vstv %s2745
        %v2747 = vmul.f32 %v2746, %v2736
        %v2748 = vmul.f32 %v2746, %v2737
        %v2749 = vadd.f32 %v2717, %v2747
        %v2750 = vadd.f32 %v2718, %v2748
        %s2751 = sld [smem:[#allocation6 + $0x48]]
        %v2752 = vstv %s2751
        %v2753 = vmul.f32 %v2752, %v2736
        %v2754 = vmul.f32 %v2752, %v2737
        %v2755 = vadd.f32 %v2734, %v2753
        %v2756 = vadd.f32 %v2735, %v2754
        %s2757 = sld [smem:[#allocation6 + $0x15]]
        %v2758 = vstv %s2757
        %v2759 = vmul.f32 %v2758, %v2736
        %v2760 = vmul.f32 %v2758, %v2737
        %v2761 = vmul.f32 %v2758, %v2738
        %v2765 = vrot.slane %v2759, 1
        %v2766 = vrot.slane %v2760, 1
        %v2767 = vsel %vm373, %v2765, %v2766
        %v2768 = vrot.slane %v2761, 1
        %v2769 = vsel %vm373, %v2766, %v2768
        %v2772 = vadd.f32 %v2743, %v2767
        %v2773 = vadd.f32 %v2744, %v2769
        %s2774 = sld [smem:[#allocation6 + $0x30]]
        %v2775 = vstv %s2774
        %v2776 = vmul.f32 %v2775, %v2736
        %v2777 = vmul.f32 %v2775, %v2737
        %v2778 = vmul.f32 %v2775, %v2738
        %v2782 = vrot.slane %v2776, 1
        %v2783 = vrot.slane %v2777, 1
        %v2784 = vsel %vm373, %v2782, %v2783
        %v2785 = vrot.slane %v2778, 1
        %v2786 = vsel %vm373, %v2783, %v2785
        %v2789 = vadd.f32 %v2749, %v2784
        %v2790 = vadd.f32 %v2750, %v2786
        %s2791 = sld [smem:[#allocation6 + $0x4b]]
        %v2792 = vstv %s2791
        %v2793 = vmul.f32 %v2792, %v2736
        %v2794 = vmul.f32 %v2792, %v2737
        %v2795 = vmul.f32 %v2792, %v2738
        %v2799 = vrot.slane %v2793, 1
        %v2800 = vrot.slane %v2794, 1
        %v2801 = vsel %vm373, %v2799, %v2800
        %v2802 = vrot.slane %v2795, 1
        %v2803 = vsel %vm373, %v2800, %v2802
        %v2806 = vadd.f32 %v2755, %v2801
        %v2807 = vadd.f32 %v2756, %v2803
        %s2808 = sld [smem:[#allocation6 + $0x18]]
        %v2809 = vstv %s2808
        %v2810 = vmul.f32 %v2809, %v2736
        %v2811 = vmul.f32 %v2809, %v2737
        %v2812 = vmul.f32 %v2809, %v2738
        %v2816 = vrot.slane %v2810, 2
        %v2817 = vrot.slane %v2811, 2
        %v2818 = vsel %vm431, %v2816, %v2817
        %v2819 = vrot.slane %v2812, 2
        %v2820 = vsel %vm431, %v2817, %v2819
        %v2823 = vadd.f32 %v2772, %v2818
        %v2824 = vadd.f32 %v2773, %v2820
        %s2825 = sld [smem:[#allocation6 + $0x33]]
        %v2826 = vstv %s2825
        %v2827 = vmul.f32 %v2826, %v2736
        %v2828 = vmul.f32 %v2826, %v2737
        %v2829 = vmul.f32 %v2826, %v2738
        %v2833 = vrot.slane %v2827, 2
        %v2834 = vrot.slane %v2828, 2
        %v2835 = vsel %vm431, %v2833, %v2834
        %v2836 = vrot.slane %v2829, 2
        %v2837 = vsel %vm431, %v2834, %v2836
        %v2840 = vadd.f32 %v2789, %v2835
        %v2841 = vadd.f32 %v2790, %v2837
        %s2842 = sld [smem:[#allocation6 + $0x4e]]
        %v2843 = vstv %s2842
        %v2844 = vmul.f32 %v2843, %v2736
        %v2845 = vmul.f32 %v2843, %v2737
        %v2846 = vmul.f32 %v2843, %v2738
        %v2850 = vrot.slane %v2844, 2
        %v2851 = vrot.slane %v2845, 2
        %v2852 = vsel %vm431, %v2850, %v2851
        %v2853 = vrot.slane %v2846, 2
        %v2854 = vsel %vm431, %v2851, %v2853
        %v2857 = vadd.f32 %v2806, %v2852
        %v2858 = vadd.f32 %v2807, %v2854
        %s2859 = sld [smem:[#allocation6 + $0x13]]
        %v2860 = vstv %s2859
        %v2861 = vmul.f32 %v2860, %v1875
        %v2862 = vmul.f32 %v2860, %v1876
        %2865 = vrot.lane.b32.xlu0 %v2861, 127
        %v2866 = vpop.permute.xlu0 %2865
        %2867 = vrot.lane.b32.xlu0 %v2862, 127
        %v2868 = vpop.permute.xlu0 %2867
        %v2871 = vadd.f32 %v2823, %v2866
        %v2872 = vadd.f32 %v2824, %v2868
        %s2873 = sld [smem:[#allocation6 + $0x2e]]
        %v2874 = vstv %s2873
        %v2875 = vmul.f32 %v2874, %v1875
        %v2876 = vmul.f32 %v2874, %v1876
        %2879 = vrot.lane.b32.xlu0 %v2875, 127
        %v2880 = vpop.permute.xlu0 %2879
        %2881 = vrot.lane.b32.xlu0 %v2876, 127
        %v2882 = vpop.permute.xlu0 %2881
        %v2885 = vadd.f32 %v2840, %v2880
        %v2886 = vadd.f32 %v2841, %v2882
        %s2887 = sld [smem:[#allocation6 + $0x49]]
        %v2888 = vstv %s2887
        %v2889 = vmul.f32 %v2888, %v1875
        %v2890 = vmul.f32 %v2888, %v1876
        %2893 = vrot.lane.b32.xlu0 %v2889, 127
        %v2894 = vpop.permute.xlu0 %2893
        %2895 = vrot.lane.b32.xlu0 %v2890, 127
        %v2896 = vpop.permute.xlu0 %2895
        %v2899 = vadd.f32 %v2857, %v2894
        %v2900 = vadd.f32 %v2858, %v2896
        %s2901 = sld [smem:[#allocation6 + $0x16]]
        %v2902 = vstv %s2901
        %v2903 = vmul.f32 %v2902, %v1875
        %v2904 = vmul.f32 %v2902, %v1876
        %v2905 = vmul.f32 %v2902, %v1877
        %v2909 = vrot.slane %v2903, 1
        %v2910 = vrot.slane %v2904, 1
        %v2911 = vsel %vm373, %v2909, %v2910
        %v2912 = vrot.slane %v2905, 1
        %v2913 = vsel %vm373, %v2910, %v2912
        %2914 = vrot.lane.b32.xlu0 %v2911, 127
        %v2915 = vpop.permute.xlu0 %2914
        %2916 = vrot.lane.b32.xlu0 %v2913, 127
        %v2917 = vpop.permute.xlu0 %2916
        %v2920 = vadd.f32 %v2871, %v2915
        %v2921 = vadd.f32 %v2872, %v2917
        %s2922 = sld [smem:[#allocation6 + $0x31]]
        %v2923 = vstv %s2922
        %v2924 = vmul.f32 %v2923, %v1875
        %v2925 = vmul.f32 %v2923, %v1876
        %v2926 = vmul.f32 %v2923, %v1877
        %v2930 = vrot.slane %v2924, 1
        %v2931 = vrot.slane %v2925, 1
        %v2932 = vsel %vm373, %v2930, %v2931
        %v2933 = vrot.slane %v2926, 1
        %v2934 = vsel %vm373, %v2931, %v2933
        %2935 = vrot.lane.b32.xlu0 %v2932, 127
        %v2936 = vpop.permute.xlu0 %2935
        %2937 = vrot.lane.b32.xlu0 %v2934, 127
        %v2938 = vpop.permute.xlu0 %2937
        %v2941 = vadd.f32 %v2885, %v2936
        %v2942 = vadd.f32 %v2886, %v2938
        %s2943 = sld [smem:[#allocation6 + $0x4c]]
        %v2944 = vstv %s2943
        %v2945 = vmul.f32 %v2944, %v1875
        %v2946 = vmul.f32 %v2944, %v1876
        %v2947 = vmul.f32 %v2944, %v1877
        %v2951 = vrot.slane %v2945, 1
        %v2952 = vrot.slane %v2946, 1
        %v2953 = vsel %vm373, %v2951, %v2952
        %v2954 = vrot.slane %v2947, 1
        %v2955 = vsel %vm373, %v2952, %v2954
        %2956 = vrot.lane.b32.xlu0 %v2953, 127
        %v2957 = vpop.permute.xlu0 %2956
        %2958 = vrot.lane.b32.xlu0 %v2955, 127
        %v2959 = vpop.permute.xlu0 %2958
        %v2962 = vadd.f32 %v2899, %v2957
        %v2963 = vadd.f32 %v2900, %v2959
        %s2964 = sld [smem:[#allocation6 + $0x19]]
        %v2965 = vstv %s2964
        %v2966 = vmul.f32 %v2965, %v1875
        %v2967 = vmul.f32 %v2965, %v1876
        %v2968 = vmul.f32 %v2965, %v1877
        %v2972 = vrot.slane %v2966, 2
        %v2973 = vrot.slane %v2967, 2
        %v2974 = vsel %vm431, %v2972, %v2973
        %v2975 = vrot.slane %v2968, 2
        %v2976 = vsel %vm431, %v2973, %v2975
        %2977 = vrot.lane.b32.xlu0 %v2974, 127
        %v2978 = vpop.permute.xlu0 %2977
        %2979 = vrot.lane.b32.xlu0 %v2976, 127
        %v2980 = vpop.permute.xlu0 %2979
        %v2983 = vadd.f32 %v2920, %v2978
        %v2984 = vadd.f32 %v2921, %v2980
        %s2985 = sld [smem:[#allocation6 + $0x34]]
        %v2986 = vstv %s2985
        %v2987 = vmul.f32 %v2986, %v1875
        %v2988 = vmul.f32 %v2986, %v1876
        %v2989 = vmul.f32 %v2986, %v1877
        %v2993 = vrot.slane %v2987, 2
        %v2994 = vrot.slane %v2988, 2
        %v2995 = vsel %vm431, %v2993, %v2994
        %v2996 = vrot.slane %v2989, 2
        %v2997 = vsel %vm431, %v2994, %v2996
        %2998 = vrot.lane.b32.xlu0 %v2995, 127
        %v2999 = vpop.permute.xlu0 %2998
        %3000 = vrot.lane.b32.xlu0 %v2997, 127
        %v3001 = vpop.permute.xlu0 %3000
        %v3004 = vadd.f32 %v2941, %v2999
        %v3005 = vadd.f32 %v2942, %v3001
        %s3006 = sld [smem:[#allocation6 + $0x4f]]
        %v3007 = vstv %s3006
        %v3008 = vmul.f32 %v3007, %v1875
        %v3009 = vmul.f32 %v3007, %v1876
        %v3010 = vmul.f32 %v3007, %v1877
        %v3014 = vrot.slane %v3008, 2
        %v3015 = vrot.slane %v3009, 2
        %v3016 = vsel %vm431, %v3014, %v3015
        %v3017 = vrot.slane %v3010, 2
        %v3018 = vsel %vm431, %v3015, %v3017
        %3019 = vrot.lane.b32.xlu0 %v3016, 127
        %v3020 = vpop.permute.xlu0 %3019
        %3021 = vrot.lane.b32.xlu0 %v3018, 127
        %v3022 = vpop.permute.xlu0 %3021
        %v3025 = vadd.f32 %v2962, %v3020
        %v3026 = vadd.f32 %v2963, %v3022
        %3030 = vrot.lane.b32.xlu0 %v1875, 126
        %v3031 = vpop.permute.xlu0 %3030
        %3032 = vrot.lane.b32.xlu0 %v1876, 126
        %v3033 = vpop.permute.xlu0 %3032
        %3034 = vrot.lane.b32.xlu0 %v1877, 126
        %v3035 = vpop.permute.xlu0 %3034
        %v3039 = vsel %vm328, %v3031, 0.0
        %v3040 = vsel %vm328, %v3033, 0.0
        %v3041 = vsel %vm328, %v3035, 0.0
        %s3042 = sld [smem:[#allocation6 + $0x14]]
        %v3043 = vstv %s3042
        %v3044 = vmul.f32 %v3043, %v3039
        %v3045 = vmul.f32 %v3043, %v3040
        %v3046 = vadd.f32 %v2983, %v3044
        %v3047 = vadd.f32 %v2984, %v3045
        %s3048 = sld [smem:[#allocation6 + $0x2f]]
        %v3049 = vstv %s3048
        %v3050 = vmul.f32 %v3049, %v3039
        %v3051 = vmul.f32 %v3049, %v3040
        %v3052 = vadd.f32 %v3004, %v3050
        %v3053 = vadd.f32 %v3005, %v3051
        %s3054 = sld [smem:[#allocation6 + $0x4a]]
        %v3055 = vstv %s3054
        %v3056 = vmul.f32 %v3055, %v3039
        %v3057 = vmul.f32 %v3055, %v3040
        %v3058 = vadd.f32 %v3025, %v3056
        %v3059 = vadd.f32 %v3026, %v3057
        %s3060 = sld [smem:[#allocation6 + $0x17]]
        %v3061 = vstv %s3060
        %v3062 = vmul.f32 %v3061, %v3039
        %v3063 = vmul.f32 %v3061, %v3040
        %v3064 = vmul.f32 %v3061, %v3041
        %v3068 = vrot.slane %v3062, 1
        %v3069 = vrot.slane %v3063, 1
        %v3070 = vsel %vm373, %v3068, %v3069
        %v3071 = vrot.slane %v3064, 1
        %v3072 = vsel %vm373, %v3069, %v3071
        %v3075 = vadd.f32 %v3046, %v3070
        %v3076 = vadd.f32 %v3047, %v3072
        %s3077 = sld [smem:[#allocation6 + $0x32]]
        %v3078 = vstv %s3077
        %v3079 = vmul.f32 %v3078, %v3039
        %v3080 = vmul.f32 %v3078, %v3040
        %v3081 = vmul.f32 %v3078, %v3041
        %v3085 = vrot.slane %v3079, 1
        %v3086 = vrot.slane %v3080, 1
        %v3087 = vsel %vm373, %v3085, %v3086
        %v3088 = vrot.slane %v3081, 1
        %v3089 = vsel %vm373, %v3086, %v3088
        %v3092 = vadd.f32 %v3052, %v3087
        %v3093 = vadd.f32 %v3053, %v3089
        %s3094 = sld [smem:[#allocation6 + $0x4d]]
        %v3095 = vstv %s3094
        %v3096 = vmul.f32 %v3095, %v3039
        %v3097 = vmul.f32 %v3095, %v3040
        %v3098 = vmul.f32 %v3095, %v3041
        %v3102 = vrot.slane %v3096, 1
        %v3103 = vrot.slane %v3097, 1
        %v3104 = vsel %vm373, %v3102, %v3103
        %v3105 = vrot.slane %v3098, 1
        %v3106 = vsel %vm373, %v3103, %v3105
        %v3109 = vadd.f32 %v3058, %v3104
        %v3110 = vadd.f32 %v3059, %v3106
        %s3111 = sld [smem:[#allocation6 + $0x1a]]
        %v3112 = vstv %s3111
        %v3113 = vmul.f32 %v3112, %v3039
        %v3114 = vmul.f32 %v3112, %v3040
        %v3115 = vmul.f32 %v3112, %v3041
        %v3119 = vrot.slane %v3113, 2
        %v3120 = vrot.slane %v3114, 2
        %v3121 = vsel %vm431, %v3119, %v3120
        %v3122 = vrot.slane %v3115, 2
        %v3123 = vsel %vm431, %v3120, %v3122
        %v3126 = vadd.f32 %v3075, %v3121
        %v3127 = vadd.f32 %v3076, %v3123
        %s3128 = sld [smem:[#allocation6 + $0x35]]
        %v3129 = vstv %s3128
        %v3130 = vmul.f32 %v3129, %v3039
        %v3131 = vmul.f32 %v3129, %v3040
        %v3132 = vmul.f32 %v3129, %v3041
        %v3136 = vrot.slane %v3130, 2
        %v3137 = vrot.slane %v3131, 2
        %v3138 = vsel %vm431, %v3136, %v3137
        %v3139 = vrot.slane %v3132, 2
        %v3140 = vsel %vm431, %v3137, %v3139
        %v3143 = vadd.f32 %v3092, %v3138
        %v3144 = vadd.f32 %v3093, %v3140
        %s3145 = sld [smem:[#allocation6 + $0x50]]
        %v3146 = vstv %s3145
        %v3147 = vmul.f32 %v3146, %v3039
        %v3148 = vmul.f32 %v3146, %v3040
        %v3149 = vmul.f32 %v3146, %v3041
        %v3153 = vrot.slane %v3147, 2
        %v3154 = vrot.slane %v3148, 2
        %v3155 = vsel %vm431, %v3153, %v3154
        %v3156 = vrot.slane %v3149, 2
        %v3157 = vsel %vm431, %v3154, %v3156
        %v3160 = vadd.f32 %v3109, %v3155
        %v3161 = vadd.f32 %v3110, %v3157
        %v3162 = vld [vmem:[%s271 + $0x2] sm:$0xff]
        %v3163 = vld [vmem:[%s271 + $0xa] sm:$0xff]
        %v3164 = vmax.f32 %v3126, 0.0
        %v3165 = vmax.f32 %v3127, 0.0
        %3168 = vrot.lane.b32.xlu0 %v3162, 126
        %v3169 = vpop.permute.xlu0 %3168
        %3170 = vrot.lane.b32.xlu0 %v3163, 126
        %v3171 = vpop.permute.xlu0 %3170
        %v3174 = vadd.f32 %v3164, %v3169
        %v3175 = vadd.f32 %v3165, %v3171
        %vm3176 = vcmask 916480
        %3177 = vst.msk [vmem:[%s276] sm:$0xff] %vm3176, %v3174
        %3178 = vst.msk [vmem:[%s276 + $0x8] sm:$0xff] %vm3176, %v3175
        %v3179 = vld [vmem:[%s844 + $0x2] sm:$0xff]
        %v3180 = vld [vmem:[%s844 + $0xa] sm:$0xff]
        %v3181 = vmax.f32 %v3143, 0.0
        %v3182 = vmax.f32 %v3144, 0.0
        %3185 = vrot.lane.b32.xlu0 %v3179, 126
        %v3186 = vpop.permute.xlu0 %3185
        %3187 = vrot.lane.b32.xlu0 %v3180, 126
        %v3188 = vpop.permute.xlu0 %3187
        %v3191 = vadd.f32 %v3181, %v3186
        %v3192 = vadd.f32 %v3182, %v3188
        %s3193 = scalar_lea.vmem %s276, 16
        %3194 = vst.msk [vmem:[%s3193] sm:$0xff] %vm3176, %v3191
        %3195 = vst.msk [vmem:[%s3193 + $0x8] sm:$0xff] %vm3176, %v3192
        %v3196 = vld [vmem:[%s1352 + $0x2] sm:$0xff]
        %v3197 = vld [vmem:[%s1352 + $0xa] sm:$0xff]
        %v3198 = vmax.f32 %v3160, 0.0
        %v3199 = vmax.f32 %v3161, 0.0
        %3202 = vrot.lane.b32.xlu0 %v3196, 126
        %v3203 = vpop.permute.xlu0 %3202
        %3204 = vrot.lane.b32.xlu0 %v3197, 126
        %v3205 = vpop.permute.xlu0 %3204
        %v3208 = vadd.f32 %v3198, %v3203
        %v3209 = vadd.f32 %v3199, %v3205
        %s3210 = scalar_lea.vmem %s276, 32
        %3211 = vst.msk [vmem:[%s3210] sm:$0xff] %vm3176, %v3208
        %3212 = vst.msk [vmem:[%s3210 + $0x8] sm:$0xff] %vm3176, %v3209
        %p3213 = scmp.lt.s32.totalorder %s19, 1
        %s3214 = scalar_select %p3213, %s19, 1
        %s3215 = smul.addr %s3214, 6
        %s3216 = smul.addr %s3215, 8
        %s3217 = scalar_lea.vmem %s5, %s3216
        // Predicated region
        $region57: #{residual_block.1} parent=39 // pred_check
          %p3218 = pneg %p147
        $region58: #{residual_block.1} parent=39 // pred_check_branch
          %3220 = sbr.rel (%p3218) target = $region60
        $region59: #{residual_block.1} parent=39 // pred_region
          _
        $region60: #{residual_block.1} parent=39 // pred_fallthru
          _
      $region40: #{residual_block.1} parent=5 // pred_fallthru
        _
      %p3221 = scmp.le.s32.totalorder 2, %s14
      // Predicated region
      $region61: #{residual_block.1} parent=5 // pred_check
        %p3222 = pneg %p3221
      $region62: #{residual_block.1} parent=5 // pred_check_branch
        %3224 = sbr.rel (%p3222) target = $region64
      $region63: #{residual_block.1} parent=5 // pred_region
        %s3225 = ssub.s32 %s14, 2
        // Predicated region
        $region65: #{residual_block.1} parent=63 // pred_check
          %p3226 = pneg %p153
        $region66: #{residual_block.1} parent=63 // pred_check_branch
          %3228 = sbr.rel (%p3226) target = $region68
        $region67: #{residual_block.1} parent=63 // pred_region
          %p3229 = scmp.lt.s32.totalorder %s20, 1
          %s3230 = scalar_select %p3229, %s20, 1
          %s3231 = smul.addr %s3230, 6
          %s3232 = smul.addr %s3231, 8
          %s3233 = scalar_lea.vmem %s5, %s3232
        $region68: #{residual_block.1} parent=63 // pred_fallthru
          _
      $region64: #{residual_block.1} parent=5 // pred_fallthru
        _
    $region6: #{residual_block.1} parent=1 // loop_footer
      %s18 = sadd.s32 1, %s14
    $region7: #{residual_block.1} parent=1 // loop_footer_branch
      %13 = sbr.rel target = $region3
    $region8: #{residual_block.1} parent=1 // loop_exit
      _
    %3234 = vsyncpa [#allocation3], 1
    %s3235 = scalar_lea.sflag [#allocation3], 1
    %3236 = vsyncpa %s3235, 1
    %3237 = vsyncpa [#allocation5], 1
    %3238 = vsyncpa [#allocation8], 1

</llo_original>
